<compile_context>
chip_gen: v6e
topology: v6e:2x2x1
jax: 0.10.0
libtpu: 0.0.40
codegen_flags: <defaults>
</compile_context>

<pallas_src>
import functools
import math

import jax
import jax.numpy as jnp
from jax import lax
from jax.experimental import pallas as pl
from jax.experimental.pallas import tpu as pltpu

D_MODEL = 32
NHEAD = 4
HEAD_DIM = D_MODEL // NHEAD
DIM_FF = 64
EPS = 1e-5
SCALE = 1.0 / math.sqrt(HEAD_DIM)


# ---------------------------------------------------------------------------
# helpers (plain jnp; usable inside the kernel)
# ---------------------------------------------------------------------------
def _ln(v, g, b):
    mu = jnp.mean(v, axis=-1, keepdims=True)
    c = v - mu
    var = jnp.mean(c * c, axis=-1, keepdims=True)
    return c * lax.rsqrt(var + EPS) * g + b


def _block_diag_bias(batch, lq, lk):
    """(batch*lq, batch*lk) additive mask: 0 inside same-batch blocks, -1e30 off.

    Lets the whole batch ride through ONE fused scores matmul per head while
    keeping batches from attending to each other.  Built from 2-D iotas and
    compares only (no vector integer division)."""
    rows, cols = batch * lq, batch * lk
    ri = lax.broadcasted_iota(jnp.int32, (rows, cols), 0)
    ci = lax.broadcasted_iota(jnp.int32, (rows, cols), 1)
    same = ri < 0                               # all-False
    for b in range(batch):                      # static unroll (batch is tiny)
        same = same | ((ri >= b * lq) & (ri < (b + 1) * lq)
                       & (ci >= b * lk) & (ci < (b + 1) * lk))
    return jnp.where(same, 0.0, -1e30).astype(jnp.float32)


def _mha(q, k, v, bias, head_masks):
    """Batch-fused multi-head attention.

    q: (B*Lq, D) already scaled by 1/sqrt(head_dim); k, v: (B*Lk, D).
    bias: (B*Lq, B*Lk) block-diagonal additive mask (batch separation).
    head_masks[h]: (1, D) 0/1 lane mask for head h, so heads are handled with
    broadcast multiplies instead of lane slices / stacks / concatenates.
    Returns (B*Lq, D) head-concatenated context (pre out-projection).
    """
    out = jnp.zeros(q.shape, jnp.float32)
    for h in range(NHEAD):
        hm = head_masks[h]
        # (q*hm) . k over full D == q_h . k_h  (non-head lanes contribute zero).
        # NT dimension numbers (contract both on dim 1) = native flash pattern.
        s = lax.dot_general(q * hm, k, (((1,), (1,)), ((), ())),
                            preferred_element_type=jnp.float32) + bias
        s = s - jnp.max(s, axis=-1, keepdims=True)
        p = jnp.exp(s)
        p = p * pl.reciprocal(jnp.sum(p, axis=-1, keepdims=True), approx=False)
        # full-D P@V, then keep only head-h lanes and accumulate.
        out = out + jnp.dot(p, v, preferred_element_type=jnp.float32) * hm
    return out


# ---------------------------------------------------------------------------
# Pallas kernel: full decoder layer, whole batch, single invocation
# ---------------------------------------------------------------------------
def decoder_layer_kernel(tgt_ref, aux_ref, wn_ref, ww_ref, out_ref, *, batch):
    D, FF = D_MODEL, DIM_FF
    BT = tgt_ref.shape[0]
    BS = (aux_ref.shape[0] - BT) // 2
    T, S = BT // batch, BS // batch

    # ---- unpack operands (all free sublane/row slices) ----
    x = tgt_ref[...]                          # (B*T, D)
    qpos = aux_ref[0:BT, :]                   # (B*T, D)
    mem = aux_ref[BT:BT + BS, :]              # (B*S, D)
    pos = aux_ref[BT + BS:BT + 2 * BS, :]     # (B*S, D)

    sa_wv = wn_ref[0:D, :]
    sa_wo = wn_ref[D:2 * D, :]
    ca_wq = wn_ref[2 * D:3 * D, :]
    ca_wk = wn_ref[3 * D:4 * D, :]
    ca_wv = wn_ref[4 * D:5 * D, :]
    ca_wo = wn_ref[5 * D:6 * D, :]
    w2t = wn_ref[6 * D:6 * D + FF, :]         # (FF, D)

    sa_wqk = ww_ref[0:D, :]                   # (D, 2D) fused [Wq | Wk]^T
    w1t = ww_ref[D:2 * D, :]                  # (D, FF)
    vec = ww_ref[2 * D:2 * D + 8, :]          # (8, FF): g1,be1,g2,be2,g3,be3,b1,b2
    g1, be1 = vec[0:1, :D], vec[1:2, :D]
    g2, be2 = vec[2:3, :D], vec[3:4, :D]
    g3, be3 = vec[4:5, :D], vec[5:6, :D]
    b1 = vec[6:7, :]                          # (1, FF)
    b2 = vec[7:8, :D]                         # (1, D)

    # head lane masks + block-diagonal batch masks, built once
    lane = lax.broadcasted_iota(jnp.int32, (1, D), 1)
    head_masks = [
        jnp.where((lane >= h * HEAD_DIM) & (lane < (h + 1) * HEAD_DIM),
                  1.0, 0.0).astype(jnp.float32)
        for h in range(NHEAD)]
    bias_self = _block_diag_bias(batch, T, T)
    bias_cross = _block_diag_bias(batch, T, S)

    # ---- block 1: pre-norm + self-attention + residual (batch-fused) ----
    t2 = _ln(x, g1, be1)
    qk = jnp.dot(t2 + qpos, sa_wqk, preferred_element_type=jnp.float32)  # (BT, 2D)
    q = qk[:, :D] * SCALE
    k = qk[:, D:]
    v = jnp.dot(t2, sa_wv, preferred_element_type=jnp.float32)
    attn = _mha(q, k, v, bias_self, head_masks)
    x = x + jnp.dot(attn, sa_wo, preferred_element_type=jnp.float32)

    # ---- block 2: pre-norm + cross-attention + residual (batch-fused) ----
    t2 = _ln(x, g2, be2)
    q = jnp.dot(t2 + qpos, ca_wq, preferred_element_type=jnp.float32) * SCALE
    k = jnp.dot(mem + pos, ca_wk, preferred_element_type=jnp.float32)
    v = jnp.dot(mem, ca_wv, preferred_element_type=jnp.float32)
    attn = _mha(q, k, v, bias_cross, head_masks)
    x = x + jnp.dot(attn, ca_wo, preferred_element_type=jnp.float32)

    # ---- block 3: pre-norm + FFN (relu) + residual; single full-slab store ----
    t2 = _ln(x, g3, be3)
    h = jnp.maximum(jnp.dot(t2, w1t, preferred_element_type=jnp.float32) + b1, 0.0)
    y = x + jnp.dot(h, w2t, preferred_element_type=jnp.float32) + b2
    out_ref[...] = y.astype(out_ref.dtype)


# ---------------------------------------------------------------------------
# Wrappers
# ---------------------------------------------------------------------------
def prepare_params(params):
    """One-time host-side weight prep: pre-transpose every matmul weight and pack
    everything into two slabs whose row offsets match the kernel's unpacking."""
    D, FF = D_MODEL, DIM_FF
    f32 = lambda a: jnp.asarray(a, jnp.float32)
    sa_in, ca_in = f32(params['sa_in_w']), f32(params['ca_in_w'])

    wn = jnp.concatenate([
        sa_in[2 * D:].T,                  # self-attn  Wv^T (D, D)
        f32(params['sa_out_w']).T,        # self-attn  Wo^T
        ca_in[:D].T,                      # cross-attn Wq^T
        ca_in[D:2 * D].T,                 # cross-attn Wk^T
        ca_in[2 * D:].T,                  # cross-attn Wv^T
        f32(params['ca_out_w']).T,        # cross-attn Wo^T
        f32(params['w2']).T,              # linear2^T (FF, D)
    ], axis=0)                            # (6*D + FF, D) = (256, 32)

    def row64(a):
        v = f32(a).reshape(1, -1)
        return jnp.pad(v, ((0, 0), (0, FF - v.shape[1])))

    vec = jnp.concatenate([row64(params[k]) for k in
                           ('g1', 'be1', 'g2', 'be2', 'g3', 'be3', 'b1', 'b2')],
                          axis=0)         # (8, FF)

    ww = jnp.concatenate([
        sa_in[:2 * D].T,                  # fused [Wq | Wk]^T (D, 2D)
        f32(params['w1']).T,              # linear1^T (D, FF)
        vec,
    ], axis=0)                            # (2*D + 8, FF) = (72, 64)

    return dict(wn=wn, ww=ww)


@jax.jit
def transformer_decoder_layer(tgt, memory, prep, pos, query_pos):
    """tgt/query_pos: (T,B,D); memory/pos: (S,B,D)  ->  (T,B,D)."""
    T, B, D = tgt.shape
    S = memory.shape[0]

    # (L,B,D) -> (B,L,D) -> (B*L,D): cheap wrapper-side relayout so every
    # per-batch access inside the kernel is a free sublane (row) slice.
    to2d = lambda a, L: jnp.transpose(a, (1, 0, 2)).reshape(B * L, D)
    tgt2d = to2d(tgt, T)
    aux = jnp.concatenate([to2d(query_pos, T), to2d(memory, S), to2d(pos, S)],
                          axis=0)                           # (B*T + 2*B*S, D)

    out2d = pl.pallas_call(
        functools.partial(decoder_layer_kernel, batch=B),
        out_shape=jax.ShapeDtypeStruct((B * T, D), tgt.dtype),
        in_specs=[pl.BlockSpec(memory_space=pltpu.MemorySpace.VMEM)
                  for _ in range(4)],
        out_specs=pl.BlockSpec(memory_space=pltpu.MemorySpace.VMEM),
        input_output_aliases={0: 0},   # tgt slab is fully consumed -> reuse buffer
    )(tgt2d, aux, prep['wn'], prep['ww'])

    return jnp.transpose(out2d.reshape(B, T, D), (1, 0, 2))


# ---------------------------------------------------------------------------
# Pure-JAX reference (independent math, original untransposed params)
# ---------------------------------------------------------------------------
def _mha_ref(q_in, k_in, v_in, in_w, out_w):
    d = q_in.shape[-1]
    wq, wk, wv = in_w[:d], in_w[d:2 * d], in_w[2 * d:]
    qp, kp, vp = q_in @ wq.T, k_in @ wk.T, v_in @ wv.T
    hd = d // NHEAD
    outs = []
    for h in range(NHEAD):
        lo, hi = h * hd, (h + 1) * hd
        s = (qp[:, lo:hi] / math.sqrt(hd)) @ kp[:, lo:hi].T
        s = s - jnp.max(s, axis=-1, keepdims=True)
        p = jnp.exp(s)
        p = p / jnp.sum(p, axis=-1, keepdims=True)
        outs.append(p @ vp[:, lo:hi])
    return jnp.concatenate(outs, axis=-1) @ out_w.T


def reference(tgt, memory, params, pos, query_pos):
    outs = []
    for b in range(tgt.shape[1]):
        x, mem = tgt[:, b], memory[:, b]
        qpos, p = query_pos[:, b], pos[:, b]
        t2 = _ln(x, params['g1'], params['be1'])
        q = t2 + qpos
        x = x + _mha_ref(q, q, t2, params['sa_in_w'], params['sa_out_w'])
        t2 = _ln(x, params['g2'], params['be2'])
        x = x + _mha_ref(t2 + qpos, mem + p, mem,
                         params['ca_in_w'], params['ca_out_w'])
        t2 = _ln(x, params['g3'], params['be3'])
        h = jnp.maximum(t2 @ params['w1'].T + params['b1'], 0.0)
        x = x + h @ params['w2'].T + params['b2']
        outs.append(x)
    return jnp.stack(outs, axis=1)     # (T, B, D)


# ---------------------------------------------------------------------------
# Deterministic parameter init (synthetic; shapes match the nn.Module)
# ---------------------------------------------------------------------------
def init_params(key):
    ks = jax.random.split(key, 8)

    def w(k, shape, scale=0.05):
        return (scale * jax.random.normal(k, shape)).astype(jnp.float32)

    return dict(
        sa_in_w=w(ks[0], (3 * D_MODEL, D_MODEL)),   # self_attn.in_proj_weight
        sa_out_w=w(ks[1], (D_MODEL, D_MODEL)),      # self_attn.out_proj.weight
        ca_in_w=w(ks[2], (3 * D_MODEL, D_MODEL)),   # multihead_attn.in_proj_weight
        ca_out_w=w(ks[3], (D_MODEL, D_MODEL)),      # multihead_attn.out_proj.weight
        w1=w(ks[4], (DIM_FF, D_MODEL)),             # linear1.weight
        b1=w(ks[5], (1, DIM_FF)),                   # linear1.bias
        w2=w(ks[6], (D_MODEL, DIM_FF)),             # linear2.weight
        b2=w(ks[7], (1, D_MODEL)),                  # linear2.bias
        g1=jnp.ones((1, D_MODEL), jnp.float32),     # norm1.weight
        be1=jnp.zeros((1, D_MODEL), jnp.float32),   # norm1.bias
        g2=jnp.ones((1, D_MODEL), jnp.float32),
        be2=jnp.zeros((1, D_MODEL), jnp.float32),
        g3=jnp.ones((1, D_MODEL), jnp.float32),
        be3=jnp.zeros((1, D_MODEL), jnp.float32),
    )


if __name__ == "__main__":
    key = jax.random.PRNGKey(0)
    kt, km, kp, kq, kw = jax.random.split(key, 5)
    T, S, B = 8, 8, 2

    tgt = jax.random.normal(kt, (T, B, D_MODEL), jnp.float32)
    memory = jax.random.normal(km, (S, B, D_MODEL), jnp.float32)
    pos = 0.1 * jax.random.normal(kp, (S, B, D_MODEL), jnp.float32)
    query_pos = 0.1 * jax.random.normal(kq, (T, B, D_MODEL), jnp.float32)
    params = init_params(kw)
    prep = prepare_params(params)   # one-time host-side weight prep

    out = transformer_decoder_layer(tgt, memory, prep, pos, query_pos)
    out = jax.block_until_ready(out)

    # Reference at full-f32 matmul precision; tolerance covers the remaining
    # Mosaic-vs-XLA matmul rounding differences on the MXU.
    with jax.default_matmul_precision('highest'):
        ref = reference(tgt, memory, params, pos, query_pos)
    err = float(jnp.max(jnp.abs(out - ref)))
    assert jnp.allclose(out, ref, rtol=5e-3, atol=5e-3), f"max abs err = {err}"

    print("KERNEL_OK")
</pallas_src>

<mosaic_0001>
module attributes {stable_mosaic.version = 11 : i64} {
  func.func @decoder_layer_kernel(%arg0: memref<16x32xf32, #tpu.memory_space<vmem>>, %arg1: memref<48x32xf32, #tpu.memory_space<vmem>>, %arg2: memref<256x32xf32, #tpu.memory_space<vmem>>, %arg3: memref<72x64xf32, #tpu.memory_space<vmem>>, %arg4: memref<16x32xf32, #tpu.memory_space<vmem>>) attributes {dimension_semantics = [], scalar_prefetch = 0 : i64, scratch_operands = 0 : i64, tpu.core_type = #tpu.core_type<tc>} {
    %c0 = arith.constant 0 : index
    %c0_0 = arith.constant 0 : index
    %0 = vector.load %arg0[%c0, %c0_0] : memref<16x32xf32, #tpu.memory_space<vmem>>, vector<16x32xf32>
    %c0_1 = arith.constant 0 : index
    %c0_2 = arith.constant 0 : index
    %1 = vector.load %arg1[%c0_1, %c0_2] : memref<48x32xf32, #tpu.memory_space<vmem>>, vector<16x32xf32>
    %c16 = arith.constant 16 : index
    %c0_3 = arith.constant 0 : index
    %2 = vector.load %arg1[%c16, %c0_3] : memref<48x32xf32, #tpu.memory_space<vmem>>, vector<16x32xf32>
    %c32 = arith.constant 32 : index
    %c0_4 = arith.constant 0 : index
    %3 = vector.load %arg1[%c32, %c0_4] : memref<48x32xf32, #tpu.memory_space<vmem>>, vector<16x32xf32>
    %c0_5 = arith.constant 0 : index
    %c0_6 = arith.constant 0 : index
    %4 = vector.load %arg2[%c0_5, %c0_6] : memref<256x32xf32, #tpu.memory_space<vmem>>, vector<32x32xf32>
    %c32_7 = arith.constant 32 : index
    %c0_8 = arith.constant 0 : index
    %5 = vector.load %arg2[%c32_7, %c0_8] : memref<256x32xf32, #tpu.memory_space<vmem>>, vector<32x32xf32>
    %c64 = arith.constant 64 : index
    %c0_9 = arith.constant 0 : index
    %6 = vector.load %arg2[%c64, %c0_9] : memref<256x32xf32, #tpu.memory_space<vmem>>, vector<32x32xf32>
    %c96 = arith.constant 96 : index
    %c0_10 = arith.constant 0 : index
    %7 = vector.load %arg2[%c96, %c0_10] : memref<256x32xf32, #tpu.memory_space<vmem>>, vector<32x32xf32>
    %c128 = arith.constant 128 : index
    %c0_11 = arith.constant 0 : index
    %8 = vector.load %arg2[%c128, %c0_11] : memref<256x32xf32, #tpu.memory_space<vmem>>, vector<32x32xf32>
    %c160 = arith.constant 160 : index
    %c0_12 = arith.constant 0 : index
    %9 = vector.load %arg2[%c160, %c0_12] : memref<256x32xf32, #tpu.memory_space<vmem>>, vector<32x32xf32>
    %c192 = arith.constant 192 : index
    %c0_13 = arith.constant 0 : index
    %10 = vector.load %arg2[%c192, %c0_13] : memref<256x32xf32, #tpu.memory_space<vmem>>, vector<64x32xf32>
    %c0_14 = arith.constant 0 : index
    %c0_15 = arith.constant 0 : index
    %11 = vector.load %arg3[%c0_14, %c0_15] : memref<72x64xf32, #tpu.memory_space<vmem>>, vector<32x64xf32>
    %c32_16 = arith.constant 32 : index
    %c0_17 = arith.constant 0 : index
    %12 = vector.load %arg3[%c32_16, %c0_17] : memref<72x64xf32, #tpu.memory_space<vmem>>, vector<32x64xf32>
    %c64_18 = arith.constant 64 : index
    %c0_19 = arith.constant 0 : index
    %13 = vector.load %arg3[%c64_18, %c0_19] : memref<72x64xf32, #tpu.memory_space<vmem>>, vector<8x64xf32>
    %14 = vector.extract_strided_slice %13 {offsets = [0, 0], sizes = [1, 32], strides = [1, 1]} : vector<8x64xf32> to vector<1x32xf32>
    %15 = vector.extract_strided_slice %13 {offsets = [1, 0], sizes = [1, 32], strides = [1, 1]} : vector<8x64xf32> to vector<1x32xf32>
    %16 = vector.extract_strided_slice %13 {offsets = [2, 0], sizes = [1, 32], strides = [1, 1]} : vector<8x64xf32> to vector<1x32xf32>
    %17 = vector.extract_strided_slice %13 {offsets = [3, 0], sizes = [1, 32], strides = [1, 1]} : vector<8x64xf32> to vector<1x32xf32>
    %18 = vector.extract_strided_slice %13 {offsets = [4, 0], sizes = [1, 32], strides = [1, 1]} : vector<8x64xf32> to vector<1x32xf32>
    %19 = vector.extract_strided_slice %13 {offsets = [5, 0], sizes = [1, 32], strides = [1, 1]} : vector<8x64xf32> to vector<1x32xf32>
    %20 = vector.extract_strided_slice %13 {offsets = [6, 0], sizes = [1, 64], strides = [1, 1]} : vector<8x64xf32> to vector<1x64xf32>
    %21 = vector.extract_strided_slice %13 {offsets = [7, 0], sizes = [1, 32], strides = [1, 1]} : vector<8x64xf32> to vector<1x32xf32>
    %22 = tpu.iota {dimensions = array<i32: 1>} : vector<1x32xi32>
    %c0_i32 = arith.constant 0 : i32
    %23 = vector.broadcast %c0_i32 : i32 to vector<1x32xi32>
    %24 = arith.cmpi sge, %22, %23 : vector<1x32xi32>
    %c8_i32 = arith.constant 8 : i32
    %25 = vector.broadcast %c8_i32 : i32 to vector<1x32xi32>
    %26 = arith.cmpi slt, %22, %25 : vector<1x32xi32>
    %27 = arith.andi %24, %26 : vector<1x32xi1>
    %cst = arith.constant 1.000000e+00 : f32
    %cst_20 = arith.constant 0.000000e+00 : f32
    %28 = vector.broadcast %cst : f32 to vector<1x32xf32>
    %29 = vector.broadcast %cst_20 : f32 to vector<1x32xf32>
    %30 = arith.select %27, %28, %29 : vector<1x32xi1>, vector<1x32xf32>
    %c8_i32_21 = arith.constant 8 : i32
    %31 = vector.broadcast %c8_i32_21 : i32 to vector<1x32xi32>
    %32 = arith.cmpi sge, %22, %31 : vector<1x32xi32>
    %c16_i32 = arith.constant 16 : i32
    %33 = vector.broadcast %c16_i32 : i32 to vector<1x32xi32>
    %34 = arith.cmpi slt, %22, %33 : vector<1x32xi32>
    %35 = arith.andi %32, %34 : vector<1x32xi1>
    %cst_22 = arith.constant 1.000000e+00 : f32
    %cst_23 = arith.constant 0.000000e+00 : f32
    %36 = vector.broadcast %cst_22 : f32 to vector<1x32xf32>
    %37 = vector.broadcast %cst_23 : f32 to vector<1x32xf32>
    %38 = arith.select %35, %36, %37 : vector<1x32xi1>, vector<1x32xf32>
    %c16_i32_24 = arith.constant 16 : i32
    %39 = vector.broadcast %c16_i32_24 : i32 to vector<1x32xi32>
    %40 = arith.cmpi sge, %22, %39 : vector<1x32xi32>
    %c24_i32 = arith.constant 24 : i32
    %41 = vector.broadcast %c24_i32 : i32 to vector<1x32xi32>
    %42 = arith.cmpi slt, %22, %41 : vector<1x32xi32>
    %43 = arith.andi %40, %42 : vector<1x32xi1>
    %cst_25 = arith.constant 1.000000e+00 : f32
    %cst_26 = arith.constant 0.000000e+00 : f32
    %44 = vector.broadcast %cst_25 : f32 to vector<1x32xf32>
    %45 = vector.broadcast %cst_26 : f32 to vector<1x32xf32>
    %46 = arith.select %43, %44, %45 : vector<1x32xi1>, vector<1x32xf32>
    %c24_i32_27 = arith.constant 24 : i32
    %47 = vector.broadcast %c24_i32_27 : i32 to vector<1x32xi32>
    %48 = arith.cmpi sge, %22, %47 : vector<1x32xi32>
    %c32_i32 = arith.constant 32 : i32
    %49 = vector.broadcast %c32_i32 : i32 to vector<1x32xi32>
    %50 = arith.cmpi slt, %22, %49 : vector<1x32xi32>
    %51 = arith.andi %48, %50 : vector<1x32xi1>
    %cst_28 = arith.constant 1.000000e+00 : f32
    %cst_29 = arith.constant 0.000000e+00 : f32
    %52 = vector.broadcast %cst_28 : f32 to vector<1x32xf32>
    %53 = vector.broadcast %cst_29 : f32 to vector<1x32xf32>
    %54 = arith.select %51, %52, %53 : vector<1x32xi1>, vector<1x32xf32>
    %55 = tpu.iota {dimensions = array<i32: 0>} : vector<16x16xi32>
    %56 = tpu.iota {dimensions = array<i32: 1>} : vector<16x16xi32>
    %c0_i32_30 = arith.constant 0 : i32
    %57 = vector.broadcast %c0_i32_30 : i32 to vector<16x16xi32>
    %58 = arith.cmpi slt, %55, %57 : vector<16x16xi32>
    %c0_i32_31 = arith.constant 0 : i32
    %59 = vector.broadcast %c0_i32_31 : i32 to vector<16x16xi32>
    %60 = arith.cmpi sge, %55, %59 : vector<16x16xi32>
    %c8_i32_32 = arith.constant 8 : i32
    %61 = vector.broadcast %c8_i32_32 : i32 to vector<16x16xi32>
    %62 = arith.cmpi slt, %55, %61 : vector<16x16xi32>
    %63 = arith.andi %60, %62 : vector<16x16xi1>
    %c0_i32_33 = arith.constant 0 : i32
    %64 = vector.broadcast %c0_i32_33 : i32 to vector<16x16xi32>
    %65 = arith.cmpi sge, %56, %64 : vector<16x16xi32>
    %66 = arith.andi %63, %65 : vector<16x16xi1>
    %c8_i32_34 = arith.constant 8 : i32
    %67 = vector.broadcast %c8_i32_34 : i32 to vector<16x16xi32>
    %68 = arith.cmpi slt, %56, %67 : vector<16x16xi32>
    %69 = arith.andi %66, %68 : vector<16x16xi1>
    %70 = arith.ori %58, %69 : vector<16x16xi1>
    %c8_i32_35 = arith.constant 8 : i32
    %71 = vector.broadcast %c8_i32_35 : i32 to vector<16x16xi32>
    %72 = arith.cmpi sge, %55, %71 : vector<16x16xi32>
    %c16_i32_36 = arith.constant 16 : i32
    %73 = vector.broadcast %c16_i32_36 : i32 to vector<16x16xi32>
    %74 = arith.cmpi slt, %55, %73 : vector<16x16xi32>
    %75 = arith.andi %72, %74 : vector<16x16xi1>
    %c8_i32_37 = arith.constant 8 : i32
    %76 = vector.broadcast %c8_i32_37 : i32 to vector<16x16xi32>
    %77 = arith.cmpi sge, %56, %76 : vector<16x16xi32>
    %78 = arith.andi %75, %77 : vector<16x16xi1>
    %c16_i32_38 = arith.constant 16 : i32
    %79 = vector.broadcast %c16_i32_38 : i32 to vector<16x16xi32>
    %80 = arith.cmpi slt, %56, %79 : vector<16x16xi32>
    %81 = arith.andi %78, %80 : vector<16x16xi1>
    %82 = arith.ori %70, %81 : vector<16x16xi1>
    %cst_39 = arith.constant 0.000000e+00 : f32
    %cst_40 = arith.constant -1.000000e+30 : f32
    %83 = vector.broadcast %cst_39 : f32 to vector<16x16xf32>
    %84 = vector.broadcast %cst_40 : f32 to vector<16x16xf32>
    %85 = arith.select %82, %83, %84 : vector<16x16xi1>, vector<16x16xf32>
    %86 = tpu.iota {dimensions = array<i32: 0>} : vector<16x16xi32>
    %87 = tpu.iota {dimensions = array<i32: 1>} : vector<16x16xi32>
    %c0_i32_41 = arith.constant 0 : i32
    %88 = vector.broadcast %c0_i32_41 : i32 to vector<16x16xi32>
    %89 = arith.cmpi slt, %86, %88 : vector<16x16xi32>
    %c0_i32_42 = arith.constant 0 : i32
    %90 = vector.broadcast %c0_i32_42 : i32 to vector<16x16xi32>
    %91 = arith.cmpi sge, %86, %90 : vector<16x16xi32>
    %c8_i32_43 = arith.constant 8 : i32
    %92 = vector.broadcast %c8_i32_43 : i32 to vector<16x16xi32>
    %93 = arith.cmpi slt, %86, %92 : vector<16x16xi32>
    %94 = arith.andi %91, %93 : vector<16x16xi1>
    %c0_i32_44 = arith.constant 0 : i32
    %95 = vector.broadcast %c0_i32_44 : i32 to vector<16x16xi32>
    %96 = arith.cmpi sge, %87, %95 : vector<16x16xi32>
    %97 = arith.andi %94, %96 : vector<16x16xi1>
    %c8_i32_45 = arith.constant 8 : i32
    %98 = vector.broadcast %c8_i32_45 : i32 to vector<16x16xi32>
    %99 = arith.cmpi slt, %87, %98 : vector<16x16xi32>
    %100 = arith.andi %97, %99 : vector<16x16xi1>
    %101 = arith.ori %89, %100 : vector<16x16xi1>
    %c8_i32_46 = arith.constant 8 : i32
    %102 = vector.broadcast %c8_i32_46 : i32 to vector<16x16xi32>
    %103 = arith.cmpi sge, %86, %102 : vector<16x16xi32>
    %c16_i32_47 = arith.constant 16 : i32
    %104 = vector.broadcast %c16_i32_47 : i32 to vector<16x16xi32>
    %105 = arith.cmpi slt, %86, %104 : vector<16x16xi32>
    %106 = arith.andi %103, %105 : vector<16x16xi1>
    %c8_i32_48 = arith.constant 8 : i32
    %107 = vector.broadcast %c8_i32_48 : i32 to vector<16x16xi32>
    %108 = arith.cmpi sge, %87, %107 : vector<16x16xi32>
    %109 = arith.andi %106, %108 : vector<16x16xi1>
    %c16_i32_49 = arith.constant 16 : i32
    %110 = vector.broadcast %c16_i32_49 : i32 to vector<16x16xi32>
    %111 = arith.cmpi slt, %87, %110 : vector<16x16xi32>
    %112 = arith.andi %109, %111 : vector<16x16xi1>
    %113 = arith.ori %101, %112 : vector<16x16xi1>
    %cst_50 = arith.constant 0.000000e+00 : f32
    %cst_51 = arith.constant -1.000000e+30 : f32
    %114 = vector.broadcast %cst_50 : f32 to vector<16x16xf32>
    %115 = vector.broadcast %cst_51 : f32 to vector<16x16xf32>
    %116 = arith.select %113, %114, %115 : vector<16x16xi1>, vector<16x16xf32>
    %cst_52 = arith.constant dense<0.000000e+00> : vector<16xf32>
    %117 = vector.multi_reduction <add>, %0, %cst_52 [1] : vector<16x32xf32> to vector<16xf32>
    %118 = vector.shape_cast %117 : vector<16xf32> to vector<16x1xf32>
    %cst_53 = arith.constant 3.200000e+01 : f32
    %119 = vector.broadcast %cst_53 : f32 to vector<16x1xf32>
    %120 = arith.divf %118, %119 : vector<16x1xf32>
    %121 = vector.broadcast %120 : vector<16x1xf32> to vector<16x32xf32>
    %122 = arith.subf %0, %121 : vector<16x32xf32>
    %123 = arith.mulf %122, %122 : vector<16x32xf32>
    %cst_54 = arith.constant dense<0.000000e+00> : vector<16xf32>
    %124 = vector.multi_reduction <add>, %123, %cst_54 [1] : vector<16x32xf32> to vector<16xf32>
    %125 = vector.shape_cast %124 : vector<16xf32> to vector<16x1xf32>
    %cst_55 = arith.constant 3.200000e+01 : f32
    %126 = vector.broadcast %cst_55 : f32 to vector<16x1xf32>
    %127 = arith.divf %125, %126 : vector<16x1xf32>
    %cst_56 = arith.constant 9.99999974E-6 : f32
    %128 = vector.broadcast %cst_56 : f32 to vector<16x1xf32>
    %129 = arith.addf %127, %128 : vector<16x1xf32>
    %130 = math.rsqrt %129 : vector<16x1xf32>
    %131 = vector.broadcast %130 : vector<16x1xf32> to vector<16x32xf32>
    %132 = arith.mulf %122, %131 : vector<16x32xf32>
    %133 = vector.broadcast %14 : vector<1x32xf32> to vector<16x32xf32>
    %134 = arith.mulf %132, %133 : vector<16x32xf32>
    %135 = vector.broadcast %15 : vector<1x32xf32> to vector<16x32xf32>
    %136 = arith.addf %134, %135 : vector<16x32xf32>
    %137 = arith.addf %136, %1 : vector<16x32xf32>
    %cst_57 = arith.constant dense<0.000000e+00> : vector<16x64xf32>
    %138 = tpu.matmul %137, %11, %cst_57 {dimension_numbers = #tpu.dot_dimension_numbers<[1], [0], [0], [1], [0, 0, 1, 1], [], []>} : vector<16x32xf32>, vector<32x64xf32>, vector<16x64xf32> -> vector<16x64xf32>
    %139 = vector.extract_strided_slice %138 {offsets = [0, 0], sizes = [16, 32], strides = [1, 1]} : vector<16x64xf32> to vector<16x32xf32>
    %cst_58 = arith.constant 0.353553385 : f32
    %140 = vector.broadcast %cst_58 : f32 to vector<16x32xf32>
    %141 = arith.mulf %139, %140 : vector<16x32xf32>
    %142 = vector.extract_strided_slice %138 {offsets = [0, 32], sizes = [16, 32], strides = [1, 1]} : vector<16x64xf32> to vector<16x32xf32>
    %cst_59 = arith.constant dense<0.000000e+00> : vector<16x32xf32>
    %143 = tpu.matmul %136, %4, %cst_59 {dimension_numbers = #tpu.dot_dimension_numbers<[1], [0], [0], [1], [0, 0, 1, 1], [], []>} : vector<16x32xf32>, vector<32x32xf32>, vector<16x32xf32> -> vector<16x32xf32>
    %cst_60 = arith.constant 0.000000e+00 : f32
    %144 = vector.broadcast %cst_60 : f32 to vector<16x32xf32>
    %145 = vector.broadcast %30 : vector<1x32xf32> to vector<16x32xf32>
    %146 = arith.mulf %141, %145 : vector<16x32xf32>
    %cst_61 = arith.constant dense<0.000000e+00> : vector<16x16xf32>
    %147 = tpu.matmul %146, %142, %cst_61 {dimension_numbers = #tpu.dot_dimension_numbers<[1], [1], [0], [0], [0, 0, 1, 0], [], []>} : vector<16x32xf32>, vector<16x32xf32>, vector<16x16xf32> -> vector<16x16xf32>
    %148 = arith.addf %147, %85 : vector<16x16xf32>
    %cst_62 = arith.constant dense<0xFF800000> : vector<16xf32>
    %149 = vector.multi_reduction <maximumf>, %148, %cst_62 [1] : vector<16x16xf32> to vector<16xf32>
    %150 = vector.shape_cast %149 : vector<16xf32> to vector<16x1xf32>
    %151 = vector.broadcast %150 : vector<16x1xf32> to vector<16x16xf32>
    %152 = arith.subf %148, %151 : vector<16x16xf32>
    %153 = math.exp %152 : vector<16x16xf32>
    %cst_63 = arith.constant dense<0.000000e+00> : vector<16xf32>
    %154 = vector.multi_reduction <add>, %153, %cst_63 [1] : vector<16x16xf32> to vector<16xf32>
    %155 = vector.shape_cast %154 : vector<16xf32> to vector<16x1xf32>
    %156 = tpu.reciprocal %155 : vector<16x1xf32> -> vector<16x1xf32>
    %157 = vector.broadcast %156 : vector<16x1xf32> to vector<16x16xf32>
    %158 = arith.mulf %153, %157 : vector<16x16xf32>
    %cst_64 = arith.constant dense<0.000000e+00> : vector<16x32xf32>
    %159 = tpu.matmul %158, %143, %cst_64 {dimension_numbers = #tpu.dot_dimension_numbers<[1], [0], [0], [1], [0, 0, 1, 1], [], []>} : vector<16x16xf32>, vector<16x32xf32>, vector<16x32xf32> -> vector<16x32xf32>
    %160 = vector.broadcast %30 : vector<1x32xf32> to vector<16x32xf32>
    %161 = arith.mulf %159, %160 : vector<16x32xf32>
    %162 = arith.addf %144, %161 : vector<16x32xf32>
    %163 = vector.broadcast %38 : vector<1x32xf32> to vector<16x32xf32>
    %164 = arith.mulf %141, %163 : vector<16x32xf32>
    %cst_65 = arith.constant dense<0.000000e+00> : vector<16x16xf32>
    %165 = tpu.matmul %164, %142, %cst_65 {dimension_numbers = #tpu.dot_dimension_numbers<[1], [1], [0], [0], [0, 0, 1, 0], [], []>} : vector<16x32xf32>, vector<16x32xf32>, vector<16x16xf32> -> vector<16x16xf32>
    %166 = arith.addf %165, %85 : vector<16x16xf32>
    %cst_66 = arith.constant dense<0xFF800000> : vector<16xf32>
    %167 = vector.multi_reduction <maximumf>, %166, %cst_66 [1] : vector<16x16xf32> to vector<16xf32>
    %168 = vector.shape_cast %167 : vector<16xf32> to vector<16x1xf32>
    %169 = vector.broadcast %168 : vector<16x1xf32> to vector<16x16xf32>
    %170 = arith.subf %166, %169 : vector<16x16xf32>
    %171 = math.exp %170 : vector<16x16xf32>
    %cst_67 = arith.constant dense<0.000000e+00> : vector<16xf32>
    %172 = vector.multi_reduction <add>, %171, %cst_67 [1] : vector<16x16xf32> to vector<16xf32>
    %173 = vector.shape_cast %172 : vector<16xf32> to vector<16x1xf32>
    %174 = tpu.reciprocal %173 : vector<16x1xf32> -> vector<16x1xf32>
    %175 = vector.broadcast %174 : vector<16x1xf32> to vector<16x16xf32>
    %176 = arith.mulf %171, %175 : vector<16x16xf32>
    %cst_68 = arith.constant dense<0.000000e+00> : vector<16x32xf32>
    %177 = tpu.matmul %176, %143, %cst_68 {dimension_numbers = #tpu.dot_dimension_numbers<[1], [0], [0], [1], [0, 0, 1, 1], [], []>} : vector<16x16xf32>, vector<16x32xf32>, vector<16x32xf32> -> vector<16x32xf32>
    %178 = vector.broadcast %38 : vector<1x32xf32> to vector<16x32xf32>
    %179 = arith.mulf %177, %178 : vector<16x32xf32>
    %180 = arith.addf %162, %179 : vector<16x32xf32>
    %181 = vector.broadcast %46 : vector<1x32xf32> to vector<16x32xf32>
    %182 = arith.mulf %141, %181 : vector<16x32xf32>
    %cst_69 = arith.constant dense<0.000000e+00> : vector<16x16xf32>
    %183 = tpu.matmul %182, %142, %cst_69 {dimension_numbers = #tpu.dot_dimension_numbers<[1], [1], [0], [0], [0, 0, 1, 0], [], []>} : vector<16x32xf32>, vector<16x32xf32>, vector<16x16xf32> -> vector<16x16xf32>
    %184 = arith.addf %183, %85 : vector<16x16xf32>
    %cst_70 = arith.constant dense<0xFF800000> : vector<16xf32>
    %185 = vector.multi_reduction <maximumf>, %184, %cst_70 [1] : vector<16x16xf32> to vector<16xf32>
    %186 = vector.shape_cast %185 : vector<16xf32> to vector<16x1xf32>
    %187 = vector.broadcast %186 : vector<16x1xf32> to vector<16x16xf32>
    %188 = arith.subf %184, %187 : vector<16x16xf32>
    %189 = math.exp %188 : vector<16x16xf32>
    %cst_71 = arith.constant dense<0.000000e+00> : vector<16xf32>
    %190 = vector.multi_reduction <add>, %189, %cst_71 [1] : vector<16x16xf32> to vector<16xf32>
    %191 = vector.shape_cast %190 : vector<16xf32> to vector<16x1xf32>
    %192 = tpu.reciprocal %191 : vector<16x1xf32> -> vector<16x1xf32>
    %193 = vector.broadcast %192 : vector<16x1xf32> to vector<16x16xf32>
    %194 = arith.mulf %189, %193 : vector<16x16xf32>
    %cst_72 = arith.constant dense<0.000000e+00> : vector<16x32xf32>
    %195 = tpu.matmul %194, %143, %cst_72 {dimension_numbers = #tpu.dot_dimension_numbers<[1], [0], [0], [1], [0, 0, 1, 1], [], []>} : vector<16x16xf32>, vector<16x32xf32>, vector<16x32xf32> -> vector<16x32xf32>
    %196 = vector.broadcast %46 : vector<1x32xf32> to vector<16x32xf32>
    %197 = arith.mulf %195, %196 : vector<16x32xf32>
    %198 = arith.addf %180, %197 : vector<16x32xf32>
    %199 = vector.broadcast %54 : vector<1x32xf32> to vector<16x32xf32>
    %200 = arith.mulf %141, %199 : vector<16x32xf32>
    %cst_73 = arith.constant dense<0.000000e+00> : vector<16x16xf32>
    %201 = tpu.matmul %200, %142, %cst_73 {dimension_numbers = #tpu.dot_dimension_numbers<[1], [1], [0], [0], [0, 0, 1, 0], [], []>} : vector<16x32xf32>, vector<16x32xf32>, vector<16x16xf32> -> vector<16x16xf32>
    %202 = arith.addf %201, %85 : vector<16x16xf32>
    %cst_74 = arith.constant dense<0xFF800000> : vector<16xf32>
    %203 = vector.multi_reduction <maximumf>, %202, %cst_74 [1] : vector<16x16xf32> to vector<16xf32>
    %204 = vector.shape_cast %203 : vector<16xf32> to vector<16x1xf32>
    %205 = vector.broadcast %204 : vector<16x1xf32> to vector<16x16xf32>
    %206 = arith.subf %202, %205 : vector<16x16xf32>
    %207 = math.exp %206 : vector<16x16xf32>
    %cst_75 = arith.constant dense<0.000000e+00> : vector<16xf32>
    %208 = vector.multi_reduction <add>, %207, %cst_75 [1] : vector<16x16xf32> to vector<16xf32>
    %209 = vector.shape_cast %208 : vector<16xf32> to vector<16x1xf32>
    %210 = tpu.reciprocal %209 : vector<16x1xf32> -> vector<16x1xf32>
    %211 = vector.broadcast %210 : vector<16x1xf32> to vector<16x16xf32>
    %212 = arith.mulf %207, %211 : vector<16x16xf32>
    %cst_76 = arith.constant dense<0.000000e+00> : vector<16x32xf32>
    %213 = tpu.matmul %212, %143, %cst_76 {dimension_numbers = #tpu.dot_dimension_numbers<[1], [0], [0], [1], [0, 0, 1, 1], [], []>} : vector<16x16xf32>, vector<16x32xf32>, vector<16x32xf32> -> vector<16x32xf32>
    %214 = vector.broadcast %54 : vector<1x32xf32> to vector<16x32xf32>
    %215 = arith.mulf %213, %214 : vector<16x32xf32>
    %216 = arith.addf %198, %215 : vector<16x32xf32>
    %cst_77 = arith.constant dense<0.000000e+00> : vector<16x32xf32>
    %217 = tpu.matmul %216, %5, %cst_77 {dimension_numbers = #tpu.dot_dimension_numbers<[1], [0], [0], [1], [0, 0, 1, 1], [], []>} : vector<16x32xf32>, vector<32x32xf32>, vector<16x32xf32> -> vector<16x32xf32>
    %218 = arith.addf %0, %217 : vector<16x32xf32>
    %cst_78 = arith.constant dense<0.000000e+00> : vector<16xf32>
    %219 = vector.multi_reduction <add>, %218, %cst_78 [1] : vector<16x32xf32> to vector<16xf32>
    %220 = vector.shape_cast %219 : vector<16xf32> to vector<16x1xf32>
    %cst_79 = arith.constant 3.200000e+01 : f32
    %221 = vector.broadcast %cst_79 : f32 to vector<16x1xf32>
    %222 = arith.divf %220, %221 : vector<16x1xf32>
    %223 = vector.broadcast %222 : vector<16x1xf32> to vector<16x32xf32>
    %224 = arith.subf %218, %223 : vector<16x32xf32>
    %225 = arith.mulf %224, %224 : vector<16x32xf32>
    %cst_80 = arith.constant dense<0.000000e+00> : vector<16xf32>
    %226 = vector.multi_reduction <add>, %225, %cst_80 [1] : vector<16x32xf32> to vector<16xf32>
    %227 = vector.shape_cast %226 : vector<16xf32> to vector<16x1xf32>
    %cst_81 = arith.constant 3.200000e+01 : f32
    %228 = vector.broadcast %cst_81 : f32 to vector<16x1xf32>
    %229 = arith.divf %227, %228 : vector<16x1xf32>
    %cst_82 = arith.constant 9.99999974E-6 : f32
    %230 = vector.broadcast %cst_82 : f32 to vector<16x1xf32>
    %231 = arith.addf %229, %230 : vector<16x1xf32>
    %232 = math.rsqrt %231 : vector<16x1xf32>
    %233 = vector.broadcast %232 : vector<16x1xf32> to vector<16x32xf32>
    %234 = arith.mulf %224, %233 : vector<16x32xf32>
    %235 = vector.broadcast %16 : vector<1x32xf32> to vector<16x32xf32>
    %236 = arith.mulf %234, %235 : vector<16x32xf32>
    %237 = vector.broadcast %17 : vector<1x32xf32> to vector<16x32xf32>
    %238 = arith.addf %236, %237 : vector<16x32xf32>
    %239 = arith.addf %238, %1 : vector<16x32xf32>
    %cst_83 = arith.constant dense<0.000000e+00> : vector<16x32xf32>
    %240 = tpu.matmul %239, %6, %cst_83 {dimension_numbers = #tpu.dot_dimension_numbers<[1], [0], [0], [1], [0, 0, 1, 1], [], []>} : vector<16x32xf32>, vector<32x32xf32>, vector<16x32xf32> -> vector<16x32xf32>
    %cst_84 = arith.constant 0.353553385 : f32
    %241 = vector.broadcast %cst_84 : f32 to vector<16x32xf32>
    %242 = arith.mulf %240, %241 : vector<16x32xf32>
    %243 = arith.addf %2, %3 : vector<16x32xf32>
    %cst_85 = arith.constant dense<0.000000e+00> : vector<16x32xf32>
    %244 = tpu.matmul %243, %7, %cst_85 {dimension_numbers = #tpu.dot_dimension_numbers<[1], [0], [0], [1], [0, 0, 1, 1], [], []>} : vector<16x32xf32>, vector<32x32xf32>, vector<16x32xf32> -> vector<16x32xf32>
    %cst_86 = arith.constant dense<0.000000e+00> : vector<16x32xf32>
    %245 = tpu.matmul %2, %8, %cst_86 {dimension_numbers = #tpu.dot_dimension_numbers<[1], [0], [0], [1], [0, 0, 1, 1], [], []>} : vector<16x32xf32>, vector<32x32xf32>, vector<16x32xf32> -> vector<16x32xf32>
    %cst_87 = arith.constant 0.000000e+00 : f32
    %246 = vector.broadcast %cst_87 : f32 to vector<16x32xf32>
    %247 = vector.broadcast %30 : vector<1x32xf32> to vector<16x32xf32>
    %248 = arith.mulf %242, %247 : vector<16x32xf32>
    %cst_88 = arith.constant dense<0.000000e+00> : vector<16x16xf32>
    %249 = tpu.matmul %248, %244, %cst_88 {dimension_numbers = #tpu.dot_dimension_numbers<[1], [1], [0], [0], [0, 0, 1, 0], [], []>} : vector<16x32xf32>, vector<16x32xf32>, vector<16x16xf32> -> vector<16x16xf32>
    %250 = arith.addf %249, %116 : vector<16x16xf32>
    %cst_89 = arith.constant dense<0xFF800000> : vector<16xf32>
    %251 = vector.multi_reduction <maximumf>, %250, %cst_89 [1] : vector<16x16xf32> to vector<16xf32>
    %252 = vector.shape_cast %251 : vector<16xf32> to vector<16x1xf32>
    %253 = vector.broadcast %252 : vector<16x1xf32> to vector<16x16xf32>
    %254 = arith.subf %250, %253 : vector<16x16xf32>
    %255 = math.exp %254 : vector<16x16xf32>
    %cst_90 = arith.constant dense<0.000000e+00> : vector<16xf32>
    %256 = vector.multi_reduction <add>, %255, %cst_90 [1] : vector<16x16xf32> to vector<16xf32>
    %257 = vector.shape_cast %256 : vector<16xf32> to vector<16x1xf32>
    %258 = tpu.reciprocal %257 : vector<16x1xf32> -> vector<16x1xf32>
    %259 = vector.broadcast %258 : vector<16x1xf32> to vector<16x16xf32>
    %260 = arith.mulf %255, %259 : vector<16x16xf32>
    %cst_91 = arith.constant dense<0.000000e+00> : vector<16x32xf32>
    %261 = tpu.matmul %260, %245, %cst_91 {dimension_numbers = #tpu.dot_dimension_numbers<[1], [0], [0], [1], [0, 0, 1, 1], [], []>} : vector<16x16xf32>, vector<16x32xf32>, vector<16x32xf32> -> vector<16x32xf32>
    %262 = vector.broadcast %30 : vector<1x32xf32> to vector<16x32xf32>
    %263 = arith.mulf %261, %262 : vector<16x32xf32>
    %264 = arith.addf %246, %263 : vector<16x32xf32>
    %265 = vector.broadcast %38 : vector<1x32xf32> to vector<16x32xf32>
    %266 = arith.mulf %242, %265 : vector<16x32xf32>
    %cst_92 = arith.constant dense<0.000000e+00> : vector<16x16xf32>
    %267 = tpu.matmul %266, %244, %cst_92 {dimension_numbers = #tpu.dot_dimension_numbers<[1], [1], [0], [0], [0, 0, 1, 0], [], []>} : vector<16x32xf32>, vector<16x32xf32>, vector<16x16xf32> -> vector<16x16xf32>
    %268 = arith.addf %267, %116 : vector<16x16xf32>
    %cst_93 = arith.constant dense<0xFF800000> : vector<16xf32>
    %269 = vector.multi_reduction <maximumf>, %268, %cst_93 [1] : vector<16x16xf32> to vector<16xf32>
    %270 = vector.shape_cast %269 : vector<16xf32> to vector<16x1xf32>
    %271 = vector.broadcast %270 : vector<16x1xf32> to vector<16x16xf32>
    %272 = arith.subf %268, %271 : vector<16x16xf32>
    %273 = math.exp %272 : vector<16x16xf32>
    %cst_94 = arith.constant dense<0.000000e+00> : vector<16xf32>
    %274 = vector.multi_reduction <add>, %273, %cst_94 [1] : vector<16x16xf32> to vector<16xf32>
    %275 = vector.shape_cast %274 : vector<16xf32> to vector<16x1xf32>
    %276 = tpu.reciprocal %275 : vector<16x1xf32> -> vector<16x1xf32>
    %277 = vector.broadcast %276 : vector<16x1xf32> to vector<16x16xf32>
    %278 = arith.mulf %273, %277 : vector<16x16xf32>
    %cst_95 = arith.constant dense<0.000000e+00> : vector<16x32xf32>
    %279 = tpu.matmul %278, %245, %cst_95 {dimension_numbers = #tpu.dot_dimension_numbers<[1], [0], [0], [1], [0, 0, 1, 1], [], []>} : vector<16x16xf32>, vector<16x32xf32>, vector<16x32xf32> -> vector<16x32xf32>
    %280 = vector.broadcast %38 : vector<1x32xf32> to vector<16x32xf32>
    %281 = arith.mulf %279, %280 : vector<16x32xf32>
    %282 = arith.addf %264, %281 : vector<16x32xf32>
    %283 = vector.broadcast %46 : vector<1x32xf32> to vector<16x32xf32>
    %284 = arith.mulf %242, %283 : vector<16x32xf32>
    %cst_96 = arith.constant dense<0.000000e+00> : vector<16x16xf32>
    %285 = tpu.matmul %284, %244, %cst_96 {dimension_numbers = #tpu.dot_dimension_numbers<[1], [1], [0], [0], [0, 0, 1, 0], [], []>} : vector<16x32xf32>, vector<16x32xf32>, vector<16x16xf32> -> vector<16x16xf32>
    %286 = arith.addf %285, %116 : vector<16x16xf32>
    %cst_97 = arith.constant dense<0xFF800000> : vector<16xf32>
    %287 = vector.multi_reduction <maximumf>, %286, %cst_97 [1] : vector<16x16xf32> to vector<16xf32>
    %288 = vector.shape_cast %287 : vector<16xf32> to vector<16x1xf32>
    %289 = vector.broadcast %288 : vector<16x1xf32> to vector<16x16xf32>
    %290 = arith.subf %286, %289 : vector<16x16xf32>
    %291 = math.exp %290 : vector<16x16xf32>
    %cst_98 = arith.constant dense<0.000000e+00> : vector<16xf32>
    %292 = vector.multi_reduction <add>, %291, %cst_98 [1] : vector<16x16xf32> to vector<16xf32>
    %293 = vector.shape_cast %292 : vector<16xf32> to vector<16x1xf32>
    %294 = tpu.reciprocal %293 : vector<16x1xf32> -> vector<16x1xf32>
    %295 = vector.broadcast %294 : vector<16x1xf32> to vector<16x16xf32>
    %296 = arith.mulf %291, %295 : vector<16x16xf32>
    %cst_99 = arith.constant dense<0.000000e+00> : vector<16x32xf32>
    %297 = tpu.matmul %296, %245, %cst_99 {dimension_numbers = #tpu.dot_dimension_numbers<[1], [0], [0], [1], [0, 0, 1, 1], [], []>} : vector<16x16xf32>, vector<16x32xf32>, vector<16x32xf32> -> vector<16x32xf32>
    %298 = vector.broadcast %46 : vector<1x32xf32> to vector<16x32xf32>
    %299 = arith.mulf %297, %298 : vector<16x32xf32>
    %300 = arith.addf %282, %299 : vector<16x32xf32>
    %301 = vector.broadcast %54 : vector<1x32xf32> to vector<16x32xf32>
    %302 = arith.mulf %242, %301 : vector<16x32xf32>
    %cst_100 = arith.constant dense<0.000000e+00> : vector<16x16xf32>
    %303 = tpu.matmul %302, %244, %cst_100 {dimension_numbers = #tpu.dot_dimension_numbers<[1], [1], [0], [0], [0, 0, 1, 0], [], []>} : vector<16x32xf32>, vector<16x32xf32>, vector<16x16xf32> -> vector<16x16xf32>
    %304 = arith.addf %303, %116 : vector<16x16xf32>
    %cst_101 = arith.constant dense<0xFF800000> : vector<16xf32>
    %305 = vector.multi_reduction <maximumf>, %304, %cst_101 [1] : vector<16x16xf32> to vector<16xf32>
    %306 = vector.shape_cast %305 : vector<16xf32> to vector<16x1xf32>
    %307 = vector.broadcast %306 : vector<16x1xf32> to vector<16x16xf32>
    %308 = arith.subf %304, %307 : vector<16x16xf32>
    %309 = math.exp %308 : vector<16x16xf32>
    %cst_102 = arith.constant dense<0.000000e+00> : vector<16xf32>
    %310 = vector.multi_reduction <add>, %309, %cst_102 [1] : vector<16x16xf32> to vector<16xf32>
    %311 = vector.shape_cast %310 : vector<16xf32> to vector<16x1xf32>
    %312 = tpu.reciprocal %311 : vector<16x1xf32> -> vector<16x1xf32>
    %313 = vector.broadcast %312 : vector<16x1xf32> to vector<16x16xf32>
    %314 = arith.mulf %309, %313 : vector<16x16xf32>
    %cst_103 = arith.constant dense<0.000000e+00> : vector<16x32xf32>
    %315 = tpu.matmul %314, %245, %cst_103 {dimension_numbers = #tpu.dot_dimension_numbers<[1], [0], [0], [1], [0, 0, 1, 1], [], []>} : vector<16x16xf32>, vector<16x32xf32>, vector<16x32xf32> -> vector<16x32xf32>
    %316 = vector.broadcast %54 : vector<1x32xf32> to vector<16x32xf32>
    %317 = arith.mulf %315, %316 : vector<16x32xf32>
    %318 = arith.addf %300, %317 : vector<16x32xf32>
    %cst_104 = arith.constant dense<0.000000e+00> : vector<16x32xf32>
    %319 = tpu.matmul %318, %9, %cst_104 {dimension_numbers = #tpu.dot_dimension_numbers<[1], [0], [0], [1], [0, 0, 1, 1], [], []>} : vector<16x32xf32>, vector<32x32xf32>, vector<16x32xf32> -> vector<16x32xf32>
    %320 = arith.addf %218, %319 : vector<16x32xf32>
    %cst_105 = arith.constant dense<0.000000e+00> : vector<16xf32>
    %321 = vector.multi_reduction <add>, %320, %cst_105 [1] : vector<16x32xf32> to vector<16xf32>
    %322 = vector.shape_cast %321 : vector<16xf32> to vector<16x1xf32>
    %cst_106 = arith.constant 3.200000e+01 : f32
    %323 = vector.broadcast %cst_106 : f32 to vector<16x1xf32>
    %324 = arith.divf %322, %323 : vector<16x1xf32>
    %325 = vector.broadcast %324 : vector<16x1xf32> to vector<16x32xf32>
    %326 = arith.subf %320, %325 : vector<16x32xf32>
    %327 = arith.mulf %326, %326 : vector<16x32xf32>
    %cst_107 = arith.constant dense<0.000000e+00> : vector<16xf32>
    %328 = vector.multi_reduction <add>, %327, %cst_107 [1] : vector<16x32xf32> to vector<16xf32>
    %329 = vector.shape_cast %328 : vector<16xf32> to vector<16x1xf32>
    %cst_108 = arith.constant 3.200000e+01 : f32
    %330 = vector.broadcast %cst_108 : f32 to vector<16x1xf32>
    %331 = arith.divf %329, %330 : vector<16x1xf32>
    %cst_109 = arith.constant 9.99999974E-6 : f32
    %332 = vector.broadcast %cst_109 : f32 to vector<16x1xf32>
    %333 = arith.addf %331, %332 : vector<16x1xf32>
    %334 = math.rsqrt %333 : vector<16x1xf32>
    %335 = vector.broadcast %334 : vector<16x1xf32> to vector<16x32xf32>
    %336 = arith.mulf %326, %335 : vector<16x32xf32>
    %337 = vector.broadcast %18 : vector<1x32xf32> to vector<16x32xf32>
    %338 = arith.mulf %336, %337 : vector<16x32xf32>
    %339 = vector.broadcast %19 : vector<1x32xf32> to vector<16x32xf32>
    %340 = arith.addf %338, %339 : vector<16x32xf32>
    %cst_110 = arith.constant dense<0.000000e+00> : vector<16x64xf32>
    %341 = tpu.matmul %340, %12, %cst_110 {dimension_numbers = #tpu.dot_dimension_numbers<[1], [0], [0], [1], [0, 0, 1, 1], [], []>} : vector<16x32xf32>, vector<32x64xf32>, vector<16x64xf32> -> vector<16x64xf32>
    %342 = vector.broadcast %20 : vector<1x64xf32> to vector<16x64xf32>
    %343 = arith.addf %341, %342 : vector<16x64xf32>
    %cst_111 = arith.constant 0.000000e+00 : f32
    %344 = vector.broadcast %cst_111 : f32 to vector<16x64xf32>
    %345 = arith.maximumf %343, %344 : vector<16x64xf32>
    %cst_112 = arith.constant dense<0.000000e+00> : vector<16x32xf32>
    %346 = tpu.matmul %345, %10, %cst_112 {dimension_numbers = #tpu.dot_dimension_numbers<[1], [0], [0], [1], [0, 0, 1, 1], [], []>} : vector<16x64xf32>, vector<64x32xf32>, vector<16x32xf32> -> vector<16x32xf32>
    %347 = arith.addf %320, %346 : vector<16x32xf32>
    %348 = vector.broadcast %21 : vector<1x32xf32> to vector<16x32xf32>
    %349 = arith.addf %347, %348 : vector<16x32xf32>
    %c0_113 = arith.constant 0 : index
    %c0_114 = arith.constant 0 : index
    %350 = vector.load %arg4[%c0_113, %c0_114] : memref<16x32xf32, #tpu.memory_space<vmem>>, vector<16x32xf32>
    tpu.vector_store %arg4[%c0_113, %c0_114], %349 {strides = array<i32>} : memref<16x32xf32, #tpu.memory_space<vmem>>, vector<16x32xf32>,
    return
  }
}

</mosaic_0001>

<llo_original>
// kernel: transformer_decoder_layer.1
$region0: #{transformer_decoder_layer.1}
  #allocation0 [shape = 'u32[]', space=smem, size = 0x4, offset = 0x4, fixed_abs, tag = 'smem constant byte address 0x4 - core index']
  #allocation1 [shape = 'u32[144,128]{1,0:T(1,128)}', space=vmem, size = 0x12000, scoped, tag = 'internal scratch']
  %s0 = inlined_call_operand.vmem [shape: f32[16,32], index: 0, kind: input, shape index: {}, may-alias: {0,4}]
  %s1 = inlined_call_operand.vmem [shape: f32[48,32], index: 1, kind: input, shape index: {}]
  %s2 = inlined_call_operand.vmem [shape: f32[256,32], index: 2, kind: input, shape index: {}]
  %s3 = inlined_call_operand.vmem [shape: f32[72,64], index: 3, kind: input, shape index: {}]
  %s4 = inlined_call_operand.vmem [shape: f32[16,32], index: 4, kind: output, shape index: {}, may-alias: {0,4}]
  %s5 = sld [smem:[#allocation0]]
  $region26: #{transformer_decoder_layer.1} parent=0
    _
  %s7 = ssub.s32 1, %s5
  %s8 = scalar_select 0, %s7, %s5
  // Predicated region
  $region2: #{transformer_decoder_layer.1} parent=0 // pred_check
    _
  $region3: #{transformer_decoder_layer.1} parent=0 // pred_check_branch
    %10 = sbr.rel (0) target = $region5
  $region4: #{transformer_decoder_layer.1} parent=0 // pred_region
    _
  $region5: #{transformer_decoder_layer.1} parent=0 // pred_fallthru
    _
  // Predicated region
  $region6: #{transformer_decoder_layer.1} parent=0 // pred_check
    _
  $region7: #{transformer_decoder_layer.1} parent=0 // pred_check_branch
    %12 = sbr.rel (0) target = $region9
  $region8: #{transformer_decoder_layer.1} parent=0 // pred_region
    _
  $region9: #{transformer_decoder_layer.1} parent=0 // pred_fallthru
    _
  // Predicated region
  $region10: #{transformer_decoder_layer.1} parent=0 // pred_check
    _
  $region11: #{transformer_decoder_layer.1} parent=0 // pred_check_branch
    %14 = sbr.rel (0) target = $region13
  $region12: #{transformer_decoder_layer.1} parent=0 // pred_region
    _
  $region13: #{transformer_decoder_layer.1} parent=0 // pred_fallthru
    _
  // Predicated region
  $region14: #{transformer_decoder_layer.1} parent=0 // pred_check
    _
  $region15: #{transformer_decoder_layer.1} parent=0 // pred_check_branch
    %16 = sbr.rel (0) target = $region17
  $region16: #{transformer_decoder_layer.1} parent=0 // pred_region
    _
  $region17: #{transformer_decoder_layer.1} parent=0 // pred_fallthru
    _
  %v17 = vld [vmem:[%s0] sm:$0xff]
  %v18 = vld [vmem:[%s0 + $0x8] sm:$0xff]
  %v19 = vld [vmem:[%s1] sm:$0xff]
  %v20 = vld [vmem:[%s1 + $0x8] sm:$0xff]
  %v21 = vld [vmem:[%s1 + $0x10] sm:$0xff]
  %v22 = vld [vmem:[%s1 + $0x18] sm:$0xff]
  %v23 = vld [vmem:[%s1 + $0x20] sm:$0xff]
  %v24 = vld [vmem:[%s1 + $0x28] sm:$0xff]
  %v25 = vld [vmem:[%s2] sm:$0xff]
  %v26 = vld [vmem:[%s2 + $0x8] sm:$0xff]
  %v27 = vld [vmem:[%s2 + $0x10] sm:$0xff]
  %v28 = vld [vmem:[%s2 + $0x18] sm:$0xff]
  %v29 = vld [vmem:[%s2 + $0x20] sm:$0xff]
  %v30 = vld [vmem:[%s2 + $0x28] sm:$0xff]
  %v31 = vld [vmem:[%s2 + $0x30] sm:$0xff]
  %v32 = vld [vmem:[%s2 + $0x38] sm:$0xff]
  %v33 = vld [vmem:[%s2 + $0x40] sm:$0xff]
  %v34 = vld [vmem:[%s2 + $0x48] sm:$0xff]
  %v35 = vld [vmem:[%s2 + $0x50] sm:$0xff]
  %v36 = vld [vmem:[%s2 + $0x58] sm:$0xff]
  %v37 = vld [vmem:[%s2 + $0x60] sm:$0xff]
  %v38 = vld [vmem:[%s2 + $0x68] sm:$0xff]
  %v39 = vld [vmem:[%s2 + $0x70] sm:$0xff]
  %v40 = vld [vmem:[%s2 + $0x78] sm:$0xff]
  %v41 = vld [vmem:[%s2 + $0x80] sm:$0xff]
  %v42 = vld [vmem:[%s2 + $0x88] sm:$0xff]
  %v43 = vld [vmem:[%s2 + $0x90] sm:$0xff]
  %v44 = vld [vmem:[%s2 + $0x98] sm:$0xff]
  %v45 = vld [vmem:[%s2 + $0xa0] sm:$0xff]
  %v46 = vld [vmem:[%s2 + $0xa8] sm:$0xff]
  %v47 = vld [vmem:[%s2 + $0xb0] sm:$0xff]
  %v48 = vld [vmem:[%s2 + $0xb8] sm:$0xff]
  %v49 = vld [vmem:[%s2 + $0xc0] sm:$0xff]
  %v50 = vld [vmem:[%s2 + $0xc8] sm:$0xff]
  %v51 = vld [vmem:[%s2 + $0xd0] sm:$0xff]
  %v52 = vld [vmem:[%s2 + $0xd8] sm:$0xff]
  %v53 = vld [vmem:[%s2 + $0xe0] sm:$0xff]
  %v54 = vld [vmem:[%s2 + $0xe8] sm:$0xff]
  %v55 = vld [vmem:[%s2 + $0xf0] sm:$0xff]
  %v56 = vld [vmem:[%s2 + $0xf8] sm:$0xff]
  %v57 = vld [vmem:[%s3] sm:$0xff]
  %v58 = vld [vmem:[%s3 + $0x8] sm:$0xff]
  %v59 = vld [vmem:[%s3 + $0x10] sm:$0xff]
  %v60 = vld [vmem:[%s3 + $0x18] sm:$0xff]
  %v61 = vld [vmem:[%s3 + $0x20] sm:$0xff]
  %v62 = vld [vmem:[%s3 + $0x28] sm:$0xff]
  %v63 = vld [vmem:[%s3 + $0x30] sm:$0xff]
  %v64 = vld [vmem:[%s3 + $0x38] sm:$0xff]
  %v65 = vld [vmem:[%s3 + $0x40] sm:$0xff]
  %v66 = vlaneseq
  %v67 = vand.u32 %v66, 127
  %vm68 = vcmp.ge.s32.totalorder %v67, 0
  %vm69 = vcmp.lt.s32.totalorder %v67, 8
  %vm70 = vmand %vm68, %vm69
  %v71 = vsel %vm70, 1.0, 0.0
  %vm72 = vcmp.ge.s32.totalorder %v67, 8
  %vm73 = vcmp.lt.s32.totalorder %v67, 16
  %vm74 = vmand %vm72, %vm73
  %v75 = vsel %vm74, 1.0, 0.0
  %vm76 = vcmp.ge.s32.totalorder %v67, 16
  %vm77 = vcmp.lt.s32.totalorder %v67, 24
  %vm78 = vmand %vm76, %vm77
  %v79 = vsel %vm78, 1.0, 0.0
  %vm80 = vcmp.ge.s32.totalorder %v67, 24
  %vm81 = vcmp.lt.s32.totalorder %v67, 32
  %vm82 = vmand %vm80, %vm81
  %v83 = vsel %vm82, 1.0, 0.0
  %v84 = vlaneseq
  %v85 = vshrl.u32 %v84, 7
  %v86 = vadd.s32 %v85, 8
  %vm87 = vcmp.lt.s32.totalorder %v85, 0
  %vm88 = vcmp.lt.s32.totalorder %v86, 0
  %vm89 = vcmp.ge.s32.totalorder %v85, 0
  %vm90 = vcmp.ge.s32.totalorder %v86, 0
  %vm91 = vcmp.lt.s32.totalorder %v85, 8
  %vm92 = vcmp.lt.s32.totalorder %v86, 8
  %vm93 = vmand %vm89, %vm91
  %vm94 = vmand %vm90, %vm92
  %vm95 = vmand %vm93, %vm68
  %vm96 = vmand %vm94, %vm68
  %vm97 = vmand %vm95, %vm69
  %vm98 = vmand %vm96, %vm69
  %vm99 = vmor %vm87, %vm97
  %vm100 = vmor %vm88, %vm98
  %vm101 = vcmp.ge.s32.totalorder %v85, 8
  %vm102 = vcmp.ge.s32.totalorder %v86, 8
  %vm103 = vcmp.lt.s32.totalorder %v85, 16
  %vm104 = vcmp.lt.s32.totalorder %v86, 16
  %vm105 = vmand %vm101, %vm103
  %vm106 = vmand %vm102, %vm104
  %vm107 = vmand %vm105, %vm72
  %vm108 = vmand %vm106, %vm72
  %vm109 = vmand %vm107, %vm73
  %vm110 = vmand %vm108, %vm73
  %vm111 = vmor %vm99, %vm109
  %vm112 = vmor %vm100, %vm110
  %v113 = vsel %vm111, 0.0, -1e+30
  %v114 = vsel %vm112, 0.0, -1e+30
  %vm115 = vcmask 261120
  %v116 = vsel %vm115, %v17, 0.0
  %117 = vadd.xlane.f32.xlu0 %v116
  %v118 = vpop.xlane.xlu0 %117
  %v119 = vsel %vm115, %v18, 0.0
  %120 = vadd.xlane.f32.xlu0 %v119
  %v121 = vpop.xlane.xlu0 %120
  %v122 = vrcp.pop 32.0
  %v123 = vmul.f32 %v118, %v122
  %v124 = vmul.f32 %v121, %v122
  %v125 = vsub.f32 %v17, %v123
  %v126 = vsub.f32 %v18, %v124
  %v127 = vmul.f32 %v125, %v125
  %v128 = vmul.f32 %v126, %v126
  %v129 = vsel %vm115, %v127, 0.0
  %130 = vadd.xlane.f32.xlu0 %v129
  %v131 = vpop.xlane.xlu0 %130
  %v132 = vsel %vm115, %v128, 0.0
  %133 = vadd.xlane.f32.xlu0 %v132
  %v134 = vpop.xlane.xlu0 %133
  %v135 = vmul.f32 %v131, %v122
  %v136 = vmul.f32 %v134, %v122
  %v137 = vadd.f32 %v135, 1e-05
  %v138 = vadd.f32 %v136, 1e-05
  %v139 = vrsqrt.pop %v137
  %v140 = vrsqrt.pop %v138
  %v141 = vmul.f32 %v125, %v139
  %v142 = vmul.f32 %v126, %v140
  %v143 = vlaneseq
  %v144 = vshrl.u32 %v143, 7
  %v145 = vsub.s32 0, %v144
  %v146 = vrot.slane %v65, %v145
  %v147 = vmul.f32 %v141, %v146
  %v148 = vmul.f32 %v142, %v146
  %v149 = vlaneseq
  %v150 = vshrl.u32 %v149, 7
  %v151 = vsub.s32 1, %v150
  %v152 = vrot.slane %v65, %v151
  %v153 = vadd.f32 %v147, %v152
  %v154 = vadd.f32 %v148, %v152
  %v155 = vadd.f32 %v153, %v19
  %v156 = vadd.f32 %v154, %v20
  %v158 = vsel %vm115, %v155, 0
  %v161 = vsel %vm115, %v156, 0
  %163 = vmatprep.subr.mxu0 0.0
  %164 = vmatpush1.msra.mxu0 0.0
  %165 = vmatprep.subr.mxu0 0.0
  %166 = vmatpush1.msra.mxu0 0.0
  %167 = vmatprep.subr.mxu0 0.0
  %168 = vmatpush1.msra.mxu0 0.0
  %169 = vmatprep.subr.mxu0 0.0
  %170 = vmatpush1.msra.mxu0 0.0
  %171 = vmatprep.subr.mxu0 0.0
  %172 = vmatpush1.msra.mxu0 0.0
  %173 = vmatprep.subr.mxu0 0.0
  %174 = vmatpush1.msra.mxu0 0.0
  %175 = vmatprep.subr.mxu0 0.0
  %176 = vmatpush1.msra.mxu0 0.0
  %177 = vmatprep.subr.mxu0 0.0
  %178 = vmatpush1.msra.mxu0 0.0
  %179 = vmatprep.subr.mxu0 0.0
  %180 = vmatpush1.msra.mxu0 0.0
  %181 = vmatprep.subr.mxu0 0.0
  %182 = vmatpush1.msra.mxu0 0.0
  %183 = vmatprep.subr.mxu0 0.0
  %184 = vmatpush1.msra.mxu0 0.0
  %185 = vmatprep.subr.mxu0 0.0
  %186 = vmatpush1.msra.mxu0 0.0
  %187 = vmatprep.subr.mxu0 0.0
  %188 = vmatpush1.msra.mxu0 %v60
  %189 = vmatprep.subr.mxu0 0.0
  %190 = vmatpush1.msra.mxu0 %v59
  %191 = vmatprep.subr.mxu0 0.0
  %192 = vmatpush1.msra.mxu0 %v58
  %193 = vmatprep.subr.mxu0 0.0
  %194 = vmatpush1.msra.mxu0 %v57
  %195 = vmatprep.subr.mxu0 0.0
  %196 = vmatpush2.msra.mxu0 0.0
  %197 = vmatprep.subr.mxu0 0.0
  %198 = vmatpush2.msra.mxu0 0.0
  %199 = vmatprep.subr.mxu0 0.0
  %200 = vmatpush2.msra.mxu0 0.0
  %201 = vmatprep.subr.mxu0 0.0
  %202 = vmatpush2.msra.mxu0 0.0
  %203 = vmatprep.subr.mxu0 0.0
  %204 = vmatpush2.msra.mxu0 0.0
  %205 = vmatprep.subr.mxu0 0.0
  %206 = vmatpush2.msra.mxu0 0.0
  %207 = vmatprep.subr.mxu0 0.0
  %208 = vmatpush2.msra.mxu0 0.0
  %209 = vmatprep.subr.mxu0 0.0
  %210 = vmatpush2.msra.mxu0 0.0
  %211 = vmatprep.subr.mxu0 0.0
  %212 = vmatpush2.msra.mxu0 0.0
  %213 = vmatprep.subr.mxu0 0.0
  %214 = vmatpush2.msra.mxu0 0.0
  %215 = vmatprep.subr.mxu0 0.0
  %216 = vmatpush2.msra.mxu0 0.0
  %217 = vmatprep.subr.mxu0 0.0
  %218 = vmatpush2.msra.mxu0 0.0
  %219 = vmatprep.subr.mxu0 0.0
  %220 = vmatpush2.msra.mxu0 0.0
  %221 = vmatprep.subr.mxu0 0.0
  %222 = vmatpush2.msra.mxu0 0.0
  %223 = vmatprep.subr.mxu0 0.0
  %224 = vmatpush2.msra.mxu0 0.0
  %225 = vmatprep.subr.mxu0 0.0
  %226 = vmatpush2.msra.mxu0 0.0
  %227 = vmatprep.mubr.f32.mxu0 0.0
  %228 = vmatmul.mubr.f32.gmra.mxu0 %v158
  %v229 = vpop.f32.mrf.mxu0
  %v230 = vadd.f32 0.0, %v229
  %v231 = vpop.f32.mrf.mxu0
  %232 = vmatprep.mubr.f32.mxu0 0.0
  %233 = vmatmul.mubr.f32.gmra.mxu0 %v161
  %v234 = vpop.f32.mrf.mxu0
  %v235 = vadd.f32 0.0, %v234
  %v236 = vpop.f32.mrf.mxu0
  %237 = vdwg.mxu0
  %v238 = vmul.f32 %v230, 0.35355338
  %v239 = vmul.f32 %v235, 0.35355338
  %v241 = vsel %vm115, %v153, 0
  %v244 = vsel %vm115, %v154, 0
  %246 = vmatprep.subr.mxu0 0.0
  %247 = vmatpush1.msra.mxu0 0.0
  %248 = vmatprep.subr.mxu0 0.0
  %249 = vmatpush1.msra.mxu0 0.0
  %250 = vmatprep.subr.mxu0 0.0
  %251 = vmatpush1.msra.mxu0 0.0
  %252 = vmatprep.subr.mxu0 0.0
  %253 = vmatpush1.msra.mxu0 0.0
  %254 = vmatprep.subr.mxu0 0.0
  %255 = vmatpush1.msra.mxu0 0.0
  %256 = vmatprep.subr.mxu0 0.0
  %257 = vmatpush1.msra.mxu0 0.0
  %258 = vmatprep.subr.mxu0 0.0
  %259 = vmatpush1.msra.mxu0 0.0
  %260 = vmatprep.subr.mxu0 0.0
  %261 = vmatpush1.msra.mxu0 0.0
  %262 = vmatprep.subr.mxu0 0.0
  %263 = vmatpush1.msra.mxu0 0.0
  %264 = vmatprep.subr.mxu0 0.0
  %265 = vmatpush1.msra.mxu0 0.0
  %266 = vmatprep.subr.mxu0 0.0
  %267 = vmatpush1.msra.mxu0 0.0
  %268 = vmatprep.subr.mxu0 0.0
  %269 = vmatpush1.msra.mxu0 0.0
  %270 = vmatprep.subr.mxu0 0.0
  %271 = vmatpush1.msra.mxu0 %v28
  %272 = vmatprep.subr.mxu0 0.0
  %273 = vmatpush1.msra.mxu0 %v27
  %274 = vmatprep.subr.mxu0 0.0
  %275 = vmatpush1.msra.mxu0 %v26
  %276 = vmatprep.subr.mxu0 0.0
  %277 = vmatpush1.msra.mxu0 %v25
  %278 = vmatprep.subr.mxu0 0.0
  %279 = vmatpush2.msra.mxu0 0.0
  %280 = vmatprep.subr.mxu0 0.0
  %281 = vmatpush2.msra.mxu0 0.0
  %282 = vmatprep.subr.mxu0 0.0
  %283 = vmatpush2.msra.mxu0 0.0
  %284 = vmatprep.subr.mxu0 0.0
  %285 = vmatpush2.msra.mxu0 0.0
  %286 = vmatprep.subr.mxu0 0.0
  %287 = vmatpush2.msra.mxu0 0.0
  %288 = vmatprep.subr.mxu0 0.0
  %289 = vmatpush2.msra.mxu0 0.0
  %290 = vmatprep.subr.mxu0 0.0
  %291 = vmatpush2.msra.mxu0 0.0
  %292 = vmatprep.subr.mxu0 0.0
  %293 = vmatpush2.msra.mxu0 0.0
  %294 = vmatprep.subr.mxu0 0.0
  %295 = vmatpush2.msra.mxu0 0.0
  %296 = vmatprep.subr.mxu0 0.0
  %297 = vmatpush2.msra.mxu0 0.0
  %298 = vmatprep.subr.mxu0 0.0
  %299 = vmatpush2.msra.mxu0 0.0
  %300 = vmatprep.subr.mxu0 0.0
  %301 = vmatpush2.msra.mxu0 0.0
  %302 = vmatprep.subr.mxu0 0.0
  %303 = vmatpush2.msra.mxu0 0.0
  %304 = vmatprep.subr.mxu0 0.0
  %305 = vmatpush2.msra.mxu0 0.0
  %306 = vmatprep.subr.mxu0 0.0
  %307 = vmatpush2.msra.mxu0 0.0
  %308 = vmatprep.subr.mxu0 0.0
  %309 = vmatpush2.msra.mxu0 0.0
  %310 = vmatprep.mubr.f32.mxu0 0.0
  %311 = vmatmul.mubr.f32.gmra.mxu0 %v241
  %v312 = vpop.f32.mrf.mxu0
  %v313 = vadd.f32 0.0, %v312
  %v314 = vpop.f32.mrf.mxu0
  %315 = vmatprep.mubr.f32.mxu0 0.0
  %316 = vmatmul.mubr.f32.gmra.mxu0 %v244
  %v317 = vpop.f32.mrf.mxu0
  %v318 = vadd.f32 0.0, %v317
  %v319 = vpop.f32.mrf.mxu0
  %320 = vdwg.mxu0
  %v321 = vmul.f32 %v238, %v71
  %v322 = vmul.f32 %v239, %v71
  %325 = vrot.lane.b32.xlu0 %v230, 96
  %v326 = vpop.permute.xlu0 %325
  %327 = vrot.lane.b32.xlu0 %v235, 96
  %v328 = vpop.permute.xlu0 %327
  %v330 = vsel %vm115, %v321, 0
  %v333 = vsel %vm115, %v322, 0
  %v335 = vsel %vm115, %v326, 0
  %v337 = vsel %vm115, %v328, 0
  %339 = vmatprep.subr.mxu0 0.0
  %340 = vmatpush1.xpose.msra.mxu0 0.0
  %341 = vmatprep.subr.mxu0 0.0
  %342 = vmatpush1.xpose.msra.mxu0 0.0
  %343 = vmatprep.subr.mxu0 0.0
  %344 = vmatpush1.xpose.msra.mxu0 0.0
  %345 = vmatprep.subr.mxu0 0.0
  %346 = vmatpush1.xpose.msra.mxu0 0.0
  %347 = vmatprep.subr.mxu0 0.0
  %348 = vmatpush1.xpose.msra.mxu0 0.0
  %349 = vmatprep.subr.mxu0 0.0
  %350 = vmatpush1.xpose.msra.mxu0 0.0
  %351 = vmatprep.subr.mxu0 0.0
  %352 = vmatpush1.xpose.msra.mxu0 0.0
  %353 = vmatprep.subr.mxu0 0.0
  %354 = vmatpush1.xpose.msra.mxu0 0.0
  %355 = vmatprep.subr.mxu0 0.0
  %356 = vmatpush1.xpose.msra.mxu0 0.0
  %357 = vmatprep.subr.mxu0 0.0
  %358 = vmatpush1.xpose.msra.mxu0 0.0
  %359 = vmatprep.subr.mxu0 0.0
  %360 = vmatpush1.xpose.msra.mxu0 0.0
  %361 = vmatprep.subr.mxu0 0.0
  %362 = vmatpush1.xpose.msra.mxu0 0.0
  %363 = vmatprep.subr.mxu0 0.0
  %364 = vmatpush1.xpose.msra.mxu0 0.0
  %365 = vmatprep.subr.mxu0 0.0
  %366 = vmatpush1.xpose.msra.mxu0 0.0
  %367 = vmatprep.subr.mxu0 0.0
  %368 = vmatpush1.xpose.msra.mxu0 %v337
  %369 = vmatprep.subr.mxu0 0.0
  %370 = vmatpush1.xpose.msra.mxu0 %v335
  %371 = vmatprep.subr.mxu0 0.0
  %372 = vmatpush2.xpose.msra.mxu0 0.0
  %373 = vmatprep.subr.mxu0 0.0
  %374 = vmatpush2.xpose.msra.mxu0 0.0
  %375 = vmatprep.subr.mxu0 0.0
  %376 = vmatpush2.xpose.msra.mxu0 0.0
  %377 = vmatprep.subr.mxu0 0.0
  %378 = vmatpush2.xpose.msra.mxu0 0.0
  %379 = vmatprep.subr.mxu0 0.0
  %380 = vmatpush2.xpose.msra.mxu0 0.0
  %381 = vmatprep.subr.mxu0 0.0
  %382 = vmatpush2.xpose.msra.mxu0 0.0
  %383 = vmatprep.subr.mxu0 0.0
  %384 = vmatpush2.xpose.msra.mxu0 0.0
  %385 = vmatprep.subr.mxu0 0.0
  %386 = vmatpush2.xpose.msra.mxu0 0.0
  %387 = vmatprep.subr.mxu0 0.0
  %388 = vmatpush2.xpose.msra.mxu0 0.0
  %389 = vmatprep.subr.mxu0 0.0
  %390 = vmatpush2.xpose.msra.mxu0 0.0
  %391 = vmatprep.subr.mxu0 0.0
  %392 = vmatpush2.xpose.msra.mxu0 0.0
  %393 = vmatprep.subr.mxu0 0.0
  %394 = vmatpush2.xpose.msra.mxu0 0.0
  %395 = vmatprep.subr.mxu0 0.0
  %396 = vmatpush2.xpose.msra.mxu0 0.0
  %397 = vmatprep.subr.mxu0 0.0
  %398 = vmatpush2.xpose.msra.mxu0 0.0
  %399 = vmatprep.subr.mxu0 0.0
  %400 = vmatpush2.xpose.msra.mxu0 0.0
  %401 = vmatprep.subr.mxu0 0.0
  %402 = vmatpush2.xpose.msra.mxu0 0.0
  %403 = vmatprep.mubr.f32.mxu0 0.0
  %404 = vmatmul.mubr.f32.gmra.mxu0 %v330
  %v405 = vpop.f32.mrf.mxu0
  %v406 = vadd.f32 %v113, %v405
  %v407 = vpop.f32.mrf.mxu0
  %408 = vmatprep.mubr.f32.mxu0 0.0
  %409 = vmatmul.mubr.f32.gmra.mxu0 %v333
  %v410 = vpop.f32.mrf.mxu0
  %v411 = vadd.f32 %v114, %v410
  %v412 = vpop.f32.mrf.mxu0
  %413 = vdwg.mxu0
  %vm414 = vcmask 130048
  %v415 = vsel %vm414, %v406, -inf
  %416 = vmax.xlane.f32.xlu0 %v415
  %v417 = vpop.xlane.xlu0 %416
  %v418 = vsel %vm414, %v411, -inf
  %419 = vmax.xlane.f32.xlu0 %v418
  %v420 = vpop.xlane.xlu0 %419
  %v421 = vsub.f32 %v406, %v417
  %v422 = vsub.f32 %v411, %v420
  %v423 = vmul.f32 %v421, 1.442695
  %v424 = vpow.pop %v423
  %v425 = vmul.f32 %v422, 1.442695
  %v426 = vpow.pop %v425
  %v427 = vsel %vm414, %v424, 0.0
  %428 = vadd.xlane.f32.xlu0 %v427
  %v429 = vpop.xlane.xlu0 %428
  %v430 = vsel %vm414, %v426, 0.0
  %431 = vadd.xlane.f32.xlu0 %v430
  %v432 = vpop.xlane.xlu0 %431
  %v433 = vrcp.pop %v429
  %v434 = vrcp.pop %v432
  %v435 = vmul.f32 %v424, %v433
  %v436 = vmul.f32 %v426, %v434
  %v438 = vsel %vm414, %v435, 0
  %v441 = vsel %vm414, %v436, 0
  %443 = vmatprep.subr.mxu0 0.0
  %444 = vmatpush1.msra.mxu0 0.0
  %445 = vmatprep.subr.mxu0 0.0
  %446 = vmatpush1.msra.mxu0 0.0
  %447 = vmatprep.subr.mxu0 0.0
  %448 = vmatpush1.msra.mxu0 0.0
  %449 = vmatprep.subr.mxu0 0.0
  %450 = vmatpush1.msra.mxu0 0.0
  %451 = vmatprep.subr.mxu0 0.0
  %452 = vmatpush1.msra.mxu0 0.0
  %453 = vmatprep.subr.mxu0 0.0
  %454 = vmatpush1.msra.mxu0 0.0
  %455 = vmatprep.subr.mxu0 0.0
  %456 = vmatpush1.msra.mxu0 0.0
  %457 = vmatprep.subr.mxu0 0.0
  %458 = vmatpush1.msra.mxu0 0.0
  %459 = vmatprep.subr.mxu0 0.0
  %460 = vmatpush1.msra.mxu0 0.0
  %461 = vmatprep.subr.mxu0 0.0
  %462 = vmatpush1.msra.mxu0 0.0
  %463 = vmatprep.subr.mxu0 0.0
  %464 = vmatpush1.msra.mxu0 0.0
  %465 = vmatprep.subr.mxu0 0.0
  %466 = vmatpush1.msra.mxu0 0.0
  %467 = vmatprep.subr.mxu0 0.0
  %468 = vmatpush1.msra.mxu0 0.0
  %469 = vmatprep.subr.mxu0 0.0
  %470 = vmatpush1.msra.mxu0 0.0
  %471 = vmatprep.subr.mxu0 0.0
  %472 = vmatpush1.msra.mxu0 %v318
  %473 = vmatprep.subr.mxu0 0.0
  %474 = vmatpush1.msra.mxu0 %v313
  %475 = vmatprep.subr.mxu0 0.0
  %476 = vmatpush2.msra.mxu0 0.0
  %477 = vmatprep.subr.mxu0 0.0
  %478 = vmatpush2.msra.mxu0 0.0
  %479 = vmatprep.subr.mxu0 0.0
  %480 = vmatpush2.msra.mxu0 0.0
  %481 = vmatprep.subr.mxu0 0.0
  %482 = vmatpush2.msra.mxu0 0.0
  %483 = vmatprep.subr.mxu0 0.0
  %484 = vmatpush2.msra.mxu0 0.0
  %485 = vmatprep.subr.mxu0 0.0
  %486 = vmatpush2.msra.mxu0 0.0
  %487 = vmatprep.subr.mxu0 0.0
  %488 = vmatpush2.msra.mxu0 0.0
  %489 = vmatprep.subr.mxu0 0.0
  %490 = vmatpush2.msra.mxu0 0.0
  %491 = vmatprep.subr.mxu0 0.0
  %492 = vmatpush2.msra.mxu0 0.0
  %493 = vmatprep.subr.mxu0 0.0
  %494 = vmatpush2.msra.mxu0 0.0
  %495 = vmatprep.subr.mxu0 0.0
  %496 = vmatpush2.msra.mxu0 0.0
  %497 = vmatprep.subr.mxu0 0.0
  %498 = vmatpush2.msra.mxu0 0.0
  %499 = vmatprep.subr.mxu0 0.0
  %500 = vmatpush2.msra.mxu0 0.0
  %501 = vmatprep.subr.mxu0 0.0
  %502 = vmatpush2.msra.mxu0 0.0
  %503 = vmatprep.subr.mxu0 0.0
  %504 = vmatpush2.msra.mxu0 0.0
  %505 = vmatprep.subr.mxu0 0.0
  %506 = vmatpush2.msra.mxu0 0.0
  %507 = vmatprep.mubr.f32.mxu0 0.0
  %508 = vmatmul.mubr.f32.gmra.mxu0 %v438
  %v509 = vpop.f32.mrf.mxu0
  %v510 = vadd.f32 0.0, %v509
  %v511 = vpop.f32.mrf.mxu0
  %512 = vmatprep.mubr.f32.mxu0 0.0
  %513 = vmatmul.mubr.f32.gmra.mxu0 %v441
  %v514 = vpop.f32.mrf.mxu0
  %v515 = vadd.f32 0.0, %v514
  %v516 = vpop.f32.mrf.mxu0
  %517 = vdwg.mxu0
  %v518 = vmul.f32 %v510, %v71
  %v519 = vmul.f32 %v515, %v71
  %v520 = vadd.f32 %v518, 0.0
  %v521 = vadd.f32 %v519, 0.0
  %v522 = vmul.f32 %v238, %v75
  %v523 = vmul.f32 %v239, %v75
  %v525 = vsel %vm115, %v522, 0
  %v528 = vsel %vm115, %v523, 0
  %530 = vmatprep.subr.mxu0 0.0
  %531 = vmatpush1.xpose.msra.mxu0 0.0
  %532 = vmatprep.subr.mxu0 0.0
  %533 = vmatpush1.xpose.msra.mxu0 0.0
  %534 = vmatprep.subr.mxu0 0.0
  %535 = vmatpush1.xpose.msra.mxu0 0.0
  %536 = vmatprep.subr.mxu0 0.0
  %537 = vmatpush1.xpose.msra.mxu0 0.0
  %538 = vmatprep.subr.mxu0 0.0
  %539 = vmatpush1.xpose.msra.mxu0 0.0
  %540 = vmatprep.subr.mxu0 0.0
  %541 = vmatpush1.xpose.msra.mxu0 0.0
  %542 = vmatprep.subr.mxu0 0.0
  %543 = vmatpush1.xpose.msra.mxu0 0.0
  %544 = vmatprep.subr.mxu0 0.0
  %545 = vmatpush1.xpose.msra.mxu0 0.0
  %546 = vmatprep.subr.mxu0 0.0
  %547 = vmatpush1.xpose.msra.mxu0 0.0
  %548 = vmatprep.subr.mxu0 0.0
  %549 = vmatpush1.xpose.msra.mxu0 0.0
  %550 = vmatprep.subr.mxu0 0.0
  %551 = vmatpush1.xpose.msra.mxu0 0.0
  %552 = vmatprep.subr.mxu0 0.0
  %553 = vmatpush1.xpose.msra.mxu0 0.0
  %554 = vmatprep.subr.mxu0 0.0
  %555 = vmatpush1.xpose.msra.mxu0 0.0
  %556 = vmatprep.subr.mxu0 0.0
  %557 = vmatpush1.xpose.msra.mxu0 0.0
  %558 = vmatprep.subr.mxu0 0.0
  %559 = vmatpush1.xpose.msra.mxu0 %v337
  %560 = vmatprep.subr.mxu0 0.0
  %561 = vmatpush1.xpose.msra.mxu0 %v335
  %562 = vmatprep.subr.mxu0 0.0
  %563 = vmatpush2.xpose.msra.mxu0 0.0
  %564 = vmatprep.subr.mxu0 0.0
  %565 = vmatpush2.xpose.msra.mxu0 0.0
  %566 = vmatprep.subr.mxu0 0.0
  %567 = vmatpush2.xpose.msra.mxu0 0.0
  %568 = vmatprep.subr.mxu0 0.0
  %569 = vmatpush2.xpose.msra.mxu0 0.0
  %570 = vmatprep.subr.mxu0 0.0
  %571 = vmatpush2.xpose.msra.mxu0 0.0
  %572 = vmatprep.subr.mxu0 0.0
  %573 = vmatpush2.xpose.msra.mxu0 0.0
  %574 = vmatprep.subr.mxu0 0.0
  %575 = vmatpush2.xpose.msra.mxu0 0.0
  %576 = vmatprep.subr.mxu0 0.0
  %577 = vmatpush2.xpose.msra.mxu0 0.0
  %578 = vmatprep.subr.mxu0 0.0
  %579 = vmatpush2.xpose.msra.mxu0 0.0
  %580 = vmatprep.subr.mxu0 0.0
  %581 = vmatpush2.xpose.msra.mxu0 0.0
  %582 = vmatprep.subr.mxu0 0.0
  %583 = vmatpush2.xpose.msra.mxu0 0.0
  %584 = vmatprep.subr.mxu0 0.0
  %585 = vmatpush2.xpose.msra.mxu0 0.0
  %586 = vmatprep.subr.mxu0 0.0
  %587 = vmatpush2.xpose.msra.mxu0 0.0
  %588 = vmatprep.subr.mxu0 0.0
  %589 = vmatpush2.xpose.msra.mxu0 0.0
  %590 = vmatprep.subr.mxu0 0.0
  %591 = vmatpush2.xpose.msra.mxu0 0.0
  %592 = vmatprep.subr.mxu0 0.0
  %593 = vmatpush2.xpose.msra.mxu0 0.0
  %594 = vmatprep.mubr.f32.mxu0 0.0
  %595 = vmatmul.mubr.f32.gmra.mxu0 %v525
  %v596 = vpop.f32.mrf.mxu0
  %v597 = vadd.f32 %v113, %v596
  %v598 = vpop.f32.mrf.mxu0
  %599 = vmatprep.mubr.f32.mxu0 0.0
  %600 = vmatmul.mubr.f32.gmra.mxu0 %v528
  %v601 = vpop.f32.mrf.mxu0
  %v602 = vadd.f32 %v114, %v601
  %v603 = vpop.f32.mrf.mxu0
  %604 = vdwg.mxu0
  %v605 = vsel %vm414, %v597, -inf
  %606 = vmax.xlane.f32.xlu0 %v605
  %v607 = vpop.xlane.xlu0 %606
  %v608 = vsel %vm414, %v602, -inf
  %609 = vmax.xlane.f32.xlu0 %v608
  %v610 = vpop.xlane.xlu0 %609
  %v611 = vsub.f32 %v597, %v607
  %v612 = vsub.f32 %v602, %v610
  %v613 = vmul.f32 %v611, 1.442695
  %v614 = vpow.pop %v613
  %v615 = vmul.f32 %v612, 1.442695
  %v616 = vpow.pop %v615
  %v617 = vsel %vm414, %v614, 0.0
  %618 = vadd.xlane.f32.xlu0 %v617
  %v619 = vpop.xlane.xlu0 %618
  %v620 = vsel %vm414, %v616, 0.0
  %621 = vadd.xlane.f32.xlu0 %v620
  %v622 = vpop.xlane.xlu0 %621
  %v623 = vrcp.pop %v619
  %v624 = vrcp.pop %v622
  %v625 = vmul.f32 %v614, %v623
  %v626 = vmul.f32 %v616, %v624
  %v628 = vsel %vm414, %v625, 0
  %v631 = vsel %vm414, %v626, 0
  %633 = vmatprep.subr.mxu0 0.0
  %634 = vmatpush1.msra.mxu0 0.0
  %635 = vmatprep.subr.mxu0 0.0
  %636 = vmatpush1.msra.mxu0 0.0
  %637 = vmatprep.subr.mxu0 0.0
  %638 = vmatpush1.msra.mxu0 0.0
  %639 = vmatprep.subr.mxu0 0.0
  %640 = vmatpush1.msra.mxu0 0.0
  %641 = vmatprep.subr.mxu0 0.0
  %642 = vmatpush1.msra.mxu0 0.0
  %643 = vmatprep.subr.mxu0 0.0
  %644 = vmatpush1.msra.mxu0 0.0
  %645 = vmatprep.subr.mxu0 0.0
  %646 = vmatpush1.msra.mxu0 0.0
  %647 = vmatprep.subr.mxu0 0.0
  %648 = vmatpush1.msra.mxu0 0.0
  %649 = vmatprep.subr.mxu0 0.0
  %650 = vmatpush1.msra.mxu0 0.0
  %651 = vmatprep.subr.mxu0 0.0
  %652 = vmatpush1.msra.mxu0 0.0
  %653 = vmatprep.subr.mxu0 0.0
  %654 = vmatpush1.msra.mxu0 0.0
  %655 = vmatprep.subr.mxu0 0.0
  %656 = vmatpush1.msra.mxu0 0.0
  %657 = vmatprep.subr.mxu0 0.0
  %658 = vmatpush1.msra.mxu0 0.0
  %659 = vmatprep.subr.mxu0 0.0
  %660 = vmatpush1.msra.mxu0 0.0
  %661 = vmatprep.subr.mxu0 0.0
  %662 = vmatpush1.msra.mxu0 %v318
  %663 = vmatprep.subr.mxu0 0.0
  %664 = vmatpush1.msra.mxu0 %v313
  %665 = vmatprep.subr.mxu0 0.0
  %666 = vmatpush2.msra.mxu0 0.0
  %667 = vmatprep.subr.mxu0 0.0
  %668 = vmatpush2.msra.mxu0 0.0
  %669 = vmatprep.subr.mxu0 0.0
  %670 = vmatpush2.msra.mxu0 0.0
  %671 = vmatprep.subr.mxu0 0.0
  %672 = vmatpush2.msra.mxu0 0.0
  %673 = vmatprep.subr.mxu0 0.0
  %674 = vmatpush2.msra.mxu0 0.0
  %675 = vmatprep.subr.mxu0 0.0
  %676 = vmatpush2.msra.mxu0 0.0
  %677 = vmatprep.subr.mxu0 0.0
  %678 = vmatpush2.msra.mxu0 0.0
  %679 = vmatprep.subr.mxu0 0.0
  %680 = vmatpush2.msra.mxu0 0.0
  %681 = vmatprep.subr.mxu0 0.0
  %682 = vmatpush2.msra.mxu0 0.0
  %683 = vmatprep.subr.mxu0 0.0
  %684 = vmatpush2.msra.mxu0 0.0
  %685 = vmatprep.subr.mxu0 0.0
  %686 = vmatpush2.msra.mxu0 0.0
  %687 = vmatprep.subr.mxu0 0.0
  %688 = vmatpush2.msra.mxu0 0.0
  %689 = vmatprep.subr.mxu0 0.0
  %690 = vmatpush2.msra.mxu0 0.0
  %691 = vmatprep.subr.mxu0 0.0
  %692 = vmatpush2.msra.mxu0 0.0
  %693 = vmatprep.subr.mxu0 0.0
  %694 = vmatpush2.msra.mxu0 0.0
  %695 = vmatprep.subr.mxu0 0.0
  %696 = vmatpush2.msra.mxu0 0.0
  %697 = vmatprep.mubr.f32.mxu0 0.0
  %698 = vmatmul.mubr.f32.gmra.mxu0 %v628
  %v699 = vpop.f32.mrf.mxu0
  %v700 = vadd.f32 0.0, %v699
  %v701 = vpop.f32.mrf.mxu0
  %702 = vmatprep.mubr.f32.mxu0 0.0
  %703 = vmatmul.mubr.f32.gmra.mxu0 %v631
  %v704 = vpop.f32.mrf.mxu0
  %v705 = vadd.f32 0.0, %v704
  %v706 = vpop.f32.mrf.mxu0
  %707 = vdwg.mxu0
  %v708 = vmul.f32 %v700, %v75
  %v709 = vmul.f32 %v705, %v75
  %v710 = vadd.f32 %v520, %v708
  %v711 = vadd.f32 %v521, %v709
  %v712 = vmul.f32 %v238, %v79
  %v713 = vmul.f32 %v239, %v79
  %v715 = vsel %vm115, %v712, 0
  %v718 = vsel %vm115, %v713, 0
  %720 = vmatprep.subr.mxu0 0.0
  %721 = vmatpush1.xpose.msra.mxu0 0.0
  %722 = vmatprep.subr.mxu0 0.0
  %723 = vmatpush1.xpose.msra.mxu0 0.0
  %724 = vmatprep.subr.mxu0 0.0
  %725 = vmatpush1.xpose.msra.mxu0 0.0
  %726 = vmatprep.subr.mxu0 0.0
  %727 = vmatpush1.xpose.msra.mxu0 0.0
  %728 = vmatprep.subr.mxu0 0.0
  %729 = vmatpush1.xpose.msra.mxu0 0.0
  %730 = vmatprep.subr.mxu0 0.0
  %731 = vmatpush1.xpose.msra.mxu0 0.0
  %732 = vmatprep.subr.mxu0 0.0
  %733 = vmatpush1.xpose.msra.mxu0 0.0
  %734 = vmatprep.subr.mxu0 0.0
  %735 = vmatpush1.xpose.msra.mxu0 0.0
  %736 = vmatprep.subr.mxu0 0.0
  %737 = vmatpush1.xpose.msra.mxu0 0.0
  %738 = vmatprep.subr.mxu0 0.0
  %739 = vmatpush1.xpose.msra.mxu0 0.0
  %740 = vmatprep.subr.mxu0 0.0
  %741 = vmatpush1.xpose.msra.mxu0 0.0
  %742 = vmatprep.subr.mxu0 0.0
  %743 = vmatpush1.xpose.msra.mxu0 0.0
  %744 = vmatprep.subr.mxu0 0.0
  %745 = vmatpush1.xpose.msra.mxu0 0.0
  %746 = vmatprep.subr.mxu0 0.0
  %747 = vmatpush1.xpose.msra.mxu0 0.0
  %748 = vmatprep.subr.mxu0 0.0
  %749 = vmatpush1.xpose.msra.mxu0 %v337
  %750 = vmatprep.subr.mxu0 0.0
  %751 = vmatpush1.xpose.msra.mxu0 %v335
  %752 = vmatprep.subr.mxu0 0.0
  %753 = vmatpush2.xpose.msra.mxu0 0.0
  %754 = vmatprep.subr.mxu0 0.0
  %755 = vmatpush2.xpose.msra.mxu0 0.0
  %756 = vmatprep.subr.mxu0 0.0
  %757 = vmatpush2.xpose.msra.mxu0 0.0
  %758 = vmatprep.subr.mxu0 0.0
  %759 = vmatpush2.xpose.msra.mxu0 0.0
  %760 = vmatprep.subr.mxu0 0.0
  %761 = vmatpush2.xpose.msra.mxu0 0.0
  %762 = vmatprep.subr.mxu0 0.0
  %763 = vmatpush2.xpose.msra.mxu0 0.0
  %764 = vmatprep.subr.mxu0 0.0
  %765 = vmatpush2.xpose.msra.mxu0 0.0
  %766 = vmatprep.subr.mxu0 0.0
  %767 = vmatpush2.xpose.msra.mxu0 0.0
  %768 = vmatprep.subr.mxu0 0.0
  %769 = vmatpush2.xpose.msra.mxu0 0.0
  %770 = vmatprep.subr.mxu0 0.0
  %771 = vmatpush2.xpose.msra.mxu0 0.0
  %772 = vmatprep.subr.mxu0 0.0
  %773 = vmatpush2.xpose.msra.mxu0 0.0
  %774 = vmatprep.subr.mxu0 0.0
  %775 = vmatpush2.xpose.msra.mxu0 0.0
  %776 = vmatprep.subr.mxu0 0.0
  %777 = vmatpush2.xpose.msra.mxu0 0.0
  %778 = vmatprep.subr.mxu0 0.0
  %779 = vmatpush2.xpose.msra.mxu0 0.0
  %780 = vmatprep.subr.mxu0 0.0
  %781 = vmatpush2.xpose.msra.mxu0 0.0
  %782 = vmatprep.subr.mxu0 0.0
  %783 = vmatpush2.xpose.msra.mxu0 0.0
  %784 = vmatprep.mubr.f32.mxu0 0.0
  %785 = vmatmul.mubr.f32.gmra.mxu0 %v715
  %v786 = vpop.f32.mrf.mxu0
  %v787 = vadd.f32 %v113, %v786
  %v788 = vpop.f32.mrf.mxu0
  %789 = vmatprep.mubr.f32.mxu0 0.0
  %790 = vmatmul.mubr.f32.gmra.mxu0 %v718
  %v791 = vpop.f32.mrf.mxu0
  %v792 = vadd.f32 %v114, %v791
  %v793 = vpop.f32.mrf.mxu0
  %794 = vdwg.mxu0
  %v795 = vsel %vm414, %v787, -inf
  %796 = vmax.xlane.f32.xlu0 %v795
  %v797 = vpop.xlane.xlu0 %796
  %v798 = vsel %vm414, %v792, -inf
  %799 = vmax.xlane.f32.xlu0 %v798
  %v800 = vpop.xlane.xlu0 %799
  %v801 = vsub.f32 %v787, %v797
  %v802 = vsub.f32 %v792, %v800
  %v803 = vmul.f32 %v801, 1.442695
  %v804 = vpow.pop %v803
  %v805 = vmul.f32 %v802, 1.442695
  %v806 = vpow.pop %v805
  %v807 = vsel %vm414, %v804, 0.0
  %808 = vadd.xlane.f32.xlu0 %v807
  %v809 = vpop.xlane.xlu0 %808
  %v810 = vsel %vm414, %v806, 0.0
  %811 = vadd.xlane.f32.xlu0 %v810
  %v812 = vpop.xlane.xlu0 %811
  %v813 = vrcp.pop %v809
  %v814 = vrcp.pop %v812
  %v815 = vmul.f32 %v804, %v813
  %v816 = vmul.f32 %v806, %v814
  %v818 = vsel %vm414, %v815, 0
  %v821 = vsel %vm414, %v816, 0
  %823 = vmatprep.subr.mxu0 0.0
  %824 = vmatpush1.msra.mxu0 0.0
  %825 = vmatprep.subr.mxu0 0.0
  %826 = vmatpush1.msra.mxu0 0.0
  %827 = vmatprep.subr.mxu0 0.0
  %828 = vmatpush1.msra.mxu0 0.0
  %829 = vmatprep.subr.mxu0 0.0
  %830 = vmatpush1.msra.mxu0 0.0
  %831 = vmatprep.subr.mxu0 0.0
  %832 = vmatpush1.msra.mxu0 0.0
  %833 = vmatprep.subr.mxu0 0.0
  %834 = vmatpush1.msra.mxu0 0.0
  %835 = vmatprep.subr.mxu0 0.0
  %836 = vmatpush1.msra.mxu0 0.0
  %837 = vmatprep.subr.mxu0 0.0
  %838 = vmatpush1.msra.mxu0 0.0
  %839 = vmatprep.subr.mxu0 0.0
  %840 = vmatpush1.msra.mxu0 0.0
  %841 = vmatprep.subr.mxu0 0.0
  %842 = vmatpush1.msra.mxu0 0.0
  %843 = vmatprep.subr.mxu0 0.0
  %844 = vmatpush1.msra.mxu0 0.0
  %845 = vmatprep.subr.mxu0 0.0
  %846 = vmatpush1.msra.mxu0 0.0
  %847 = vmatprep.subr.mxu0 0.0
  %848 = vmatpush1.msra.mxu0 0.0
  %849 = vmatprep.subr.mxu0 0.0
  %850 = vmatpush1.msra.mxu0 0.0
  %851 = vmatprep.subr.mxu0 0.0
  %852 = vmatpush1.msra.mxu0 %v318
  %853 = vmatprep.subr.mxu0 0.0
  %854 = vmatpush1.msra.mxu0 %v313
  %855 = vmatprep.subr.mxu0 0.0
  %856 = vmatpush2.msra.mxu0 0.0
  %857 = vmatprep.subr.mxu0 0.0
  %858 = vmatpush2.msra.mxu0 0.0
  %859 = vmatprep.subr.mxu0 0.0
  %860 = vmatpush2.msra.mxu0 0.0
  %861 = vmatprep.subr.mxu0 0.0
  %862 = vmatpush2.msra.mxu0 0.0
  %863 = vmatprep.subr.mxu0 0.0
  %864 = vmatpush2.msra.mxu0 0.0
  %865 = vmatprep.subr.mxu0 0.0
  %866 = vmatpush2.msra.mxu0 0.0
  %867 = vmatprep.subr.mxu0 0.0
  %868 = vmatpush2.msra.mxu0 0.0
  %869 = vmatprep.subr.mxu0 0.0
  %870 = vmatpush2.msra.mxu0 0.0
  %871 = vmatprep.subr.mxu0 0.0
  %872 = vmatpush2.msra.mxu0 0.0
  %873 = vmatprep.subr.mxu0 0.0
  %874 = vmatpush2.msra.mxu0 0.0
  %875 = vmatprep.subr.mxu0 0.0
  %876 = vmatpush2.msra.mxu0 0.0
  %877 = vmatprep.subr.mxu0 0.0
  %878 = vmatpush2.msra.mxu0 0.0
  %879 = vmatprep.subr.mxu0 0.0
  %880 = vmatpush2.msra.mxu0 0.0
  %881 = vmatprep.subr.mxu0 0.0
  %882 = vmatpush2.msra.mxu0 0.0
  %883 = vmatprep.subr.mxu0 0.0
  %884 = vmatpush2.msra.mxu0 0.0
  %885 = vmatprep.subr.mxu0 0.0
  %886 = vmatpush2.msra.mxu0 0.0
  %887 = vmatprep.mubr.f32.mxu0 0.0
  %888 = vmatmul.mubr.f32.gmra.mxu0 %v818
  %v889 = vpop.f32.mrf.mxu0
  %v890 = vadd.f32 0.0, %v889
  %v891 = vpop.f32.mrf.mxu0
  %892 = vmatprep.mubr.f32.mxu0 0.0
  %893 = vmatmul.mubr.f32.gmra.mxu0 %v821
  %v894 = vpop.f32.mrf.mxu0
  %v895 = vadd.f32 0.0, %v894
  %v896 = vpop.f32.mrf.mxu0
  %897 = vdwg.mxu0
  %v898 = vmul.f32 %v890, %v79
  %v899 = vmul.f32 %v895, %v79
  %v900 = vadd.f32 %v710, %v898
  %v901 = vadd.f32 %v711, %v899
  %v902 = vmul.f32 %v238, %v83
  %v903 = vmul.f32 %v239, %v83
  %v905 = vsel %vm115, %v902, 0
  %v908 = vsel %vm115, %v903, 0
  %910 = vmatprep.subr.mxu0 0.0
  %911 = vmatpush1.xpose.msra.mxu0 0.0
  %912 = vmatprep.subr.mxu0 0.0
  %913 = vmatpush1.xpose.msra.mxu0 0.0
  %914 = vmatprep.subr.mxu0 0.0
  %915 = vmatpush1.xpose.msra.mxu0 0.0
  %916 = vmatprep.subr.mxu0 0.0
  %917 = vmatpush1.xpose.msra.mxu0 0.0
  %918 = vmatprep.subr.mxu0 0.0
  %919 = vmatpush1.xpose.msra.mxu0 0.0
  %920 = vmatprep.subr.mxu0 0.0
  %921 = vmatpush1.xpose.msra.mxu0 0.0
  %922 = vmatprep.subr.mxu0 0.0
  %923 = vmatpush1.xpose.msra.mxu0 0.0
  %924 = vmatprep.subr.mxu0 0.0
  %925 = vmatpush1.xpose.msra.mxu0 0.0
  %926 = vmatprep.subr.mxu0 0.0
  %927 = vmatpush1.xpose.msra.mxu0 0.0
  %928 = vmatprep.subr.mxu0 0.0
  %929 = vmatpush1.xpose.msra.mxu0 0.0
  %930 = vmatprep.subr.mxu0 0.0
  %931 = vmatpush1.xpose.msra.mxu0 0.0
  %932 = vmatprep.subr.mxu0 0.0
  %933 = vmatpush1.xpose.msra.mxu0 0.0
  %934 = vmatprep.subr.mxu0 0.0
  %935 = vmatpush1.xpose.msra.mxu0 0.0
  %936 = vmatprep.subr.mxu0 0.0
  %937 = vmatpush1.xpose.msra.mxu0 0.0
  %938 = vmatprep.subr.mxu0 0.0
  %939 = vmatpush1.xpose.msra.mxu0 %v337
  %940 = vmatprep.subr.mxu0 0.0
  %941 = vmatpush1.xpose.msra.mxu0 %v335
  %942 = vmatprep.subr.mxu0 0.0
  %943 = vmatpush2.xpose.msra.mxu0 0.0
  %944 = vmatprep.subr.mxu0 0.0
  %945 = vmatpush2.xpose.msra.mxu0 0.0
  %946 = vmatprep.subr.mxu0 0.0
  %947 = vmatpush2.xpose.msra.mxu0 0.0
  %948 = vmatprep.subr.mxu0 0.0
  %949 = vmatpush2.xpose.msra.mxu0 0.0
  %950 = vmatprep.subr.mxu0 0.0
  %951 = vmatpush2.xpose.msra.mxu0 0.0
  %952 = vmatprep.subr.mxu0 0.0
  %953 = vmatpush2.xpose.msra.mxu0 0.0
  %954 = vmatprep.subr.mxu0 0.0
  %955 = vmatpush2.xpose.msra.mxu0 0.0
  %956 = vmatprep.subr.mxu0 0.0
  %957 = vmatpush2.xpose.msra.mxu0 0.0
  %958 = vmatprep.subr.mxu0 0.0
  %959 = vmatpush2.xpose.msra.mxu0 0.0
  %960 = vmatprep.subr.mxu0 0.0
  %961 = vmatpush2.xpose.msra.mxu0 0.0
  %962 = vmatprep.subr.mxu0 0.0
  %963 = vmatpush2.xpose.msra.mxu0 0.0
  %964 = vmatprep.subr.mxu0 0.0
  %965 = vmatpush2.xpose.msra.mxu0 0.0
  %966 = vmatprep.subr.mxu0 0.0
  %967 = vmatpush2.xpose.msra.mxu0 0.0
  %968 = vmatprep.subr.mxu0 0.0
  %969 = vmatpush2.xpose.msra.mxu0 0.0
  %970 = vmatprep.subr.mxu0 0.0
  %971 = vmatpush2.xpose.msra.mxu0 0.0
  %972 = vmatprep.subr.mxu0 0.0
  %973 = vmatpush2.xpose.msra.mxu0 0.0
  %974 = vmatprep.mubr.f32.mxu0 0.0
  %975 = vmatmul.mubr.f32.gmra.mxu0 %v905
  %v976 = vpop.f32.mrf.mxu0
  %v977 = vadd.f32 %v113, %v976
  %v978 = vpop.f32.mrf.mxu0
  %979 = vmatprep.mubr.f32.mxu0 0.0
  %980 = vmatmul.mubr.f32.gmra.mxu0 %v908
  %v981 = vpop.f32.mrf.mxu0
  %v982 = vadd.f32 %v114, %v981
  %v983 = vpop.f32.mrf.mxu0
  %984 = vdwg.mxu0
  %v985 = vsel %vm414, %v977, -inf
  %986 = vmax.xlane.f32.xlu0 %v985
  %v987 = vpop.xlane.xlu0 %986
  %v988 = vsel %vm414, %v982, -inf
  %989 = vmax.xlane.f32.xlu0 %v988
  %v990 = vpop.xlane.xlu0 %989
  %v991 = vsub.f32 %v977, %v987
  %v992 = vsub.f32 %v982, %v990
  %v993 = vmul.f32 %v991, 1.442695
  %v994 = vpow.pop %v993
  %v995 = vmul.f32 %v992, 1.442695
  %v996 = vpow.pop %v995
  %v997 = vsel %vm414, %v994, 0.0
  %998 = vadd.xlane.f32.xlu0 %v997
  %v999 = vpop.xlane.xlu0 %998
  %v1000 = vsel %vm414, %v996, 0.0
  %1001 = vadd.xlane.f32.xlu0 %v1000
  %v1002 = vpop.xlane.xlu0 %1001
  %v1003 = vrcp.pop %v999
  %v1004 = vrcp.pop %v1002
  %v1005 = vmul.f32 %v994, %v1003
  %v1006 = vmul.f32 %v996, %v1004
  %v1008 = vsel %vm414, %v1005, 0
  %v1011 = vsel %vm414, %v1006, 0
  %1013 = vmatprep.subr.mxu0 0.0
  %1014 = vmatpush1.msra.mxu0 0.0
  %1015 = vmatprep.subr.mxu0 0.0
  %1016 = vmatpush1.msra.mxu0 0.0
  %1017 = vmatprep.subr.mxu0 0.0
  %1018 = vmatpush1.msra.mxu0 0.0
  %1019 = vmatprep.subr.mxu0 0.0
  %1020 = vmatpush1.msra.mxu0 0.0
  %1021 = vmatprep.subr.mxu0 0.0
  %1022 = vmatpush1.msra.mxu0 0.0
  %1023 = vmatprep.subr.mxu0 0.0
  %1024 = vmatpush1.msra.mxu0 0.0
  %1025 = vmatprep.subr.mxu0 0.0
  %1026 = vmatpush1.msra.mxu0 0.0
  %1027 = vmatprep.subr.mxu0 0.0
  %1028 = vmatpush1.msra.mxu0 0.0
  %1029 = vmatprep.subr.mxu0 0.0
  %1030 = vmatpush1.msra.mxu0 0.0
  %1031 = vmatprep.subr.mxu0 0.0
  %1032 = vmatpush1.msra.mxu0 0.0
  %1033 = vmatprep.subr.mxu0 0.0
  %1034 = vmatpush1.msra.mxu0 0.0
  %1035 = vmatprep.subr.mxu0 0.0
  %1036 = vmatpush1.msra.mxu0 0.0
  %1037 = vmatprep.subr.mxu0 0.0
  %1038 = vmatpush1.msra.mxu0 0.0
  %1039 = vmatprep.subr.mxu0 0.0
  %1040 = vmatpush1.msra.mxu0 0.0
  %1041 = vmatprep.subr.mxu0 0.0
  %1042 = vmatpush1.msra.mxu0 %v318
  %1043 = vmatprep.subr.mxu0 0.0
  %1044 = vmatpush1.msra.mxu0 %v313
  %1045 = vmatprep.subr.mxu0 0.0
  %1046 = vmatpush2.msra.mxu0 0.0
  %1047 = vmatprep.subr.mxu0 0.0
  %1048 = vmatpush2.msra.mxu0 0.0
  %1049 = vmatprep.subr.mxu0 0.0
  %1050 = vmatpush2.msra.mxu0 0.0
  %1051 = vmatprep.subr.mxu0 0.0
  %1052 = vmatpush2.msra.mxu0 0.0
  %1053 = vmatprep.subr.mxu0 0.0
  %1054 = vmatpush2.msra.mxu0 0.0
  %1055 = vmatprep.subr.mxu0 0.0
  %1056 = vmatpush2.msra.mxu0 0.0
  %1057 = vmatprep.subr.mxu0 0.0
  %1058 = vmatpush2.msra.mxu0 0.0
  %1059 = vmatprep.subr.mxu0 0.0
  %1060 = vmatpush2.msra.mxu0 0.0
  %1061 = vmatprep.subr.mxu0 0.0
  %1062 = vmatpush2.msra.mxu0 0.0
  %1063 = vmatprep.subr.mxu0 0.0
  %1064 = vmatpush2.msra.mxu0 0.0
  %1065 = vmatprep.subr.mxu0 0.0
  %1066 = vmatpush2.msra.mxu0 0.0
  %1067 = vmatprep.subr.mxu0 0.0
  %1068 = vmatpush2.msra.mxu0 0.0
  %1069 = vmatprep.subr.mxu0 0.0
  %1070 = vmatpush2.msra.mxu0 0.0
  %1071 = vmatprep.subr.mxu0 0.0
  %1072 = vmatpush2.msra.mxu0 0.0
  %1073 = vmatprep.subr.mxu0 0.0
  %1074 = vmatpush2.msra.mxu0 0.0
  %1075 = vmatprep.subr.mxu0 0.0
  %1076 = vmatpush2.msra.mxu0 0.0
  %1077 = vmatprep.mubr.f32.mxu0 0.0
  %1078 = vmatmul.mubr.f32.gmra.mxu0 %v1008
  %v1079 = vpop.f32.mrf.mxu0
  %v1080 = vadd.f32 0.0, %v1079
  %v1081 = vpop.f32.mrf.mxu0
  %1082 = vmatprep.mubr.f32.mxu0 0.0
  %1083 = vmatmul.mubr.f32.gmra.mxu0 %v1011
  %v1084 = vpop.f32.mrf.mxu0
  %v1085 = vadd.f32 0.0, %v1084
  %v1086 = vpop.f32.mrf.mxu0
  %1087 = vdwg.mxu0
  %v1088 = vmul.f32 %v1080, %v83
  %v1089 = vmul.f32 %v1085, %v83
  %v1090 = vadd.f32 %v900, %v1088
  %v1091 = vadd.f32 %v901, %v1089
  %v1093 = vsel %vm115, %v1090, 0
  %v1096 = vsel %vm115, %v1091, 0
  %1098 = vmatprep.subr.mxu0 0.0
  %1099 = vmatpush1.msra.mxu0 0.0
  %1100 = vmatprep.subr.mxu0 0.0
  %1101 = vmatpush1.msra.mxu0 0.0
  %1102 = vmatprep.subr.mxu0 0.0
  %1103 = vmatpush1.msra.mxu0 0.0
  %1104 = vmatprep.subr.mxu0 0.0
  %1105 = vmatpush1.msra.mxu0 0.0
  %1106 = vmatprep.subr.mxu0 0.0
  %1107 = vmatpush1.msra.mxu0 0.0
  %1108 = vmatprep.subr.mxu0 0.0
  %1109 = vmatpush1.msra.mxu0 0.0
  %1110 = vmatprep.subr.mxu0 0.0
  %1111 = vmatpush1.msra.mxu0 0.0
  %1112 = vmatprep.subr.mxu0 0.0
  %1113 = vmatpush1.msra.mxu0 0.0
  %1114 = vmatprep.subr.mxu0 0.0
  %1115 = vmatpush1.msra.mxu0 0.0
  %1116 = vmatprep.subr.mxu0 0.0
  %1117 = vmatpush1.msra.mxu0 0.0
  %1118 = vmatprep.subr.mxu0 0.0
  %1119 = vmatpush1.msra.mxu0 0.0
  %1120 = vmatprep.subr.mxu0 0.0
  %1121 = vmatpush1.msra.mxu0 0.0
  %1122 = vmatprep.subr.mxu0 0.0
  %1123 = vmatpush1.msra.mxu0 %v32
  %1124 = vmatprep.subr.mxu0 0.0
  %1125 = vmatpush1.msra.mxu0 %v31
  %1126 = vmatprep.subr.mxu0 0.0
  %1127 = vmatpush1.msra.mxu0 %v30
  %1128 = vmatprep.subr.mxu0 0.0
  %1129 = vmatpush1.msra.mxu0 %v29
  %1130 = vmatprep.subr.mxu0 0.0
  %1131 = vmatpush2.msra.mxu0 0.0
  %1132 = vmatprep.subr.mxu0 0.0
  %1133 = vmatpush2.msra.mxu0 0.0
  %1134 = vmatprep.subr.mxu0 0.0
  %1135 = vmatpush2.msra.mxu0 0.0
  %1136 = vmatprep.subr.mxu0 0.0
  %1137 = vmatpush2.msra.mxu0 0.0
  %1138 = vmatprep.subr.mxu0 0.0
  %1139 = vmatpush2.msra.mxu0 0.0
  %1140 = vmatprep.subr.mxu0 0.0
  %1141 = vmatpush2.msra.mxu0 0.0
  %1142 = vmatprep.subr.mxu0 0.0
  %1143 = vmatpush2.msra.mxu0 0.0
  %1144 = vmatprep.subr.mxu0 0.0
  %1145 = vmatpush2.msra.mxu0 0.0
  %1146 = vmatprep.subr.mxu0 0.0
  %1147 = vmatpush2.msra.mxu0 0.0
  %1148 = vmatprep.subr.mxu0 0.0
  %1149 = vmatpush2.msra.mxu0 0.0
  %1150 = vmatprep.subr.mxu0 0.0
  %1151 = vmatpush2.msra.mxu0 0.0
  %1152 = vmatprep.subr.mxu0 0.0
  %1153 = vmatpush2.msra.mxu0 0.0
  %1154 = vmatprep.subr.mxu0 0.0
  %1155 = vmatpush2.msra.mxu0 0.0
  %1156 = vmatprep.subr.mxu0 0.0
  %1157 = vmatpush2.msra.mxu0 0.0
  %1158 = vmatprep.subr.mxu0 0.0
  %1159 = vmatpush2.msra.mxu0 0.0
  %1160 = vmatprep.subr.mxu0 0.0
  %1161 = vmatpush2.msra.mxu0 0.0
  %1162 = vmatprep.mubr.f32.mxu0 0.0
  %1163 = vmatmul.mubr.f32.gmra.mxu0 %v1093
  %v1164 = vpop.f32.mrf.mxu0
  %v1165 = vadd.f32 0.0, %v1164
  %v1166 = vpop.f32.mrf.mxu0
  %1167 = vmatprep.mubr.f32.mxu0 0.0
  %1168 = vmatmul.mubr.f32.gmra.mxu0 %v1096
  %v1169 = vpop.f32.mrf.mxu0
  %v1170 = vadd.f32 0.0, %v1169
  %v1171 = vpop.f32.mrf.mxu0
  %1172 = vdwg.mxu0
  %v1173 = vadd.f32 %v17, %v1165
  %v1174 = vadd.f32 %v18, %v1170
  %v1175 = vsel %vm115, %v1173, 0.0
  %1176 = vadd.xlane.f32.xlu0 %v1175
  %v1177 = vpop.xlane.xlu0 %1176
  %v1178 = vsel %vm115, %v1174, 0.0
  %1179 = vadd.xlane.f32.xlu0 %v1178
  %v1180 = vpop.xlane.xlu0 %1179
  %v1181 = vmul.f32 %v1177, %v122
  %v1182 = vmul.f32 %v1180, %v122
  %v1183 = vsub.f32 %v1173, %v1181
  %v1184 = vsub.f32 %v1174, %v1182
  %v1185 = vmul.f32 %v1183, %v1183
  %v1186 = vmul.f32 %v1184, %v1184
  %v1187 = vsel %vm115, %v1185, 0.0
  %1188 = vadd.xlane.f32.xlu0 %v1187
  %v1189 = vpop.xlane.xlu0 %1188
  %v1190 = vsel %vm115, %v1186, 0.0
  %1191 = vadd.xlane.f32.xlu0 %v1190
  %v1192 = vpop.xlane.xlu0 %1191
  %v1193 = vmul.f32 %v1189, %v122
  %v1194 = vmul.f32 %v1192, %v122
  %v1195 = vadd.f32 %v1193, 1e-05
  %v1196 = vadd.f32 %v1194, 1e-05
  %v1197 = vrsqrt.pop %v1195
  %v1198 = vrsqrt.pop %v1196
  %v1199 = vmul.f32 %v1183, %v1197
  %v1200 = vmul.f32 %v1184, %v1198
  %v1201 = vlaneseq
  %v1202 = vshrl.u32 %v1201, 7
  %v1203 = vsub.s32 2, %v1202
  %v1204 = vrot.slane %v65, %v1203
  %v1205 = vmul.f32 %v1199, %v1204
  %v1206 = vmul.f32 %v1200, %v1204
  %v1207 = vlaneseq
  %v1208 = vshrl.u32 %v1207, 7
  %v1209 = vsub.s32 3, %v1208
  %v1210 = vrot.slane %v65, %v1209
  %v1211 = vadd.f32 %v1205, %v1210
  %v1212 = vadd.f32 %v1206, %v1210
  %v1213 = vadd.f32 %v1211, %v19
  %v1214 = vadd.f32 %v1212, %v20
  %v1216 = vsel %vm115, %v1213, 0
  %v1219 = vsel %vm115, %v1214, 0
  %1221 = vmatprep.subr.mxu0 0.0
  %1222 = vmatpush1.msra.mxu0 0.0
  %1223 = vmatprep.subr.mxu0 0.0
  %1224 = vmatpush1.msra.mxu0 0.0
  %1225 = vmatprep.subr.mxu0 0.0
  %1226 = vmatpush1.msra.mxu0 0.0
  %1227 = vmatprep.subr.mxu0 0.0
  %1228 = vmatpush1.msra.mxu0 0.0
  %1229 = vmatprep.subr.mxu0 0.0
  %1230 = vmatpush1.msra.mxu0 0.0
  %1231 = vmatprep.subr.mxu0 0.0
  %1232 = vmatpush1.msra.mxu0 0.0
  %1233 = vmatprep.subr.mxu0 0.0
  %1234 = vmatpush1.msra.mxu0 0.0
  %1235 = vmatprep.subr.mxu0 0.0
  %1236 = vmatpush1.msra.mxu0 0.0
  %1237 = vmatprep.subr.mxu0 0.0
  %1238 = vmatpush1.msra.mxu0 0.0
  %1239 = vmatprep.subr.mxu0 0.0
  %1240 = vmatpush1.msra.mxu0 0.0
  %1241 = vmatprep.subr.mxu0 0.0
  %1242 = vmatpush1.msra.mxu0 0.0
  %1243 = vmatprep.subr.mxu0 0.0
  %1244 = vmatpush1.msra.mxu0 0.0
  %1245 = vmatprep.subr.mxu0 0.0
  %1246 = vmatpush1.msra.mxu0 %v36
  %1247 = vmatprep.subr.mxu0 0.0
  %1248 = vmatpush1.msra.mxu0 %v35
  %1249 = vmatprep.subr.mxu0 0.0
  %1250 = vmatpush1.msra.mxu0 %v34
  %1251 = vmatprep.subr.mxu0 0.0
  %1252 = vmatpush1.msra.mxu0 %v33
  %1253 = vmatprep.subr.mxu0 0.0
  %1254 = vmatpush2.msra.mxu0 0.0
  %1255 = vmatprep.subr.mxu0 0.0
  %1256 = vmatpush2.msra.mxu0 0.0
  %1257 = vmatprep.subr.mxu0 0.0
  %1258 = vmatpush2.msra.mxu0 0.0
  %1259 = vmatprep.subr.mxu0 0.0
  %1260 = vmatpush2.msra.mxu0 0.0
  %1261 = vmatprep.subr.mxu0 0.0
  %1262 = vmatpush2.msra.mxu0 0.0
  %1263 = vmatprep.subr.mxu0 0.0
  %1264 = vmatpush2.msra.mxu0 0.0
  %1265 = vmatprep.subr.mxu0 0.0
  %1266 = vmatpush2.msra.mxu0 0.0
  %1267 = vmatprep.subr.mxu0 0.0
  %1268 = vmatpush2.msra.mxu0 0.0
  %1269 = vmatprep.subr.mxu0 0.0
  %1270 = vmatpush2.msra.mxu0 0.0
  %1271 = vmatprep.subr.mxu0 0.0
  %1272 = vmatpush2.msra.mxu0 0.0
  %1273 = vmatprep.subr.mxu0 0.0
  %1274 = vmatpush2.msra.mxu0 0.0
  %1275 = vmatprep.subr.mxu0 0.0
  %1276 = vmatpush2.msra.mxu0 0.0
  %1277 = vmatprep.subr.mxu0 0.0
  %1278 = vmatpush2.msra.mxu0 0.0
  %1279 = vmatprep.subr.mxu0 0.0
  %1280 = vmatpush2.msra.mxu0 0.0
  %1281 = vmatprep.subr.mxu0 0.0
  %1282 = vmatpush2.msra.mxu0 0.0
  %1283 = vmatprep.subr.mxu0 0.0
  %1284 = vmatpush2.msra.mxu0 0.0
  %1285 = vmatprep.mubr.f32.mxu0 0.0
  %1286 = vmatmul.mubr.f32.gmra.mxu0 %v1216
  %v1287 = vpop.f32.mrf.mxu0
  %v1288 = vadd.f32 0.0, %v1287
  %v1289 = vpop.f32.mrf.mxu0
  %1290 = vmatprep.mubr.f32.mxu0 0.0
  %1291 = vmatmul.mubr.f32.gmra.mxu0 %v1219
  %v1292 = vpop.f32.mrf.mxu0
  %v1293 = vadd.f32 0.0, %v1292
  %v1294 = vpop.f32.mrf.mxu0
  %1295 = vdwg.mxu0
  %v1296 = vmul.f32 %v1288, 0.35355338
  %v1297 = vmul.f32 %v1293, 0.35355338
  %v1298 = vadd.f32 %v21, %v23
  %v1299 = vadd.f32 %v22, %v24
  %v1301 = vsel %vm115, %v1298, 0
  %v1304 = vsel %vm115, %v1299, 0
  %1306 = vmatprep.subr.mxu0 0.0
  %1307 = vmatpush1.msra.mxu0 0.0
  %1308 = vmatprep.subr.mxu0 0.0
  %1309 = vmatpush1.msra.mxu0 0.0
  %1310 = vmatprep.subr.mxu0 0.0
  %1311 = vmatpush1.msra.mxu0 0.0
  %1312 = vmatprep.subr.mxu0 0.0
  %1313 = vmatpush1.msra.mxu0 0.0
  %1314 = vmatprep.subr.mxu0 0.0
  %1315 = vmatpush1.msra.mxu0 0.0
  %1316 = vmatprep.subr.mxu0 0.0
  %1317 = vmatpush1.msra.mxu0 0.0
  %1318 = vmatprep.subr.mxu0 0.0
  %1319 = vmatpush1.msra.mxu0 0.0
  %1320 = vmatprep.subr.mxu0 0.0
  %1321 = vmatpush1.msra.mxu0 0.0
  %1322 = vmatprep.subr.mxu0 0.0
  %1323 = vmatpush1.msra.mxu0 0.0
  %1324 = vmatprep.subr.mxu0 0.0
  %1325 = vmatpush1.msra.mxu0 0.0
  %1326 = vmatprep.subr.mxu0 0.0
  %1327 = vmatpush1.msra.mxu0 0.0
  %1328 = vmatprep.subr.mxu0 0.0
  %1329 = vmatpush1.msra.mxu0 0.0
  %1330 = vmatprep.subr.mxu0 0.0
  %1331 = vmatpush1.msra.mxu0 %v40
  %1332 = vmatprep.subr.mxu0 0.0
  %1333 = vmatpush1.msra.mxu0 %v39
  %1334 = vmatprep.subr.mxu0 0.0
  %1335 = vmatpush1.msra.mxu0 %v38
  %1336 = vmatprep.subr.mxu0 0.0
  %1337 = vmatpush1.msra.mxu0 %v37
  %1338 = vmatprep.subr.mxu0 0.0
  %1339 = vmatpush2.msra.mxu0 0.0
  %1340 = vmatprep.subr.mxu0 0.0
  %1341 = vmatpush2.msra.mxu0 0.0
  %1342 = vmatprep.subr.mxu0 0.0
  %1343 = vmatpush2.msra.mxu0 0.0
  %1344 = vmatprep.subr.mxu0 0.0
  %1345 = vmatpush2.msra.mxu0 0.0
  %1346 = vmatprep.subr.mxu0 0.0
  %1347 = vmatpush2.msra.mxu0 0.0
  %1348 = vmatprep.subr.mxu0 0.0
  %1349 = vmatpush2.msra.mxu0 0.0
  %1350 = vmatprep.subr.mxu0 0.0
  %1351 = vmatpush2.msra.mxu0 0.0
  %1352 = vmatprep.subr.mxu0 0.0
  %1353 = vmatpush2.msra.mxu0 0.0
  %1354 = vmatprep.subr.mxu0 0.0
  %1355 = vmatpush2.msra.mxu0 0.0
  %1356 = vmatprep.subr.mxu0 0.0
  %1357 = vmatpush2.msra.mxu0 0.0
  %1358 = vmatprep.subr.mxu0 0.0
  %1359 = vmatpush2.msra.mxu0 0.0
  %1360 = vmatprep.subr.mxu0 0.0
  %1361 = vmatpush2.msra.mxu0 0.0
  %1362 = vmatprep.subr.mxu0 0.0
  %1363 = vmatpush2.msra.mxu0 0.0
  %1364 = vmatprep.subr.mxu0 0.0
  %1365 = vmatpush2.msra.mxu0 0.0
  %1366 = vmatprep.subr.mxu0 0.0
  %1367 = vmatpush2.msra.mxu0 0.0
  %1368 = vmatprep.subr.mxu0 0.0
  %1369 = vmatpush2.msra.mxu0 0.0
  %1370 = vmatprep.mubr.f32.mxu0 0.0
  %1371 = vmatmul.mubr.f32.gmra.mxu0 %v1301
  %v1372 = vpop.f32.mrf.mxu0
  %v1373 = vadd.f32 0.0, %v1372
  %v1374 = vpop.f32.mrf.mxu0
  %1375 = vmatprep.mubr.f32.mxu0 0.0
  %1376 = vmatmul.mubr.f32.gmra.mxu0 %v1304
  %v1377 = vpop.f32.mrf.mxu0
  %v1378 = vadd.f32 0.0, %v1377
  %v1379 = vpop.f32.mrf.mxu0
  %1380 = vdwg.mxu0
  %v1382 = vsel %vm115, %v21, 0
  %v1385 = vsel %vm115, %v22, 0
  %1387 = vmatprep.subr.mxu0 0.0
  %1388 = vmatpush1.msra.mxu0 0.0
  %1389 = vmatprep.subr.mxu0 0.0
  %1390 = vmatpush1.msra.mxu0 0.0
  %1391 = vmatprep.subr.mxu0 0.0
  %1392 = vmatpush1.msra.mxu0 0.0
  %1393 = vmatprep.subr.mxu0 0.0
  %1394 = vmatpush1.msra.mxu0 0.0
  %1395 = vmatprep.subr.mxu0 0.0
  %1396 = vmatpush1.msra.mxu0 0.0
  %1397 = vmatprep.subr.mxu0 0.0
  %1398 = vmatpush1.msra.mxu0 0.0
  %1399 = vmatprep.subr.mxu0 0.0
  %1400 = vmatpush1.msra.mxu0 0.0
  %1401 = vmatprep.subr.mxu0 0.0
  %1402 = vmatpush1.msra.mxu0 0.0
  %1403 = vmatprep.subr.mxu0 0.0
  %1404 = vmatpush1.msra.mxu0 0.0
  %1405 = vmatprep.subr.mxu0 0.0
  %1406 = vmatpush1.msra.mxu0 0.0
  %1407 = vmatprep.subr.mxu0 0.0
  %1408 = vmatpush1.msra.mxu0 0.0
  %1409 = vmatprep.subr.mxu0 0.0
  %1410 = vmatpush1.msra.mxu0 0.0
  %1411 = vmatprep.subr.mxu0 0.0
  %1412 = vmatpush1.msra.mxu0 %v44
  %1413 = vmatprep.subr.mxu0 0.0
  %1414 = vmatpush1.msra.mxu0 %v43
  %1415 = vmatprep.subr.mxu0 0.0
  %1416 = vmatpush1.msra.mxu0 %v42
  %1417 = vmatprep.subr.mxu0 0.0
  %1418 = vmatpush1.msra.mxu0 %v41
  %1419 = vmatprep.subr.mxu0 0.0
  %1420 = vmatpush2.msra.mxu0 0.0
  %1421 = vmatprep.subr.mxu0 0.0
  %1422 = vmatpush2.msra.mxu0 0.0
  %1423 = vmatprep.subr.mxu0 0.0
  %1424 = vmatpush2.msra.mxu0 0.0
  %1425 = vmatprep.subr.mxu0 0.0
  %1426 = vmatpush2.msra.mxu0 0.0
  %1427 = vmatprep.subr.mxu0 0.0
  %1428 = vmatpush2.msra.mxu0 0.0
  %1429 = vmatprep.subr.mxu0 0.0
  %1430 = vmatpush2.msra.mxu0 0.0
  %1431 = vmatprep.subr.mxu0 0.0
  %1432 = vmatpush2.msra.mxu0 0.0
  %1433 = vmatprep.subr.mxu0 0.0
  %1434 = vmatpush2.msra.mxu0 0.0
  %1435 = vmatprep.subr.mxu0 0.0
  %1436 = vmatpush2.msra.mxu0 0.0
  %1437 = vmatprep.subr.mxu0 0.0
  %1438 = vmatpush2.msra.mxu0 0.0
  %1439 = vmatprep.subr.mxu0 0.0
  %1440 = vmatpush2.msra.mxu0 0.0
  %1441 = vmatprep.subr.mxu0 0.0
  %1442 = vmatpush2.msra.mxu0 0.0
  %1443 = vmatprep.subr.mxu0 0.0
  %1444 = vmatpush2.msra.mxu0 0.0
  %1445 = vmatprep.subr.mxu0 0.0
  %1446 = vmatpush2.msra.mxu0 0.0
  %1447 = vmatprep.subr.mxu0 0.0
  %1448 = vmatpush2.msra.mxu0 0.0
  %1449 = vmatprep.subr.mxu0 0.0
  %1450 = vmatpush2.msra.mxu0 0.0
  %1451 = vmatprep.mubr.f32.mxu0 0.0
  %1452 = vmatmul.mubr.f32.gmra.mxu0 %v1382
  %v1453 = vpop.f32.mrf.mxu0
  %v1454 = vadd.f32 0.0, %v1453
  %v1455 = vpop.f32.mrf.mxu0
  %1456 = vmatprep.mubr.f32.mxu0 0.0
  %1457 = vmatmul.mubr.f32.gmra.mxu0 %v1385
  %v1458 = vpop.f32.mrf.mxu0
  %v1459 = vadd.f32 0.0, %v1458
  %v1460 = vpop.f32.mrf.mxu0
  %1461 = vdwg.mxu0
  %v1462 = vmul.f32 %v1296, %v71
  %v1463 = vmul.f32 %v1297, %v71
  %v1465 = vsel %vm115, %v1462, 0
  %v1468 = vsel %vm115, %v1463, 0
  %v1471 = vsel %vm115, %v1373, 0
  %v1474 = vsel %vm115, %v1378, 0
  %1476 = vmatprep.subr.mxu0 0.0
  %1477 = vmatpush1.xpose.msra.mxu0 0.0
  %1478 = vmatprep.subr.mxu0 0.0
  %1479 = vmatpush1.xpose.msra.mxu0 0.0
  %1480 = vmatprep.subr.mxu0 0.0
  %1481 = vmatpush1.xpose.msra.mxu0 0.0
  %1482 = vmatprep.subr.mxu0 0.0
  %1483 = vmatpush1.xpose.msra.mxu0 0.0
  %1484 = vmatprep.subr.mxu0 0.0
  %1485 = vmatpush1.xpose.msra.mxu0 0.0
  %1486 = vmatprep.subr.mxu0 0.0
  %1487 = vmatpush1.xpose.msra.mxu0 0.0
  %1488 = vmatprep.subr.mxu0 0.0
  %1489 = vmatpush1.xpose.msra.mxu0 0.0
  %1490 = vmatprep.subr.mxu0 0.0
  %1491 = vmatpush1.xpose.msra.mxu0 0.0
  %1492 = vmatprep.subr.mxu0 0.0
  %1493 = vmatpush1.xpose.msra.mxu0 0.0
  %1494 = vmatprep.subr.mxu0 0.0
  %1495 = vmatpush1.xpose.msra.mxu0 0.0
  %1496 = vmatprep.subr.mxu0 0.0
  %1497 = vmatpush1.xpose.msra.mxu0 0.0
  %1498 = vmatprep.subr.mxu0 0.0
  %1499 = vmatpush1.xpose.msra.mxu0 0.0
  %1500 = vmatprep.subr.mxu0 0.0
  %1501 = vmatpush1.xpose.msra.mxu0 0.0
  %1502 = vmatprep.subr.mxu0 0.0
  %1503 = vmatpush1.xpose.msra.mxu0 0.0
  %1504 = vmatprep.subr.mxu0 0.0
  %1505 = vmatpush1.xpose.msra.mxu0 %v1474
  %1506 = vmatprep.subr.mxu0 0.0
  %1507 = vmatpush1.xpose.msra.mxu0 %v1471
  %1508 = vmatprep.subr.mxu0 0.0
  %1509 = vmatpush2.xpose.msra.mxu0 0.0
  %1510 = vmatprep.subr.mxu0 0.0
  %1511 = vmatpush2.xpose.msra.mxu0 0.0
  %1512 = vmatprep.subr.mxu0 0.0
  %1513 = vmatpush2.xpose.msra.mxu0 0.0
  %1514 = vmatprep.subr.mxu0 0.0
  %1515 = vmatpush2.xpose.msra.mxu0 0.0
  %1516 = vmatprep.subr.mxu0 0.0
  %1517 = vmatpush2.xpose.msra.mxu0 0.0
  %1518 = vmatprep.subr.mxu0 0.0
  %1519 = vmatpush2.xpose.msra.mxu0 0.0
  %1520 = vmatprep.subr.mxu0 0.0
  %1521 = vmatpush2.xpose.msra.mxu0 0.0
  %1522 = vmatprep.subr.mxu0 0.0
  %1523 = vmatpush2.xpose.msra.mxu0 0.0
  %1524 = vmatprep.subr.mxu0 0.0
  %1525 = vmatpush2.xpose.msra.mxu0 0.0
  %1526 = vmatprep.subr.mxu0 0.0
  %1527 = vmatpush2.xpose.msra.mxu0 0.0
  %1528 = vmatprep.subr.mxu0 0.0
  %1529 = vmatpush2.xpose.msra.mxu0 0.0
  %1530 = vmatprep.subr.mxu0 0.0
  %1531 = vmatpush2.xpose.msra.mxu0 0.0
  %1532 = vmatprep.subr.mxu0 0.0
  %1533 = vmatpush2.xpose.msra.mxu0 0.0
  %1534 = vmatprep.subr.mxu0 0.0
  %1535 = vmatpush2.xpose.msra.mxu0 0.0
  %1536 = vmatprep.subr.mxu0 0.0
  %1537 = vmatpush2.xpose.msra.mxu0 0.0
  %1538 = vmatprep.subr.mxu0 0.0
  %1539 = vmatpush2.xpose.msra.mxu0 0.0
  %1540 = vmatprep.mubr.f32.mxu0 0.0
  %1541 = vmatmul.mubr.f32.gmra.mxu0 %v1465
  %v1542 = vpop.f32.mrf.mxu0
  %v1543 = vadd.f32 %v113, %v1542
  %v1544 = vpop.f32.mrf.mxu0
  %1545 = vmatprep.mubr.f32.mxu0 0.0
  %1546 = vmatmul.mubr.f32.gmra.mxu0 %v1468
  %v1547 = vpop.f32.mrf.mxu0
  %v1548 = vadd.f32 %v114, %v1547
  %v1549 = vpop.f32.mrf.mxu0
  %1550 = vdwg.mxu0
  %v1551 = vsel %vm414, %v1543, -inf
  %1552 = vmax.xlane.f32.xlu0 %v1551
  %v1553 = vpop.xlane.xlu0 %1552
  %v1554 = vsel %vm414, %v1548, -inf
  %1555 = vmax.xlane.f32.xlu0 %v1554
  %v1556 = vpop.xlane.xlu0 %1555
  %v1557 = vsub.f32 %v1543, %v1553
  %v1558 = vsub.f32 %v1548, %v1556
  %v1559 = vmul.f32 %v1557, 1.442695
  %v1560 = vpow.pop %v1559
  %v1561 = vmul.f32 %v1558, 1.442695
  %v1562 = vpow.pop %v1561
  %v1563 = vsel %vm414, %v1560, 0.0
  %1564 = vadd.xlane.f32.xlu0 %v1563
  %v1565 = vpop.xlane.xlu0 %1564
  %v1566 = vsel %vm414, %v1562, 0.0
  %1567 = vadd.xlane.f32.xlu0 %v1566
  %v1568 = vpop.xlane.xlu0 %1567
  %v1569 = vrcp.pop %v1565
  %v1570 = vrcp.pop %v1568
  %v1571 = vmul.f32 %v1560, %v1569
  %v1572 = vmul.f32 %v1562, %v1570
  %v1574 = vsel %vm414, %v1571, 0
  %v1577 = vsel %vm414, %v1572, 0
  %1579 = vmatprep.subr.mxu0 0.0
  %1580 = vmatpush1.msra.mxu0 0.0
  %1581 = vmatprep.subr.mxu0 0.0
  %1582 = vmatpush1.msra.mxu0 0.0
  %1583 = vmatprep.subr.mxu0 0.0
  %1584 = vmatpush1.msra.mxu0 0.0
  %1585 = vmatprep.subr.mxu0 0.0
  %1586 = vmatpush1.msra.mxu0 0.0
  %1587 = vmatprep.subr.mxu0 0.0
  %1588 = vmatpush1.msra.mxu0 0.0
  %1589 = vmatprep.subr.mxu0 0.0
  %1590 = vmatpush1.msra.mxu0 0.0
  %1591 = vmatprep.subr.mxu0 0.0
  %1592 = vmatpush1.msra.mxu0 0.0
  %1593 = vmatprep.subr.mxu0 0.0
  %1594 = vmatpush1.msra.mxu0 0.0
  %1595 = vmatprep.subr.mxu0 0.0
  %1596 = vmatpush1.msra.mxu0 0.0
  %1597 = vmatprep.subr.mxu0 0.0
  %1598 = vmatpush1.msra.mxu0 0.0
  %1599 = vmatprep.subr.mxu0 0.0
  %1600 = vmatpush1.msra.mxu0 0.0
  %1601 = vmatprep.subr.mxu0 0.0
  %1602 = vmatpush1.msra.mxu0 0.0
  %1603 = vmatprep.subr.mxu0 0.0
  %1604 = vmatpush1.msra.mxu0 0.0
  %1605 = vmatprep.subr.mxu0 0.0
  %1606 = vmatpush1.msra.mxu0 0.0
  %1607 = vmatprep.subr.mxu0 0.0
  %1608 = vmatpush1.msra.mxu0 %v1459
  %1609 = vmatprep.subr.mxu0 0.0
  %1610 = vmatpush1.msra.mxu0 %v1454
  %1611 = vmatprep.subr.mxu0 0.0
  %1612 = vmatpush2.msra.mxu0 0.0
  %1613 = vmatprep.subr.mxu0 0.0
  %1614 = vmatpush2.msra.mxu0 0.0
  %1615 = vmatprep.subr.mxu0 0.0
  %1616 = vmatpush2.msra.mxu0 0.0
  %1617 = vmatprep.subr.mxu0 0.0
  %1618 = vmatpush2.msra.mxu0 0.0
  %1619 = vmatprep.subr.mxu0 0.0
  %1620 = vmatpush2.msra.mxu0 0.0
  %1621 = vmatprep.subr.mxu0 0.0
  %1622 = vmatpush2.msra.mxu0 0.0
  %1623 = vmatprep.subr.mxu0 0.0
  %1624 = vmatpush2.msra.mxu0 0.0
  %1625 = vmatprep.subr.mxu0 0.0
  %1626 = vmatpush2.msra.mxu0 0.0
  %1627 = vmatprep.subr.mxu0 0.0
  %1628 = vmatpush2.msra.mxu0 0.0
  %1629 = vmatprep.subr.mxu0 0.0
  %1630 = vmatpush2.msra.mxu0 0.0
  %1631 = vmatprep.subr.mxu0 0.0
  %1632 = vmatpush2.msra.mxu0 0.0
  %1633 = vmatprep.subr.mxu0 0.0
  %1634 = vmatpush2.msra.mxu0 0.0
  %1635 = vmatprep.subr.mxu0 0.0
  %1636 = vmatpush2.msra.mxu0 0.0
  %1637 = vmatprep.subr.mxu0 0.0
  %1638 = vmatpush2.msra.mxu0 0.0
  %1639 = vmatprep.subr.mxu0 0.0
  %1640 = vmatpush2.msra.mxu0 0.0
  %1641 = vmatprep.subr.mxu0 0.0
  %1642 = vmatpush2.msra.mxu0 0.0
  %1643 = vmatprep.mubr.f32.mxu0 0.0
  %1644 = vmatmul.mubr.f32.gmra.mxu0 %v1574
  %v1645 = vpop.f32.mrf.mxu0
  %v1646 = vadd.f32 0.0, %v1645
  %v1647 = vpop.f32.mrf.mxu0
  %1648 = vmatprep.mubr.f32.mxu0 0.0
  %1649 = vmatmul.mubr.f32.gmra.mxu0 %v1577
  %v1650 = vpop.f32.mrf.mxu0
  %v1651 = vadd.f32 0.0, %v1650
  %v1652 = vpop.f32.mrf.mxu0
  %1653 = vdwg.mxu0
  %v1654 = vmul.f32 %v1646, %v71
  %v1655 = vmul.f32 %v1651, %v71
  %v1656 = vadd.f32 %v1654, 0.0
  %v1657 = vadd.f32 %v1655, 0.0
  %v1658 = vmul.f32 %v1296, %v75
  %v1659 = vmul.f32 %v1297, %v75
  %v1661 = vsel %vm115, %v1658, 0
  %v1664 = vsel %vm115, %v1659, 0
  %1666 = vmatprep.subr.mxu0 0.0
  %1667 = vmatpush1.xpose.msra.mxu0 0.0
  %1668 = vmatprep.subr.mxu0 0.0
  %1669 = vmatpush1.xpose.msra.mxu0 0.0
  %1670 = vmatprep.subr.mxu0 0.0
  %1671 = vmatpush1.xpose.msra.mxu0 0.0
  %1672 = vmatprep.subr.mxu0 0.0
  %1673 = vmatpush1.xpose.msra.mxu0 0.0
  %1674 = vmatprep.subr.mxu0 0.0
  %1675 = vmatpush1.xpose.msra.mxu0 0.0
  %1676 = vmatprep.subr.mxu0 0.0
  %1677 = vmatpush1.xpose.msra.mxu0 0.0
  %1678 = vmatprep.subr.mxu0 0.0
  %1679 = vmatpush1.xpose.msra.mxu0 0.0
  %1680 = vmatprep.subr.mxu0 0.0
  %1681 = vmatpush1.xpose.msra.mxu0 0.0
  %1682 = vmatprep.subr.mxu0 0.0
  %1683 = vmatpush1.xpose.msra.mxu0 0.0
  %1684 = vmatprep.subr.mxu0 0.0
  %1685 = vmatpush1.xpose.msra.mxu0 0.0
  %1686 = vmatprep.subr.mxu0 0.0
  %1687 = vmatpush1.xpose.msra.mxu0 0.0
  %1688 = vmatprep.subr.mxu0 0.0
  %1689 = vmatpush1.xpose.msra.mxu0 0.0
  %1690 = vmatprep.subr.mxu0 0.0
  %1691 = vmatpush1.xpose.msra.mxu0 0.0
  %1692 = vmatprep.subr.mxu0 0.0
  %1693 = vmatpush1.xpose.msra.mxu0 0.0
  %1694 = vmatprep.subr.mxu0 0.0
  %1695 = vmatpush1.xpose.msra.mxu0 %v1474
  %1696 = vmatprep.subr.mxu0 0.0
  %1697 = vmatpush1.xpose.msra.mxu0 %v1471
  %1698 = vmatprep.subr.mxu0 0.0
  %1699 = vmatpush2.xpose.msra.mxu0 0.0
  %1700 = vmatprep.subr.mxu0 0.0
  %1701 = vmatpush2.xpose.msra.mxu0 0.0
  %1702 = vmatprep.subr.mxu0 0.0
  %1703 = vmatpush2.xpose.msra.mxu0 0.0
  %1704 = vmatprep.subr.mxu0 0.0
  %1705 = vmatpush2.xpose.msra.mxu0 0.0
  %1706 = vmatprep.subr.mxu0 0.0
  %1707 = vmatpush2.xpose.msra.mxu0 0.0
  %1708 = vmatprep.subr.mxu0 0.0
  %1709 = vmatpush2.xpose.msra.mxu0 0.0
  %1710 = vmatprep.subr.mxu0 0.0
  %1711 = vmatpush2.xpose.msra.mxu0 0.0
  %1712 = vmatprep.subr.mxu0 0.0
  %1713 = vmatpush2.xpose.msra.mxu0 0.0
  %1714 = vmatprep.subr.mxu0 0.0
  %1715 = vmatpush2.xpose.msra.mxu0 0.0
  %1716 = vmatprep.subr.mxu0 0.0
  %1717 = vmatpush2.xpose.msra.mxu0 0.0
  %1718 = vmatprep.subr.mxu0 0.0
  %1719 = vmatpush2.xpose.msra.mxu0 0.0
  %1720 = vmatprep.subr.mxu0 0.0
  %1721 = vmatpush2.xpose.msra.mxu0 0.0
  %1722 = vmatprep.subr.mxu0 0.0
  %1723 = vmatpush2.xpose.msra.mxu0 0.0
  %1724 = vmatprep.subr.mxu0 0.0
  %1725 = vmatpush2.xpose.msra.mxu0 0.0
  %1726 = vmatprep.subr.mxu0 0.0
  %1727 = vmatpush2.xpose.msra.mxu0 0.0
  %1728 = vmatprep.subr.mxu0 0.0
  %1729 = vmatpush2.xpose.msra.mxu0 0.0
  %1730 = vmatprep.mubr.f32.mxu0 0.0
  %1731 = vmatmul.mubr.f32.gmra.mxu0 %v1661
  %v1732 = vpop.f32.mrf.mxu0
  %v1733 = vadd.f32 %v113, %v1732
  %v1734 = vpop.f32.mrf.mxu0
  %1735 = vmatprep.mubr.f32.mxu0 0.0
  %1736 = vmatmul.mubr.f32.gmra.mxu0 %v1664
  %v1737 = vpop.f32.mrf.mxu0
  %v1738 = vadd.f32 %v114, %v1737
  %v1739 = vpop.f32.mrf.mxu0
  %1740 = vdwg.mxu0
  %v1741 = vsel %vm414, %v1733, -inf
  %1742 = vmax.xlane.f32.xlu0 %v1741
  %v1743 = vpop.xlane.xlu0 %1742
  %v1744 = vsel %vm414, %v1738, -inf
  %1745 = vmax.xlane.f32.xlu0 %v1744
  %v1746 = vpop.xlane.xlu0 %1745
  %v1747 = vsub.f32 %v1733, %v1743
  %v1748 = vsub.f32 %v1738, %v1746
  %v1749 = vmul.f32 %v1747, 1.442695
  %v1750 = vpow.pop %v1749
  %v1751 = vmul.f32 %v1748, 1.442695
  %v1752 = vpow.pop %v1751
  %v1753 = vsel %vm414, %v1750, 0.0
  %1754 = vadd.xlane.f32.xlu0 %v1753
  %v1755 = vpop.xlane.xlu0 %1754
  %v1756 = vsel %vm414, %v1752, 0.0
  %1757 = vadd.xlane.f32.xlu0 %v1756
  %v1758 = vpop.xlane.xlu0 %1757
  %v1759 = vrcp.pop %v1755
  %v1760 = vrcp.pop %v1758
  %v1761 = vmul.f32 %v1750, %v1759
  %v1762 = vmul.f32 %v1752, %v1760
  %v1764 = vsel %vm414, %v1761, 0
  %v1767 = vsel %vm414, %v1762, 0
  %1769 = vmatprep.subr.mxu0 0.0
  %1770 = vmatpush1.msra.mxu0 0.0
  %1771 = vmatprep.subr.mxu0 0.0
  %1772 = vmatpush1.msra.mxu0 0.0
  %1773 = vmatprep.subr.mxu0 0.0
  %1774 = vmatpush1.msra.mxu0 0.0
  %1775 = vmatprep.subr.mxu0 0.0
  %1776 = vmatpush1.msra.mxu0 0.0
  %1777 = vmatprep.subr.mxu0 0.0
  %1778 = vmatpush1.msra.mxu0 0.0
  %1779 = vmatprep.subr.mxu0 0.0
  %1780 = vmatpush1.msra.mxu0 0.0
  %1781 = vmatprep.subr.mxu0 0.0
  %1782 = vmatpush1.msra.mxu0 0.0
  %1783 = vmatprep.subr.mxu0 0.0
  %1784 = vmatpush1.msra.mxu0 0.0
  %1785 = vmatprep.subr.mxu0 0.0
  %1786 = vmatpush1.msra.mxu0 0.0
  %1787 = vmatprep.subr.mxu0 0.0
  %1788 = vmatpush1.msra.mxu0 0.0
  %1789 = vmatprep.subr.mxu0 0.0
  %1790 = vmatpush1.msra.mxu0 0.0
  %1791 = vmatprep.subr.mxu0 0.0
  %1792 = vmatpush1.msra.mxu0 0.0
  %1793 = vmatprep.subr.mxu0 0.0
  %1794 = vmatpush1.msra.mxu0 0.0
  %1795 = vmatprep.subr.mxu0 0.0
  %1796 = vmatpush1.msra.mxu0 0.0
  %1797 = vmatprep.subr.mxu0 0.0
  %1798 = vmatpush1.msra.mxu0 %v1459
  %1799 = vmatprep.subr.mxu0 0.0
  %1800 = vmatpush1.msra.mxu0 %v1454
  %1801 = vmatprep.subr.mxu0 0.0
  %1802 = vmatpush2.msra.mxu0 0.0
  %1803 = vmatprep.subr.mxu0 0.0
  %1804 = vmatpush2.msra.mxu0 0.0
  %1805 = vmatprep.subr.mxu0 0.0
  %1806 = vmatpush2.msra.mxu0 0.0
  %1807 = vmatprep.subr.mxu0 0.0
  %1808 = vmatpush2.msra.mxu0 0.0
  %1809 = vmatprep.subr.mxu0 0.0
  %1810 = vmatpush2.msra.mxu0 0.0
  %1811 = vmatprep.subr.mxu0 0.0
  %1812 = vmatpush2.msra.mxu0 0.0
  %1813 = vmatprep.subr.mxu0 0.0
  %1814 = vmatpush2.msra.mxu0 0.0
  %1815 = vmatprep.subr.mxu0 0.0
  %1816 = vmatpush2.msra.mxu0 0.0
  %1817 = vmatprep.subr.mxu0 0.0
  %1818 = vmatpush2.msra.mxu0 0.0
  %1819 = vmatprep.subr.mxu0 0.0
  %1820 = vmatpush2.msra.mxu0 0.0
  %1821 = vmatprep.subr.mxu0 0.0
  %1822 = vmatpush2.msra.mxu0 0.0
  %1823 = vmatprep.subr.mxu0 0.0
  %1824 = vmatpush2.msra.mxu0 0.0
  %1825 = vmatprep.subr.mxu0 0.0
  %1826 = vmatpush2.msra.mxu0 0.0
  %1827 = vmatprep.subr.mxu0 0.0
  %1828 = vmatpush2.msra.mxu0 0.0
  %1829 = vmatprep.subr.mxu0 0.0
  %1830 = vmatpush2.msra.mxu0 0.0
  %1831 = vmatprep.subr.mxu0 0.0
  %1832 = vmatpush2.msra.mxu0 0.0
  %1833 = vmatprep.mubr.f32.mxu0 0.0
  %1834 = vmatmul.mubr.f32.gmra.mxu0 %v1764
  %v1835 = vpop.f32.mrf.mxu0
  %v1836 = vadd.f32 0.0, %v1835
  %v1837 = vpop.f32.mrf.mxu0
  %1838 = vmatprep.mubr.f32.mxu0 0.0
  %1839 = vmatmul.mubr.f32.gmra.mxu0 %v1767
  %v1840 = vpop.f32.mrf.mxu0
  %v1841 = vadd.f32 0.0, %v1840
  %v1842 = vpop.f32.mrf.mxu0
  %1843 = vdwg.mxu0
  %v1844 = vmul.f32 %v1836, %v75
  %v1845 = vmul.f32 %v1841, %v75
  %v1846 = vadd.f32 %v1656, %v1844
  %v1847 = vadd.f32 %v1657, %v1845
  %v1848 = vmul.f32 %v1296, %v79
  %v1849 = vmul.f32 %v1297, %v79
  %v1851 = vsel %vm115, %v1848, 0
  %v1854 = vsel %vm115, %v1849, 0
  %1856 = vmatprep.subr.mxu0 0.0
  %1857 = vmatpush1.xpose.msra.mxu0 0.0
  %1858 = vmatprep.subr.mxu0 0.0
  %1859 = vmatpush1.xpose.msra.mxu0 0.0
  %1860 = vmatprep.subr.mxu0 0.0
  %1861 = vmatpush1.xpose.msra.mxu0 0.0
  %1862 = vmatprep.subr.mxu0 0.0
  %1863 = vmatpush1.xpose.msra.mxu0 0.0
  %1864 = vmatprep.subr.mxu0 0.0
  %1865 = vmatpush1.xpose.msra.mxu0 0.0
  %1866 = vmatprep.subr.mxu0 0.0
  %1867 = vmatpush1.xpose.msra.mxu0 0.0
  %1868 = vmatprep.subr.mxu0 0.0
  %1869 = vmatpush1.xpose.msra.mxu0 0.0
  %1870 = vmatprep.subr.mxu0 0.0
  %1871 = vmatpush1.xpose.msra.mxu0 0.0
  %1872 = vmatprep.subr.mxu0 0.0
  %1873 = vmatpush1.xpose.msra.mxu0 0.0
  %1874 = vmatprep.subr.mxu0 0.0
  %1875 = vmatpush1.xpose.msra.mxu0 0.0
  %1876 = vmatprep.subr.mxu0 0.0
  %1877 = vmatpush1.xpose.msra.mxu0 0.0
  %1878 = vmatprep.subr.mxu0 0.0
  %1879 = vmatpush1.xpose.msra.mxu0 0.0
  %1880 = vmatprep.subr.mxu0 0.0
  %1881 = vmatpush1.xpose.msra.mxu0 0.0
  %1882 = vmatprep.subr.mxu0 0.0
  %1883 = vmatpush1.xpose.msra.mxu0 0.0
  %1884 = vmatprep.subr.mxu0 0.0
  %1885 = vmatpush1.xpose.msra.mxu0 %v1474
  %1886 = vmatprep.subr.mxu0 0.0
  %1887 = vmatpush1.xpose.msra.mxu0 %v1471
  %1888 = vmatprep.subr.mxu0 0.0
  %1889 = vmatpush2.xpose.msra.mxu0 0.0
  %1890 = vmatprep.subr.mxu0 0.0
  %1891 = vmatpush2.xpose.msra.mxu0 0.0
  %1892 = vmatprep.subr.mxu0 0.0
  %1893 = vmatpush2.xpose.msra.mxu0 0.0
  %1894 = vmatprep.subr.mxu0 0.0
  %1895 = vmatpush2.xpose.msra.mxu0 0.0
  %1896 = vmatprep.subr.mxu0 0.0
  %1897 = vmatpush2.xpose.msra.mxu0 0.0
  %1898 = vmatprep.subr.mxu0 0.0
  %1899 = vmatpush2.xpose.msra.mxu0 0.0
  %1900 = vmatprep.subr.mxu0 0.0
  %1901 = vmatpush2.xpose.msra.mxu0 0.0
  %1902 = vmatprep.subr.mxu0 0.0
  %1903 = vmatpush2.xpose.msra.mxu0 0.0
  %1904 = vmatprep.subr.mxu0 0.0
  %1905 = vmatpush2.xpose.msra.mxu0 0.0
  %1906 = vmatprep.subr.mxu0 0.0
  %1907 = vmatpush2.xpose.msra.mxu0 0.0
  %1908 = vmatprep.subr.mxu0 0.0
  %1909 = vmatpush2.xpose.msra.mxu0 0.0
  %1910 = vmatprep.subr.mxu0 0.0
  %1911 = vmatpush2.xpose.msra.mxu0 0.0
  %1912 = vmatprep.subr.mxu0 0.0
  %1913 = vmatpush2.xpose.msra.mxu0 0.0
  %1914 = vmatprep.subr.mxu0 0.0
  %1915 = vmatpush2.xpose.msra.mxu0 0.0
  %1916 = vmatprep.subr.mxu0 0.0
  %1917 = vmatpush2.xpose.msra.mxu0 0.0
  %1918 = vmatprep.subr.mxu0 0.0
  %1919 = vmatpush2.xpose.msra.mxu0 0.0
  %1920 = vmatprep.mubr.f32.mxu0 0.0
  %1921 = vmatmul.mubr.f32.gmra.mxu0 %v1851
  %v1922 = vpop.f32.mrf.mxu0
  %v1923 = vadd.f32 %v113, %v1922
  %v1924 = vpop.f32.mrf.mxu0
  %1925 = vmatprep.mubr.f32.mxu0 0.0
  %1926 = vmatmul.mubr.f32.gmra.mxu0 %v1854
  %v1927 = vpop.f32.mrf.mxu0
  %v1928 = vadd.f32 %v114, %v1927
  %v1929 = vpop.f32.mrf.mxu0
  %1930 = vdwg.mxu0
  %v1931 = vsel %vm414, %v1923, -inf
  %1932 = vmax.xlane.f32.xlu0 %v1931
  %v1933 = vpop.xlane.xlu0 %1932
  %v1934 = vsel %vm414, %v1928, -inf
  %1935 = vmax.xlane.f32.xlu0 %v1934
  %v1936 = vpop.xlane.xlu0 %1935
  %v1937 = vsub.f32 %v1923, %v1933
  %v1938 = vsub.f32 %v1928, %v1936
  %v1939 = vmul.f32 %v1937, 1.442695
  %v1940 = vpow.pop %v1939
  %v1941 = vmul.f32 %v1938, 1.442695
  %v1942 = vpow.pop %v1941
  %v1943 = vsel %vm414, %v1940, 0.0
  %1944 = vadd.xlane.f32.xlu0 %v1943
  %v1945 = vpop.xlane.xlu0 %1944
  %v1946 = vsel %vm414, %v1942, 0.0
  %1947 = vadd.xlane.f32.xlu0 %v1946
  %v1948 = vpop.xlane.xlu0 %1947
  %v1949 = vrcp.pop %v1945
  %v1950 = vrcp.pop %v1948
  %v1951 = vmul.f32 %v1940, %v1949
  %v1952 = vmul.f32 %v1942, %v1950
  %v1954 = vsel %vm414, %v1951, 0
  %v1957 = vsel %vm414, %v1952, 0
  %1959 = vmatprep.subr.mxu0 0.0
  %1960 = vmatpush1.msra.mxu0 0.0
  %1961 = vmatprep.subr.mxu0 0.0
  %1962 = vmatpush1.msra.mxu0 0.0
  %1963 = vmatprep.subr.mxu0 0.0
  %1964 = vmatpush1.msra.mxu0 0.0
  %1965 = vmatprep.subr.mxu0 0.0
  %1966 = vmatpush1.msra.mxu0 0.0
  %1967 = vmatprep.subr.mxu0 0.0
  %1968 = vmatpush1.msra.mxu0 0.0
  %1969 = vmatprep.subr.mxu0 0.0
  %1970 = vmatpush1.msra.mxu0 0.0
  %1971 = vmatprep.subr.mxu0 0.0
  %1972 = vmatpush1.msra.mxu0 0.0
  %1973 = vmatprep.subr.mxu0 0.0
  %1974 = vmatpush1.msra.mxu0 0.0
  %1975 = vmatprep.subr.mxu0 0.0
  %1976 = vmatpush1.msra.mxu0 0.0
  %1977 = vmatprep.subr.mxu0 0.0
  %1978 = vmatpush1.msra.mxu0 0.0
  %1979 = vmatprep.subr.mxu0 0.0
  %1980 = vmatpush1.msra.mxu0 0.0
  %1981 = vmatprep.subr.mxu0 0.0
  %1982 = vmatpush1.msra.mxu0 0.0
  %1983 = vmatprep.subr.mxu0 0.0
  %1984 = vmatpush1.msra.mxu0 0.0
  %1985 = vmatprep.subr.mxu0 0.0
  %1986 = vmatpush1.msra.mxu0 0.0
  %1987 = vmatprep.subr.mxu0 0.0
  %1988 = vmatpush1.msra.mxu0 %v1459
  %1989 = vmatprep.subr.mxu0 0.0
  %1990 = vmatpush1.msra.mxu0 %v1454
  %1991 = vmatprep.subr.mxu0 0.0
  %1992 = vmatpush2.msra.mxu0 0.0
  %1993 = vmatprep.subr.mxu0 0.0
  %1994 = vmatpush2.msra.mxu0 0.0
  %1995 = vmatprep.subr.mxu0 0.0
  %1996 = vmatpush2.msra.mxu0 0.0
  %1997 = vmatprep.subr.mxu0 0.0
  %1998 = vmatpush2.msra.mxu0 0.0
  %1999 = vmatprep.subr.mxu0 0.0
  %2000 = vmatpush2.msra.mxu0 0.0
  %2001 = vmatprep.subr.mxu0 0.0
  %2002 = vmatpush2.msra.mxu0 0.0
  %2003 = vmatprep.subr.mxu0 0.0
  %2004 = vmatpush2.msra.mxu0 0.0
  %2005 = vmatprep.subr.mxu0 0.0
  %2006 = vmatpush2.msra.mxu0 0.0
  %2007 = vmatprep.subr.mxu0 0.0
  %2008 = vmatpush2.msra.mxu0 0.0
  %2009 = vmatprep.subr.mxu0 0.0
  %2010 = vmatpush2.msra.mxu0 0.0
  %2011 = vmatprep.subr.mxu0 0.0
  %2012 = vmatpush2.msra.mxu0 0.0
  %2013 = vmatprep.subr.mxu0 0.0
  %2014 = vmatpush2.msra.mxu0 0.0
  %2015 = vmatprep.subr.mxu0 0.0
  %2016 = vmatpush2.msra.mxu0 0.0
  %2017 = vmatprep.subr.mxu0 0.0
  %2018 = vmatpush2.msra.mxu0 0.0
  %2019 = vmatprep.subr.mxu0 0.0
  %2020 = vmatpush2.msra.mxu0 0.0
  %2021 = vmatprep.subr.mxu0 0.0
  %2022 = vmatpush2.msra.mxu0 0.0
  %2023 = vmatprep.mubr.f32.mxu0 0.0
  %2024 = vmatmul.mubr.f32.gmra.mxu0 %v1954
  %v2025 = vpop.f32.mrf.mxu0
  %v2026 = vadd.f32 0.0, %v2025
  %v2027 = vpop.f32.mrf.mxu0
  %2028 = vmatprep.mubr.f32.mxu0 0.0
  %2029 = vmatmul.mubr.f32.gmra.mxu0 %v1957
  %v2030 = vpop.f32.mrf.mxu0
  %v2031 = vadd.f32 0.0, %v2030
  %v2032 = vpop.f32.mrf.mxu0
  %2033 = vdwg.mxu0
  %v2034 = vmul.f32 %v2026, %v79
  %v2035 = vmul.f32 %v2031, %v79
  %v2036 = vadd.f32 %v1846, %v2034
  %v2037 = vadd.f32 %v1847, %v2035
  %v2038 = vmul.f32 %v1296, %v83
  %v2039 = vmul.f32 %v1297, %v83
  %v2041 = vsel %vm115, %v2038, 0
  %v2044 = vsel %vm115, %v2039, 0
  %2046 = vmatprep.subr.mxu0 0.0
  %2047 = vmatpush1.xpose.msra.mxu0 0.0
  %2048 = vmatprep.subr.mxu0 0.0
  %2049 = vmatpush1.xpose.msra.mxu0 0.0
  %2050 = vmatprep.subr.mxu0 0.0
  %2051 = vmatpush1.xpose.msra.mxu0 0.0
  %2052 = vmatprep.subr.mxu0 0.0
  %2053 = vmatpush1.xpose.msra.mxu0 0.0
  %2054 = vmatprep.subr.mxu0 0.0
  %2055 = vmatpush1.xpose.msra.mxu0 0.0
  %2056 = vmatprep.subr.mxu0 0.0
  %2057 = vmatpush1.xpose.msra.mxu0 0.0
  %2058 = vmatprep.subr.mxu0 0.0
  %2059 = vmatpush1.xpose.msra.mxu0 0.0
  %2060 = vmatprep.subr.mxu0 0.0
  %2061 = vmatpush1.xpose.msra.mxu0 0.0
  %2062 = vmatprep.subr.mxu0 0.0
  %2063 = vmatpush1.xpose.msra.mxu0 0.0
  %2064 = vmatprep.subr.mxu0 0.0
  %2065 = vmatpush1.xpose.msra.mxu0 0.0
  %2066 = vmatprep.subr.mxu0 0.0
  %2067 = vmatpush1.xpose.msra.mxu0 0.0
  %2068 = vmatprep.subr.mxu0 0.0
  %2069 = vmatpush1.xpose.msra.mxu0 0.0
  %2070 = vmatprep.subr.mxu0 0.0
  %2071 = vmatpush1.xpose.msra.mxu0 0.0
  %2072 = vmatprep.subr.mxu0 0.0
  %2073 = vmatpush1.xpose.msra.mxu0 0.0
  %2074 = vmatprep.subr.mxu0 0.0
  %2075 = vmatpush1.xpose.msra.mxu0 %v1474
  %2076 = vmatprep.subr.mxu0 0.0
  %2077 = vmatpush1.xpose.msra.mxu0 %v1471
  %2078 = vmatprep.subr.mxu0 0.0
  %2079 = vmatpush2.xpose.msra.mxu0 0.0
  %2080 = vmatprep.subr.mxu0 0.0
  %2081 = vmatpush2.xpose.msra.mxu0 0.0
  %2082 = vmatprep.subr.mxu0 0.0
  %2083 = vmatpush2.xpose.msra.mxu0 0.0
  %2084 = vmatprep.subr.mxu0 0.0
  %2085 = vmatpush2.xpose.msra.mxu0 0.0
  %2086 = vmatprep.subr.mxu0 0.0
  %2087 = vmatpush2.xpose.msra.mxu0 0.0
  %2088 = vmatprep.subr.mxu0 0.0
  %2089 = vmatpush2.xpose.msra.mxu0 0.0
  %2090 = vmatprep.subr.mxu0 0.0
  %2091 = vmatpush2.xpose.msra.mxu0 0.0
  %2092 = vmatprep.subr.mxu0 0.0
  %2093 = vmatpush2.xpose.msra.mxu0 0.0
  %2094 = vmatprep.subr.mxu0 0.0
  %2095 = vmatpush2.xpose.msra.mxu0 0.0
  %2096 = vmatprep.subr.mxu0 0.0
  %2097 = vmatpush2.xpose.msra.mxu0 0.0
  %2098 = vmatprep.subr.mxu0 0.0
  %2099 = vmatpush2.xpose.msra.mxu0 0.0
  %2100 = vmatprep.subr.mxu0 0.0
  %2101 = vmatpush2.xpose.msra.mxu0 0.0
  %2102 = vmatprep.subr.mxu0 0.0
  %2103 = vmatpush2.xpose.msra.mxu0 0.0
  %2104 = vmatprep.subr.mxu0 0.0
  %2105 = vmatpush2.xpose.msra.mxu0 0.0
  %2106 = vmatprep.subr.mxu0 0.0
  %2107 = vmatpush2.xpose.msra.mxu0 0.0
  %2108 = vmatprep.subr.mxu0 0.0
  %2109 = vmatpush2.xpose.msra.mxu0 0.0
  %2110 = vmatprep.mubr.f32.mxu0 0.0
  %2111 = vmatmul.mubr.f32.gmra.mxu0 %v2041
  %v2112 = vpop.f32.mrf.mxu0
  %v2113 = vadd.f32 %v113, %v2112
  %v2114 = vpop.f32.mrf.mxu0
  %2115 = vmatprep.mubr.f32.mxu0 0.0
  %2116 = vmatmul.mubr.f32.gmra.mxu0 %v2044
  %v2117 = vpop.f32.mrf.mxu0
  %v2118 = vadd.f32 %v114, %v2117
  %v2119 = vpop.f32.mrf.mxu0
  %2120 = vdwg.mxu0
  %v2121 = vsel %vm414, %v2113, -inf
  %2122 = vmax.xlane.f32.xlu0 %v2121
  %v2123 = vpop.xlane.xlu0 %2122
  %v2124 = vsel %vm414, %v2118, -inf
  %2125 = vmax.xlane.f32.xlu0 %v2124
  %v2126 = vpop.xlane.xlu0 %2125
  %v2127 = vsub.f32 %v2113, %v2123
  %v2128 = vsub.f32 %v2118, %v2126
  %v2129 = vmul.f32 %v2127, 1.442695
  %v2130 = vpow.pop %v2129
  %v2131 = vmul.f32 %v2128, 1.442695
  %v2132 = vpow.pop %v2131
  %v2133 = vsel %vm414, %v2130, 0.0
  %2134 = vadd.xlane.f32.xlu0 %v2133
  %v2135 = vpop.xlane.xlu0 %2134
  %v2136 = vsel %vm414, %v2132, 0.0
  %2137 = vadd.xlane.f32.xlu0 %v2136
  %v2138 = vpop.xlane.xlu0 %2137
  %v2139 = vrcp.pop %v2135
  %v2140 = vrcp.pop %v2138
  %v2141 = vmul.f32 %v2130, %v2139
  %v2142 = vmul.f32 %v2132, %v2140
  %v2144 = vsel %vm414, %v2141, 0
  %v2147 = vsel %vm414, %v2142, 0
  %2149 = vmatprep.subr.mxu0 0.0
  %2150 = vmatpush1.msra.mxu0 0.0
  %2151 = vmatprep.subr.mxu0 0.0
  %2152 = vmatpush1.msra.mxu0 0.0
  %2153 = vmatprep.subr.mxu0 0.0
  %2154 = vmatpush1.msra.mxu0 0.0
  %2155 = vmatprep.subr.mxu0 0.0
  %2156 = vmatpush1.msra.mxu0 0.0
  %2157 = vmatprep.subr.mxu0 0.0
  %2158 = vmatpush1.msra.mxu0 0.0
  %2159 = vmatprep.subr.mxu0 0.0
  %2160 = vmatpush1.msra.mxu0 0.0
  %2161 = vmatprep.subr.mxu0 0.0
  %2162 = vmatpush1.msra.mxu0 0.0
  %2163 = vmatprep.subr.mxu0 0.0
  %2164 = vmatpush1.msra.mxu0 0.0
  %2165 = vmatprep.subr.mxu0 0.0
  %2166 = vmatpush1.msra.mxu0 0.0
  %2167 = vmatprep.subr.mxu0 0.0
  %2168 = vmatpush1.msra.mxu0 0.0
  %2169 = vmatprep.subr.mxu0 0.0
  %2170 = vmatpush1.msra.mxu0 0.0
  %2171 = vmatprep.subr.mxu0 0.0
  %2172 = vmatpush1.msra.mxu0 0.0
  %2173 = vmatprep.subr.mxu0 0.0
  %2174 = vmatpush1.msra.mxu0 0.0
  %2175 = vmatprep.subr.mxu0 0.0
  %2176 = vmatpush1.msra.mxu0 0.0
  %2177 = vmatprep.subr.mxu0 0.0
  %2178 = vmatpush1.msra.mxu0 %v1459
  %2179 = vmatprep.subr.mxu0 0.0
  %2180 = vmatpush1.msra.mxu0 %v1454
  %2181 = vmatprep.subr.mxu0 0.0
  %2182 = vmatpush2.msra.mxu0 0.0
  %2183 = vmatprep.subr.mxu0 0.0
  %2184 = vmatpush2.msra.mxu0 0.0
  %2185 = vmatprep.subr.mxu0 0.0
  %2186 = vmatpush2.msra.mxu0 0.0
  %2187 = vmatprep.subr.mxu0 0.0
  %2188 = vmatpush2.msra.mxu0 0.0
  %2189 = vmatprep.subr.mxu0 0.0
  %2190 = vmatpush2.msra.mxu0 0.0
  %2191 = vmatprep.subr.mxu0 0.0
  %2192 = vmatpush2.msra.mxu0 0.0
  %2193 = vmatprep.subr.mxu0 0.0
  %2194 = vmatpush2.msra.mxu0 0.0
  %2195 = vmatprep.subr.mxu0 0.0
  %2196 = vmatpush2.msra.mxu0 0.0
  %2197 = vmatprep.subr.mxu0 0.0
  %2198 = vmatpush2.msra.mxu0 0.0
  %2199 = vmatprep.subr.mxu0 0.0
  %2200 = vmatpush2.msra.mxu0 0.0
  %2201 = vmatprep.subr.mxu0 0.0
  %2202 = vmatpush2.msra.mxu0 0.0
  %2203 = vmatprep.subr.mxu0 0.0
  %2204 = vmatpush2.msra.mxu0 0.0
  %2205 = vmatprep.subr.mxu0 0.0
  %2206 = vmatpush2.msra.mxu0 0.0
  %2207 = vmatprep.subr.mxu0 0.0
  %2208 = vmatpush2.msra.mxu0 0.0
  %2209 = vmatprep.subr.mxu0 0.0
  %2210 = vmatpush2.msra.mxu0 0.0
  %2211 = vmatprep.subr.mxu0 0.0
  %2212 = vmatpush2.msra.mxu0 0.0
  %2213 = vmatprep.mubr.f32.mxu0 0.0
  %2214 = vmatmul.mubr.f32.gmra.mxu0 %v2144
  %v2215 = vpop.f32.mrf.mxu0
  %v2216 = vadd.f32 0.0, %v2215
  %v2217 = vpop.f32.mrf.mxu0
  %2218 = vmatprep.mubr.f32.mxu0 0.0
  %2219 = vmatmul.mubr.f32.gmra.mxu0 %v2147
  %v2220 = vpop.f32.mrf.mxu0
  %v2221 = vadd.f32 0.0, %v2220
  %v2222 = vpop.f32.mrf.mxu0
  %2223 = vdwg.mxu0
  %v2224 = vmul.f32 %v2216, %v83
  %v2225 = vmul.f32 %v2221, %v83
  %v2226 = vadd.f32 %v2036, %v2224
  %v2227 = vadd.f32 %v2037, %v2225
  %v2229 = vsel %vm115, %v2226, 0
  %v2232 = vsel %vm115, %v2227, 0
  %2234 = vmatprep.subr.mxu0 0.0
  %2235 = vmatpush1.msra.mxu0 0.0
  %2236 = vmatprep.subr.mxu0 0.0
  %2237 = vmatpush1.msra.mxu0 0.0
  %2238 = vmatprep.subr.mxu0 0.0
  %2239 = vmatpush1.msra.mxu0 0.0
  %2240 = vmatprep.subr.mxu0 0.0
  %2241 = vmatpush1.msra.mxu0 0.0
  %2242 = vmatprep.subr.mxu0 0.0
  %2243 = vmatpush1.msra.mxu0 0.0
  %2244 = vmatprep.subr.mxu0 0.0
  %2245 = vmatpush1.msra.mxu0 0.0
  %2246 = vmatprep.subr.mxu0 0.0
  %2247 = vmatpush1.msra.mxu0 0.0
  %2248 = vmatprep.subr.mxu0 0.0
  %2249 = vmatpush1.msra.mxu0 0.0
  %2250 = vmatprep.subr.mxu0 0.0
  %2251 = vmatpush1.msra.mxu0 0.0
  %2252 = vmatprep.subr.mxu0 0.0
  %2253 = vmatpush1.msra.mxu0 0.0
  %2254 = vmatprep.subr.mxu0 0.0
  %2255 = vmatpush1.msra.mxu0 0.0
  %2256 = vmatprep.subr.mxu0 0.0
  %2257 = vmatpush1.msra.mxu0 0.0
  %2258 = vmatprep.subr.mxu0 0.0
  %2259 = vmatpush1.msra.mxu0 %v48
  %2260 = vmatprep.subr.mxu0 0.0
  %2261 = vmatpush1.msra.mxu0 %v47
  %2262 = vmatprep.subr.mxu0 0.0
  %2263 = vmatpush1.msra.mxu0 %v46
  %2264 = vmatprep.subr.mxu0 0.0
  %2265 = vmatpush1.msra.mxu0 %v45
  %2266 = vmatprep.subr.mxu0 0.0
  %2267 = vmatpush2.msra.mxu0 0.0
  %2268 = vmatprep.subr.mxu0 0.0
  %2269 = vmatpush2.msra.mxu0 0.0
  %2270 = vmatprep.subr.mxu0 0.0
  %2271 = vmatpush2.msra.mxu0 0.0
  %2272 = vmatprep.subr.mxu0 0.0
  %2273 = vmatpush2.msra.mxu0 0.0
  %2274 = vmatprep.subr.mxu0 0.0
  %2275 = vmatpush2.msra.mxu0 0.0
  %2276 = vmatprep.subr.mxu0 0.0
  %2277 = vmatpush2.msra.mxu0 0.0
  %2278 = vmatprep.subr.mxu0 0.0
  %2279 = vmatpush2.msra.mxu0 0.0
  %2280 = vmatprep.subr.mxu0 0.0
  %2281 = vmatpush2.msra.mxu0 0.0
  %2282 = vmatprep.subr.mxu0 0.0
  %2283 = vmatpush2.msra.mxu0 0.0
  %2284 = vmatprep.subr.mxu0 0.0
  %2285 = vmatpush2.msra.mxu0 0.0
  %2286 = vmatprep.subr.mxu0 0.0
  %2287 = vmatpush2.msra.mxu0 0.0
  %2288 = vmatprep.subr.mxu0 0.0
  %2289 = vmatpush2.msra.mxu0 0.0
  %2290 = vmatprep.subr.mxu0 0.0
  %2291 = vmatpush2.msra.mxu0 0.0
  %2292 = vmatprep.subr.mxu0 0.0
  %2293 = vmatpush2.msra.mxu0 0.0
  %2294 = vmatprep.subr.mxu0 0.0
  %2295 = vmatpush2.msra.mxu0 0.0
  %2296 = vmatprep.subr.mxu0 0.0
  %2297 = vmatpush2.msra.mxu0 0.0
  %2298 = vmatprep.mubr.f32.mxu0 0.0
  %2299 = vmatmul.mubr.f32.gmra.mxu0 %v2229
  %v2300 = vpop.f32.mrf.mxu0
  %v2301 = vadd.f32 0.0, %v2300
  %v2302 = vpop.f32.mrf.mxu0
  %2303 = vmatprep.mubr.f32.mxu0 0.0
  %2304 = vmatmul.mubr.f32.gmra.mxu0 %v2232
  %v2305 = vpop.f32.mrf.mxu0
  %v2306 = vadd.f32 0.0, %v2305
  %v2307 = vpop.f32.mrf.mxu0
  %2308 = vdwg.mxu0
  %v2309 = vadd.f32 %v1173, %v2301
  %v2310 = vadd.f32 %v1174, %v2306
  %v2311 = vsel %vm115, %v2309, 0.0
  %2312 = vadd.xlane.f32.xlu0 %v2311
  %v2313 = vpop.xlane.xlu0 %2312
  %v2314 = vsel %vm115, %v2310, 0.0
  %2315 = vadd.xlane.f32.xlu0 %v2314
  %v2316 = vpop.xlane.xlu0 %2315
  %v2317 = vmul.f32 %v2313, %v122
  %v2318 = vmul.f32 %v2316, %v122
  %v2319 = vsub.f32 %v2309, %v2317
  %v2320 = vsub.f32 %v2310, %v2318
  %v2321 = vmul.f32 %v2319, %v2319
  %v2322 = vmul.f32 %v2320, %v2320
  %v2323 = vsel %vm115, %v2321, 0.0
  %2324 = vadd.xlane.f32.xlu0 %v2323
  %v2325 = vpop.xlane.xlu0 %2324
  %v2326 = vsel %vm115, %v2322, 0.0
  %2327 = vadd.xlane.f32.xlu0 %v2326
  %v2328 = vpop.xlane.xlu0 %2327
  %v2329 = vmul.f32 %v2325, %v122
  %v2330 = vmul.f32 %v2328, %v122
  %v2331 = vadd.f32 %v2329, 1e-05
  %v2332 = vadd.f32 %v2330, 1e-05
  %v2333 = vrsqrt.pop %v2331
  %v2334 = vrsqrt.pop %v2332
  %v2335 = vmul.f32 %v2319, %v2333
  %v2336 = vmul.f32 %v2320, %v2334
  %v2337 = vlaneseq
  %v2338 = vshrl.u32 %v2337, 7
  %v2339 = vsub.s32 4, %v2338
  %v2340 = vrot.slane %v65, %v2339
  %v2341 = vmul.f32 %v2335, %v2340
  %v2342 = vmul.f32 %v2336, %v2340
  %v2343 = vlaneseq
  %v2344 = vshrl.u32 %v2343, 7
  %v2345 = vsub.s32 5, %v2344
  %v2346 = vrot.slane %v65, %v2345
  %v2347 = vadd.f32 %v2341, %v2346
  %v2348 = vadd.f32 %v2342, %v2346
  %v2349 = vlaneseq
  %v2350 = vshrl.u32 %v2349, 7
  %v2351 = vsub.s32 6, %v2350
  %v2352 = vrot.slane %v65, %v2351
  %v2354 = vsel %vm115, %v2347, 0
  %v2357 = vsel %vm115, %v2348, 0
  %2359 = vmatprep.subr.mxu0 0.0
  %2360 = vmatpush1.msra.mxu0 0.0
  %2361 = vmatprep.subr.mxu0 0.0
  %2362 = vmatpush1.msra.mxu0 0.0
  %2363 = vmatprep.subr.mxu0 0.0
  %2364 = vmatpush1.msra.mxu0 0.0
  %2365 = vmatprep.subr.mxu0 0.0
  %2366 = vmatpush1.msra.mxu0 0.0
  %2367 = vmatprep.subr.mxu0 0.0
  %2368 = vmatpush1.msra.mxu0 0.0
  %2369 = vmatprep.subr.mxu0 0.0
  %2370 = vmatpush1.msra.mxu0 0.0
  %2371 = vmatprep.subr.mxu0 0.0
  %2372 = vmatpush1.msra.mxu0 0.0
  %2373 = vmatprep.subr.mxu0 0.0
  %2374 = vmatpush1.msra.mxu0 0.0
  %2375 = vmatprep.subr.mxu0 0.0
  %2376 = vmatpush1.msra.mxu0 0.0
  %2377 = vmatprep.subr.mxu0 0.0
  %2378 = vmatpush1.msra.mxu0 0.0
  %2379 = vmatprep.subr.mxu0 0.0
  %2380 = vmatpush1.msra.mxu0 0.0
  %2381 = vmatprep.subr.mxu0 0.0
  %2382 = vmatpush1.msra.mxu0 0.0
  %2383 = vmatprep.subr.mxu0 0.0
  %2384 = vmatpush1.msra.mxu0 %v64
  %2385 = vmatprep.subr.mxu0 0.0
  %2386 = vmatpush1.msra.mxu0 %v63
  %2387 = vmatprep.subr.mxu0 0.0
  %2388 = vmatpush1.msra.mxu0 %v62
  %2389 = vmatprep.subr.mxu0 0.0
  %2390 = vmatpush1.msra.mxu0 %v61
  %2391 = vmatprep.subr.mxu0 0.0
  %2392 = vmatpush2.msra.mxu0 0.0
  %2393 = vmatprep.subr.mxu0 0.0
  %2394 = vmatpush2.msra.mxu0 0.0
  %2395 = vmatprep.subr.mxu0 0.0
  %2396 = vmatpush2.msra.mxu0 0.0
  %2397 = vmatprep.subr.mxu0 0.0
  %2398 = vmatpush2.msra.mxu0 0.0
  %2399 = vmatprep.subr.mxu0 0.0
  %2400 = vmatpush2.msra.mxu0 0.0
  %2401 = vmatprep.subr.mxu0 0.0
  %2402 = vmatpush2.msra.mxu0 0.0
  %2403 = vmatprep.subr.mxu0 0.0
  %2404 = vmatpush2.msra.mxu0 0.0
  %2405 = vmatprep.subr.mxu0 0.0
  %2406 = vmatpush2.msra.mxu0 0.0
  %2407 = vmatprep.subr.mxu0 0.0
  %2408 = vmatpush2.msra.mxu0 0.0
  %2409 = vmatprep.subr.mxu0 0.0
  %2410 = vmatpush2.msra.mxu0 0.0
  %2411 = vmatprep.subr.mxu0 0.0
  %2412 = vmatpush2.msra.mxu0 0.0
  %2413 = vmatprep.subr.mxu0 0.0
  %2414 = vmatpush2.msra.mxu0 0.0
  %2415 = vmatprep.subr.mxu0 0.0
  %2416 = vmatpush2.msra.mxu0 0.0
  %2417 = vmatprep.subr.mxu0 0.0
  %2418 = vmatpush2.msra.mxu0 0.0
  %2419 = vmatprep.subr.mxu0 0.0
  %2420 = vmatpush2.msra.mxu0 0.0
  %2421 = vmatprep.subr.mxu0 0.0
  %2422 = vmatpush2.msra.mxu0 0.0
  %2423 = vmatprep.mubr.f32.mxu0 0.0
  %2424 = vmatmul.mubr.f32.gmra.mxu0 %v2354
  %v2425 = vpop.f32.mrf.mxu0
  %v2426 = vadd.f32 %v2352, %v2425
  %v2427 = vpop.f32.mrf.mxu0
  %2428 = vmatprep.mubr.f32.mxu0 0.0
  %2429 = vmatmul.mubr.f32.gmra.mxu0 %v2357
  %v2430 = vpop.f32.mrf.mxu0
  %v2431 = vadd.f32 %v2352, %v2430
  %v2432 = vpop.f32.mrf.mxu0
  %2433 = vdwg.mxu0
  %v2434 = vmax.f32 %v2426, 0.0
  %v2435 = vmax.f32 %v2431, 0.0
  %vm2436 = vcmask 523264
  %v2438 = vsel %vm2436, %v2434, 0
  %v2441 = vsel %vm2436, %v2435, 0
  %2443 = vmatprep.subr.mxu0 0.0
  %2444 = vmatpush1.msra.mxu0 0.0
  %2445 = vmatprep.subr.mxu0 0.0
  %2446 = vmatpush1.msra.mxu0 0.0
  %2447 = vmatprep.subr.mxu0 0.0
  %2448 = vmatpush1.msra.mxu0 0.0
  %2449 = vmatprep.subr.mxu0 0.0
  %2450 = vmatpush1.msra.mxu0 0.0
  %2451 = vmatprep.subr.mxu0 0.0
  %2452 = vmatpush1.msra.mxu0 0.0
  %2453 = vmatprep.subr.mxu0 0.0
  %2454 = vmatpush1.msra.mxu0 0.0
  %2455 = vmatprep.subr.mxu0 0.0
  %2456 = vmatpush1.msra.mxu0 0.0
  %2457 = vmatprep.subr.mxu0 0.0
  %2458 = vmatpush1.msra.mxu0 0.0
  %2459 = vmatprep.subr.mxu0 0.0
  %2460 = vmatpush1.msra.mxu0 %v56
  %2461 = vmatprep.subr.mxu0 0.0
  %2462 = vmatpush1.msra.mxu0 %v55
  %2463 = vmatprep.subr.mxu0 0.0
  %2464 = vmatpush1.msra.mxu0 %v54
  %2465 = vmatprep.subr.mxu0 0.0
  %2466 = vmatpush1.msra.mxu0 %v53
  %2467 = vmatprep.subr.mxu0 0.0
  %2468 = vmatpush1.msra.mxu0 %v52
  %2469 = vmatprep.subr.mxu0 0.0
  %2470 = vmatpush1.msra.mxu0 %v51
  %2471 = vmatprep.subr.mxu0 0.0
  %2472 = vmatpush1.msra.mxu0 %v50
  %2473 = vmatprep.subr.mxu0 0.0
  %2474 = vmatpush1.msra.mxu0 %v49
  %2475 = vmatprep.subr.mxu0 0.0
  %2476 = vmatpush2.msra.mxu0 0.0
  %2477 = vmatprep.subr.mxu0 0.0
  %2478 = vmatpush2.msra.mxu0 0.0
  %2479 = vmatprep.subr.mxu0 0.0
  %2480 = vmatpush2.msra.mxu0 0.0
  %2481 = vmatprep.subr.mxu0 0.0
  %2482 = vmatpush2.msra.mxu0 0.0
  %2483 = vmatprep.subr.mxu0 0.0
  %2484 = vmatpush2.msra.mxu0 0.0
  %2485 = vmatprep.subr.mxu0 0.0
  %2486 = vmatpush2.msra.mxu0 0.0
  %2487 = vmatprep.subr.mxu0 0.0
  %2488 = vmatpush2.msra.mxu0 0.0
  %2489 = vmatprep.subr.mxu0 0.0
  %2490 = vmatpush2.msra.mxu0 0.0
  %2491 = vmatprep.subr.mxu0 0.0
  %2492 = vmatpush2.msra.mxu0 0.0
  %2493 = vmatprep.subr.mxu0 0.0
  %2494 = vmatpush2.msra.mxu0 0.0
  %2495 = vmatprep.subr.mxu0 0.0
  %2496 = vmatpush2.msra.mxu0 0.0
  %2497 = vmatprep.subr.mxu0 0.0
  %2498 = vmatpush2.msra.mxu0 0.0
  %2499 = vmatprep.subr.mxu0 0.0
  %2500 = vmatpush2.msra.mxu0 0.0
  %2501 = vmatprep.subr.mxu0 0.0
  %2502 = vmatpush2.msra.mxu0 0.0
  %2503 = vmatprep.subr.mxu0 0.0
  %2504 = vmatpush2.msra.mxu0 0.0
  %2505 = vmatprep.subr.mxu0 0.0
  %2506 = vmatpush2.msra.mxu0 0.0
  %2507 = vmatprep.mubr.f32.mxu0 0.0
  %2508 = vmatmul.mubr.f32.gmra.mxu0 %v2438
  %v2509 = vpop.f32.mrf.mxu0
  %v2510 = vadd.f32 0.0, %v2509
  %v2511 = vpop.f32.mrf.mxu0
  %2512 = vmatprep.mubr.f32.mxu0 0.0
  %2513 = vmatmul.mubr.f32.gmra.mxu0 %v2441
  %v2514 = vpop.f32.mrf.mxu0
  %v2515 = vadd.f32 0.0, %v2514
  %v2516 = vpop.f32.mrf.mxu0
  %2517 = vdwg.mxu0
  %v2518 = vadd.f32 %v2309, %v2510
  %v2519 = vadd.f32 %v2310, %v2515
  %v2520 = vlaneseq
  %v2521 = vshrl.u32 %v2520, 7
  %v2522 = vsub.s32 7, %v2521
  %v2523 = vrot.slane %v65, %v2522
  %v2524 = vadd.f32 %v2518, %v2523
  %v2525 = vadd.f32 %v2519, %v2523
  %2526 = vst.msk [vmem:[%s4] sm:$0xff] %vm115, %v2524
  %2527 = vst.msk [vmem:[%s4 + $0x8] sm:$0xff] %vm115, %v2525
  // Predicated region
  $region18: #{transformer_decoder_layer.1} parent=0 // pred_check
    _
  $region19: #{transformer_decoder_layer.1} parent=0 // pred_check_branch
    %2529 = sbr.rel (0) target = $region21
  $region20: #{transformer_decoder_layer.1} parent=0 // pred_region
    _
  $region21: #{transformer_decoder_layer.1} parent=0 // pred_fallthru
    _
  // Predicated region
  $region22: #{transformer_decoder_layer.1} parent=0 // pred_check
    _
  $region23: #{transformer_decoder_layer.1} parent=0 // pred_check_branch
    %2531 = sbr.rel (0) target = $region25
  $region24: #{transformer_decoder_layer.1} parent=0 // pred_region
    _
  $region25: #{transformer_decoder_layer.1} parent=0 // pred_fallthru
    _

</llo_original>
